<compile_context>
chip_gen: v7x
topology: tpu7x:2x2x1
jax: 0.10.0
libtpu: 0.0.40
codegen_flags: <defaults>
</compile_context>

<pallas_src>
import functools

import jax
import jax.numpy as jnp
import numpy as np
from jax.experimental import pallas as pl
from jax.experimental.pallas import tpu as pltpu


def _round_up(n, m):
    return ((n + m - 1) // m) * m


# -----------------------------------------------------------------------------
# Fused kernel: in-VMEM shifted-matmul conv (+ folded bias) + ReLU + masked
# pooled accumulation + fc head.  One image per grid step.
#   x_ref    : (S, Cp)         f32  flattened zero-padded activation, S=(H+KH)*Wp
#   mask_ref : (RH*Wp, 1)      f32  1.0 for valid output columns, 0.0 otherwise
#   wt_ref   : (KH*KW, Cp, Fp) bf16 per-tap conv weights (+ bias row on centre tap)
#   wf_ref   : (Fp, Op)        f32  fc weight (transposed torch Linear, padded)
#   bf_ref   : (1, Op)         f32  fc bias (padded)
#   o_ref    : (8, Op)         f32  logits broadcast over 8 sublanes (dense store)
# -----------------------------------------------------------------------------
def _fused_kernel(x_ref, mask_ref, wt_ref, wf_ref, bf_ref, o_ref, *,
                  H, W, Wp, RH, KH, KW, Fp, Op, mxu_dtype):
    chunk_rows = RH * Wp
    n_chunks = H // RH
    mask = mask_ref[...]                                   # hoisted, reused per chunk

    pooled = jnp.zeros((1, Fp), jnp.float32)
    # Static chunk loop (n_chunks is tiny here); all tap slice starts are static
    # offsets and the live intermediate stays at one (chunk_rows, Fp) tile.
    for c in range(n_chunks):
        base = c * chunk_rows
        acc = jnp.zeros((chunk_rows, Fp), jnp.float32)
        for kh in range(KH):
            for kw in range(KW):
                start = base + kh * Wp + kw
                xt = x_ref[pl.ds(start, chunk_rows), :].astype(mxu_dtype)
                acc = acc + jnp.dot(xt, wt_ref[kh * KW + kw],
                                    preferred_element_type=jnp.float32)
        # Bias is already in acc (folded via the constant-1 channel).
        relu = jnp.maximum(acc, 0.0) * mask                # mask kills wrapped cols
        pooled = pooled + jnp.sum(relu, axis=0, keepdims=True)

    feats = pooled * (1.0 / (H * W))                       # global average pool
    logits = jnp.dot(feats, wf_ref[...],
                     preferred_element_type=jnp.float32) + bf_ref[...]
    o_ref[...] = jnp.broadcast_to(logits, (8, Op))         # lane+sublane dense store


# -----------------------------------------------------------------------------
# One-time parameter prep (hoisted out of the forward path).
# -----------------------------------------------------------------------------
def prepare_params(params, *, mxu_dtype=jnp.bfloat16):
    w_conv = jnp.asarray(params["w_conv"], jnp.float32)    # (KH, KW, C, F)
    b_conv = jnp.asarray(params["b_conv"], jnp.float32)    # (F,)
    w_fc = jnp.asarray(params["w_fc"], jnp.float32)        # (O, F) torch Linear layout
    b_fc = jnp.asarray(params["b_fc"], jnp.float32)        # (O,)

    KH, KW, C, F = w_conv.shape
    O = w_fc.shape[0]
    Cp = _round_up(C + 1, 8)          # +1 constant-1 channel used for the bias fold
    Fp = _round_up(F, 128)
    Op = _round_up(O, 128)

    wt = jnp.zeros((KH * KW, Cp, Fp), jnp.float32)
    wt = wt.at[:, :C, :F].set(w_conv.reshape(KH * KW, C, F))
    centre = (KH // 2) * KW + (KW // 2)   # centre tap never samples the border pad
    wt = wt.at[centre, C, :F].set(b_conv)                  # fold b_conv into MXU

    wf = jnp.zeros((Fp, Op), jnp.float32).at[:F, :O].set(w_fc.T)
    bf = jnp.zeros((1, Op), jnp.float32).at[0, :O].set(b_fc)

    return {"wt": wt.astype(mxu_dtype), "wf": wf, "bf": bf,
            "dims": (KH, KW, C, F, O, Cp, Fp, Op), "mxu_dtype": mxu_dtype}


# -----------------------------------------------------------------------------
# Forward: NCHW -> padded flattened activation, one fused Pallas call.
# -----------------------------------------------------------------------------
def connection_classifier_forward(x_nchw, prepped, *, row_chunk=8):
    KH, KW, C, F, O, Cp, Fp, Op = prepped["dims"]
    assert KH == 3 and KW == 3, "stand-in extractor uses a 3x3 SAME conv"
    B, Cx, H, W = x_nchw.shape
    assert Cx == C and H % row_chunk == 0

    Wp = W + (KW - 1)                 # padded row width
    S = (H + KH) * Wp                 # H + 2 padded rows + 1 slack row for tap slices

    # NCHW -> NHWC, append the constant-1 bias channel, zero-pad channels to Cp
    # and spatial borders (top 1, bottom KH-1 incl. slack, left/right 1), flatten.
    x = jnp.transpose(x_nchw, (0, 2, 3, 1)).astype(jnp.float32)      # (B, H, W, C)
    x = jnp.concatenate([x, jnp.ones((B, H, W, 1), jnp.float32)], axis=-1)
    x = jnp.pad(x, ((0, 0), (1, KH - 1), (1, 1), (0, Cp - (C + 1))))
    xf = x.reshape(B, S, Cp)

    # Valid-output-column mask (compile-time constant, built once with numpy to
    # avoid vector integer mod inside the kernel).
    mask = jnp.asarray(
        ((np.arange(row_chunk * Wp).reshape(-1, 1) % Wp) < W).astype(np.float32))

    kernel = functools.partial(
        _fused_kernel, H=H, W=W, Wp=Wp, RH=row_chunk, KH=KH, KW=KW,
        Fp=Fp, Op=Op, mxu_dtype=prepped["mxu_dtype"])

    out = pl.pallas_call(
        kernel,
        out_shape=jax.ShapeDtypeStruct((B, 8, Op), jnp.float32),
        grid_spec=pltpu.PrefetchScalarGridSpec(
            num_scalar_prefetch=0,
            grid=(B,),
            in_specs=[
                pl.BlockSpec((None, S, Cp), lambda b: (b, 0, 0)),
                pl.BlockSpec((row_chunk * Wp, 1), lambda b: (0, 0)),
                pl.BlockSpec((KH * KW, Cp, Fp), lambda b: (0, 0, 0)),
                pl.BlockSpec((Fp, Op), lambda b: (0, 0)),
                pl.BlockSpec((1, Op), lambda b: (0, 0)),
            ],
            out_specs=pl.BlockSpec((None, 8, Op), lambda b: (b, 0, 0)),
        ),
        compiler_params=pltpu.CompilerParams(
            dimension_semantics=("parallel",)),
    )(xf, mask, prepped["wt"], prepped["wf"], prepped["bf"])
    return out[:, 0, :O]


def predict(outputs):
    # ConnectionClassifier.predict: (sigmoid(outputs) > 0.5).float()
    return (jax.nn.sigmoid(outputs) > 0.5).astype(jnp.float32)


# -----------------------------------------------------------------------------
# Pure-JAX reference (sanity check of the Pallas path).
# -----------------------------------------------------------------------------
def _reference_forward(x_nchw, params):
    w_conv, b_conv, w_fc, b_fc = (
        params["w_conv"], params["b_conv"], params["w_fc"], params["b_fc"])
    x = jnp.transpose(x_nchw, (0, 2, 3, 1))
    conv = jax.lax.conv_general_dilated(
        x, w_conv, window_strides=(1, 1), padding="SAME",
        dimension_numbers=("NHWC", "HWIO", "NHWC"))
    conv = jnp.maximum(conv + b_conv, 0.0)
    feats = jnp.mean(conv, axis=(1, 2))                    # global average pool
    return feats @ w_fc.T + b_fc


if __name__ == "__main__":
    # Small, deterministic problem sizes.
    B, C_in, H, W = 2, 4, 16, 16
    feature_dim, out_dim = 32, 8
    KH = KW = 3

    key = jax.random.PRNGKey(0)
    k_x, k_wc, k_bc, k_wf, k_bf = jax.random.split(key, 5)

    x = jax.random.normal(k_x, (B, C_in, H, W), dtype=jnp.float32)   # NCHW input
    params = {
        "w_conv": jax.random.normal(k_wc, (KH, KW, C_in, feature_dim),
                                    dtype=jnp.float32) * 0.1,
        "b_conv": jax.random.normal(k_bc, (feature_dim,), dtype=jnp.float32) * 0.1,
        # torch.nn.Linear stores weight as [out_dim, feature_dim]
        "w_fc": jax.random.normal(k_wf, (out_dim, feature_dim),
                                  dtype=jnp.float32) * 0.1,
        "b_fc": jax.random.normal(k_bf, (out_dim,), dtype=jnp.float32) * 0.1,
    }

    prepped = prepare_params(params)                       # one-time weight prep
    fwd = jax.jit(functools.partial(connection_classifier_forward, prepped=prepped))

    out = jax.block_until_ready(fwd(x))

    ref = jax.block_until_ready(_reference_forward(x, params))
    # bf16 MXU operands (f32 accumulation) vs. f32 reference -> loose but
    # bug-catching tolerance; a wrong tap/mask would be off by O(0.1-1).
    np.testing.assert_allclose(np.asarray(out), np.asarray(ref),
                               rtol=2e-2, atol=2e-2)

    preds = jax.block_until_ready(predict(out))
    assert out.shape == (B, out_dim) and preds.shape == (B, out_dim)

    print("KERNEL_OK")
</pallas_src>

<mosaic_0001>
module attributes {stable_mosaic.version = 11 : i64} {
  func.func @_fused_kernel(%arg0: i32, %arg1: memref<1x342x8xf32, #tpu.memory_space<vmem>>, %arg2: memref<144x1xf32, #tpu.memory_space<vmem>>, %arg3: memref<9x8x128xbf16, #tpu.memory_space<vmem>>, %arg4: memref<128x128xf32, #tpu.memory_space<vmem>>, %arg5: memref<1x128xf32, #tpu.memory_space<vmem>>, %arg6: memref<1x8x128xf32, #tpu.memory_space<vmem>>) attributes {dimension_semantics = [#tpu.dimension_semantics<parallel>], iteration_bounds = array<i64: 2>, scalar_prefetch = 0 : i64, scratch_operands = 0 : i64, tpu.core_type = #tpu.core_type<tc>, window_params = [{transform_indices = @transform_0, window_bounds = array<i64: 1, 342, 8>}, {pipeline_mode = #tpu.pipeline_mode<synchronous>, transform_indices = @transform_1, window_bounds = array<i64: 144, 1>}, {pipeline_mode = #tpu.pipeline_mode<synchronous>, transform_indices = @transform_2, window_bounds = array<i64: 9, 8, 128>}, {pipeline_mode = #tpu.pipeline_mode<synchronous>, transform_indices = @transform_3, window_bounds = array<i64: 128, 128>}, {pipeline_mode = #tpu.pipeline_mode<synchronous>, transform_indices = @transform_4, window_bounds = array<i64: 1, 128>}, {transform_indices = @transform_5, window_bounds = array<i64: 1, 8, 128>}]} {
    %c0 = arith.constant 0 : index
    %c0_0 = arith.constant 0 : index
    %0 = vector.load %arg2[%c0, %c0_0] : memref<144x1xf32, #tpu.memory_space<vmem>>, vector<144x1xf32>
    %cst = arith.constant 0.000000e+00 : f32
    %1 = vector.broadcast %cst : f32 to vector<1x128xf32>
    %cst_1 = arith.constant 0.000000e+00 : f32
    %2 = vector.broadcast %cst_1 : f32 to vector<144x128xf32>
    %c0_2 = arith.constant 0 : index
    %c0_3 = arith.constant 0 : index
    %c0_4 = arith.constant 0 : index
    %3 = vector.load %arg1[%c0_2, %c0_3, %c0_4] : memref<1x342x8xf32, #tpu.memory_space<vmem>>, vector<1x144x8xf32>
    %4 = vector.shape_cast %3 : vector<1x144x8xf32> to vector<144x8xf32>
    %5 = arith.truncf %4 : vector<144x8xf32> to vector<144x8xbf16>
    %c0_5 = arith.constant 0 : index
    %c0_6 = arith.constant 0 : index
    %c0_7 = arith.constant 0 : index
    %6 = vector.load %arg3[%c0_5, %c0_6, %c0_7] : memref<9x8x128xbf16, #tpu.memory_space<vmem>>, vector<1x8x128xbf16>
    %7 = vector.shape_cast %6 : vector<1x8x128xbf16> to vector<8x128xbf16>
    %cst_8 = arith.constant dense<0.000000e+00> : vector<144x128xf32>
    %8 = tpu.matmul %5, %7, %cst_8 {dimension_numbers = #tpu.dot_dimension_numbers<[1], [0], [0], [1], [0, 0, 1, 1], [], []>} : vector<144x8xbf16>, vector<8x128xbf16>, vector<144x128xf32> -> vector<144x128xf32>
    %9 = arith.addf %2, %8 : vector<144x128xf32>
    %c0_9 = arith.constant 0 : index
    %c1 = arith.constant 1 : index
    %c0_10 = arith.constant 0 : index
    %10 = vector.load %arg1[%c0_9, %c1, %c0_10] : memref<1x342x8xf32, #tpu.memory_space<vmem>>, vector<1x144x8xf32>
    %11 = vector.shape_cast %10 : vector<1x144x8xf32> to vector<144x8xf32>
    %12 = arith.truncf %11 : vector<144x8xf32> to vector<144x8xbf16>
    %c1_11 = arith.constant 1 : index
    %c0_12 = arith.constant 0 : index
    %c0_13 = arith.constant 0 : index
    %13 = vector.load %arg3[%c1_11, %c0_12, %c0_13] : memref<9x8x128xbf16, #tpu.memory_space<vmem>>, vector<1x8x128xbf16>
    %14 = vector.shape_cast %13 : vector<1x8x128xbf16> to vector<8x128xbf16>
    %cst_14 = arith.constant dense<0.000000e+00> : vector<144x128xf32>
    %15 = tpu.matmul %12, %14, %cst_14 {dimension_numbers = #tpu.dot_dimension_numbers<[1], [0], [0], [1], [0, 0, 1, 1], [], []>} : vector<144x8xbf16>, vector<8x128xbf16>, vector<144x128xf32> -> vector<144x128xf32>
    %16 = arith.addf %9, %15 : vector<144x128xf32>
    %c0_15 = arith.constant 0 : index
    %c2 = arith.constant 2 : index
    %c0_16 = arith.constant 0 : index
    %17 = vector.load %arg1[%c0_15, %c2, %c0_16] : memref<1x342x8xf32, #tpu.memory_space<vmem>>, vector<1x144x8xf32>
    %18 = vector.shape_cast %17 : vector<1x144x8xf32> to vector<144x8xf32>
    %19 = arith.truncf %18 : vector<144x8xf32> to vector<144x8xbf16>
    %c2_17 = arith.constant 2 : index
    %c0_18 = arith.constant 0 : index
    %c0_19 = arith.constant 0 : index
    %20 = vector.load %arg3[%c2_17, %c0_18, %c0_19] : memref<9x8x128xbf16, #tpu.memory_space<vmem>>, vector<1x8x128xbf16>
    %21 = vector.shape_cast %20 : vector<1x8x128xbf16> to vector<8x128xbf16>
    %cst_20 = arith.constant dense<0.000000e+00> : vector<144x128xf32>
    %22 = tpu.matmul %19, %21, %cst_20 {dimension_numbers = #tpu.dot_dimension_numbers<[1], [0], [0], [1], [0, 0, 1, 1], [], []>} : vector<144x8xbf16>, vector<8x128xbf16>, vector<144x128xf32> -> vector<144x128xf32>
    %23 = arith.addf %16, %22 : vector<144x128xf32>
    %c0_21 = arith.constant 0 : index
    %c18 = arith.constant 18 : index
    %c0_22 = arith.constant 0 : index
    %24 = vector.load %arg1[%c0_21, %c18, %c0_22] : memref<1x342x8xf32, #tpu.memory_space<vmem>>, vector<1x144x8xf32>
    %25 = vector.shape_cast %24 : vector<1x144x8xf32> to vector<144x8xf32>
    %26 = arith.truncf %25 : vector<144x8xf32> to vector<144x8xbf16>
    %c3 = arith.constant 3 : index
    %c0_23 = arith.constant 0 : index
    %c0_24 = arith.constant 0 : index
    %27 = vector.load %arg3[%c3, %c0_23, %c0_24] : memref<9x8x128xbf16, #tpu.memory_space<vmem>>, vector<1x8x128xbf16>
    %28 = vector.shape_cast %27 : vector<1x8x128xbf16> to vector<8x128xbf16>
    %cst_25 = arith.constant dense<0.000000e+00> : vector<144x128xf32>
    %29 = tpu.matmul %26, %28, %cst_25 {dimension_numbers = #tpu.dot_dimension_numbers<[1], [0], [0], [1], [0, 0, 1, 1], [], []>} : vector<144x8xbf16>, vector<8x128xbf16>, vector<144x128xf32> -> vector<144x128xf32>
    %30 = arith.addf %23, %29 : vector<144x128xf32>
    %c0_26 = arith.constant 0 : index
    %c19 = arith.constant 19 : index
    %c0_27 = arith.constant 0 : index
    %31 = vector.load %arg1[%c0_26, %c19, %c0_27] : memref<1x342x8xf32, #tpu.memory_space<vmem>>, vector<1x144x8xf32>
    %32 = vector.shape_cast %31 : vector<1x144x8xf32> to vector<144x8xf32>
    %33 = arith.truncf %32 : vector<144x8xf32> to vector<144x8xbf16>
    %c4 = arith.constant 4 : index
    %c0_28 = arith.constant 0 : index
    %c0_29 = arith.constant 0 : index
    %34 = vector.load %arg3[%c4, %c0_28, %c0_29] : memref<9x8x128xbf16, #tpu.memory_space<vmem>>, vector<1x8x128xbf16>
    %35 = vector.shape_cast %34 : vector<1x8x128xbf16> to vector<8x128xbf16>
    %cst_30 = arith.constant dense<0.000000e+00> : vector<144x128xf32>
    %36 = tpu.matmul %33, %35, %cst_30 {dimension_numbers = #tpu.dot_dimension_numbers<[1], [0], [0], [1], [0, 0, 1, 1], [], []>} : vector<144x8xbf16>, vector<8x128xbf16>, vector<144x128xf32> -> vector<144x128xf32>
    %37 = arith.addf %30, %36 : vector<144x128xf32>
    %c0_31 = arith.constant 0 : index
    %c20 = arith.constant 20 : index
    %c0_32 = arith.constant 0 : index
    %38 = vector.load %arg1[%c0_31, %c20, %c0_32] : memref<1x342x8xf32, #tpu.memory_space<vmem>>, vector<1x144x8xf32>
    %39 = vector.shape_cast %38 : vector<1x144x8xf32> to vector<144x8xf32>
    %40 = arith.truncf %39 : vector<144x8xf32> to vector<144x8xbf16>
    %c5 = arith.constant 5 : index
    %c0_33 = arith.constant 0 : index
    %c0_34 = arith.constant 0 : index
    %41 = vector.load %arg3[%c5, %c0_33, %c0_34] : memref<9x8x128xbf16, #tpu.memory_space<vmem>>, vector<1x8x128xbf16>
    %42 = vector.shape_cast %41 : vector<1x8x128xbf16> to vector<8x128xbf16>
    %cst_35 = arith.constant dense<0.000000e+00> : vector<144x128xf32>
    %43 = tpu.matmul %40, %42, %cst_35 {dimension_numbers = #tpu.dot_dimension_numbers<[1], [0], [0], [1], [0, 0, 1, 1], [], []>} : vector<144x8xbf16>, vector<8x128xbf16>, vector<144x128xf32> -> vector<144x128xf32>
    %44 = arith.addf %37, %43 : vector<144x128xf32>
    %c0_36 = arith.constant 0 : index
    %c36 = arith.constant 36 : index
    %c0_37 = arith.constant 0 : index
    %45 = vector.load %arg1[%c0_36, %c36, %c0_37] : memref<1x342x8xf32, #tpu.memory_space<vmem>>, vector<1x144x8xf32>
    %46 = vector.shape_cast %45 : vector<1x144x8xf32> to vector<144x8xf32>
    %47 = arith.truncf %46 : vector<144x8xf32> to vector<144x8xbf16>
    %c6 = arith.constant 6 : index
    %c0_38 = arith.constant 0 : index
    %c0_39 = arith.constant 0 : index
    %48 = vector.load %arg3[%c6, %c0_38, %c0_39] : memref<9x8x128xbf16, #tpu.memory_space<vmem>>, vector<1x8x128xbf16>
    %49 = vector.shape_cast %48 : vector<1x8x128xbf16> to vector<8x128xbf16>
    %cst_40 = arith.constant dense<0.000000e+00> : vector<144x128xf32>
    %50 = tpu.matmul %47, %49, %cst_40 {dimension_numbers = #tpu.dot_dimension_numbers<[1], [0], [0], [1], [0, 0, 1, 1], [], []>} : vector<144x8xbf16>, vector<8x128xbf16>, vector<144x128xf32> -> vector<144x128xf32>
    %51 = arith.addf %44, %50 : vector<144x128xf32>
    %c0_41 = arith.constant 0 : index
    %c37 = arith.constant 37 : index
    %c0_42 = arith.constant 0 : index
    %52 = vector.load %arg1[%c0_41, %c37, %c0_42] : memref<1x342x8xf32, #tpu.memory_space<vmem>>, vector<1x144x8xf32>
    %53 = vector.shape_cast %52 : vector<1x144x8xf32> to vector<144x8xf32>
    %54 = arith.truncf %53 : vector<144x8xf32> to vector<144x8xbf16>
    %c7 = arith.constant 7 : index
    %c0_43 = arith.constant 0 : index
    %c0_44 = arith.constant 0 : index
    %55 = vector.load %arg3[%c7, %c0_43, %c0_44] : memref<9x8x128xbf16, #tpu.memory_space<vmem>>, vector<1x8x128xbf16>
    %56 = vector.shape_cast %55 : vector<1x8x128xbf16> to vector<8x128xbf16>
    %cst_45 = arith.constant dense<0.000000e+00> : vector<144x128xf32>
    %57 = tpu.matmul %54, %56, %cst_45 {dimension_numbers = #tpu.dot_dimension_numbers<[1], [0], [0], [1], [0, 0, 1, 1], [], []>} : vector<144x8xbf16>, vector<8x128xbf16>, vector<144x128xf32> -> vector<144x128xf32>
    %58 = arith.addf %51, %57 : vector<144x128xf32>
    %c0_46 = arith.constant 0 : index
    %c38 = arith.constant 38 : index
    %c0_47 = arith.constant 0 : index
    %59 = vector.load %arg1[%c0_46, %c38, %c0_47] : memref<1x342x8xf32, #tpu.memory_space<vmem>>, vector<1x144x8xf32>
    %60 = vector.shape_cast %59 : vector<1x144x8xf32> to vector<144x8xf32>
    %61 = arith.truncf %60 : vector<144x8xf32> to vector<144x8xbf16>
    %c8 = arith.constant 8 : index
    %c0_48 = arith.constant 0 : index
    %c0_49 = arith.constant 0 : index
    %62 = vector.load %arg3[%c8, %c0_48, %c0_49] : memref<9x8x128xbf16, #tpu.memory_space<vmem>>, vector<1x8x128xbf16>
    %63 = vector.shape_cast %62 : vector<1x8x128xbf16> to vector<8x128xbf16>
    %cst_50 = arith.constant dense<0.000000e+00> : vector<144x128xf32>
    %64 = tpu.matmul %61, %63, %cst_50 {dimension_numbers = #tpu.dot_dimension_numbers<[1], [0], [0], [1], [0, 0, 1, 1], [], []>} : vector<144x8xbf16>, vector<8x128xbf16>, vector<144x128xf32> -> vector<144x128xf32>
    %65 = arith.addf %58, %64 : vector<144x128xf32>
    %cst_51 = arith.constant 0.000000e+00 : f32
    %66 = vector.broadcast %cst_51 : f32 to vector<144x128xf32>
    %67 = arith.maximumf %65, %66 : vector<144x128xf32>
    %68 = vector.broadcast %0 : vector<144x1xf32> to vector<144x128xf32>
    %69 = arith.mulf %67, %68 : vector<144x128xf32>
    %cst_52 = arith.constant dense<0.000000e+00> : vector<128xf32>
    %70 = vector.multi_reduction <add>, %69, %cst_52 [0] : vector<144x128xf32> to vector<128xf32>
    %71 = vector.shape_cast %70 : vector<128xf32> to vector<1x128xf32>
    %72 = arith.addf %1, %71 : vector<1x128xf32>
    %cst_53 = arith.constant 0.000000e+00 : f32
    %73 = vector.broadcast %cst_53 : f32 to vector<144x128xf32>
    %c0_54 = arith.constant 0 : index
    %c144 = arith.constant 144 : index
    %c0_55 = arith.constant 0 : index
    %74 = vector.load %arg1[%c0_54, %c144, %c0_55] : memref<1x342x8xf32, #tpu.memory_space<vmem>>, vector<1x144x8xf32>
    %75 = vector.shape_cast %74 : vector<1x144x8xf32> to vector<144x8xf32>
    %76 = arith.truncf %75 : vector<144x8xf32> to vector<144x8xbf16>
    %c0_56 = arith.constant 0 : index
    %c0_57 = arith.constant 0 : index
    %c0_58 = arith.constant 0 : index
    %77 = vector.load %arg3[%c0_56, %c0_57, %c0_58] : memref<9x8x128xbf16, #tpu.memory_space<vmem>>, vector<1x8x128xbf16>
    %78 = vector.shape_cast %77 : vector<1x8x128xbf16> to vector<8x128xbf16>
    %cst_59 = arith.constant dense<0.000000e+00> : vector<144x128xf32>
    %79 = tpu.matmul %76, %78, %cst_59 {dimension_numbers = #tpu.dot_dimension_numbers<[1], [0], [0], [1], [0, 0, 1, 1], [], []>} : vector<144x8xbf16>, vector<8x128xbf16>, vector<144x128xf32> -> vector<144x128xf32>
    %80 = arith.addf %73, %79 : vector<144x128xf32>
    %c0_60 = arith.constant 0 : index
    %c145 = arith.constant 145 : index
    %c0_61 = arith.constant 0 : index
    %81 = vector.load %arg1[%c0_60, %c145, %c0_61] : memref<1x342x8xf32, #tpu.memory_space<vmem>>, vector<1x144x8xf32>
    %82 = vector.shape_cast %81 : vector<1x144x8xf32> to vector<144x8xf32>
    %83 = arith.truncf %82 : vector<144x8xf32> to vector<144x8xbf16>
    %c1_62 = arith.constant 1 : index
    %c0_63 = arith.constant 0 : index
    %c0_64 = arith.constant 0 : index
    %84 = vector.load %arg3[%c1_62, %c0_63, %c0_64] : memref<9x8x128xbf16, #tpu.memory_space<vmem>>, vector<1x8x128xbf16>
    %85 = vector.shape_cast %84 : vector<1x8x128xbf16> to vector<8x128xbf16>
    %cst_65 = arith.constant dense<0.000000e+00> : vector<144x128xf32>
    %86 = tpu.matmul %83, %85, %cst_65 {dimension_numbers = #tpu.dot_dimension_numbers<[1], [0], [0], [1], [0, 0, 1, 1], [], []>} : vector<144x8xbf16>, vector<8x128xbf16>, vector<144x128xf32> -> vector<144x128xf32>
    %87 = arith.addf %80, %86 : vector<144x128xf32>
    %c0_66 = arith.constant 0 : index
    %c146 = arith.constant 146 : index
    %c0_67 = arith.constant 0 : index
    %88 = vector.load %arg1[%c0_66, %c146, %c0_67] : memref<1x342x8xf32, #tpu.memory_space<vmem>>, vector<1x144x8xf32>
    %89 = vector.shape_cast %88 : vector<1x144x8xf32> to vector<144x8xf32>
    %90 = arith.truncf %89 : vector<144x8xf32> to vector<144x8xbf16>
    %c2_68 = arith.constant 2 : index
    %c0_69 = arith.constant 0 : index
    %c0_70 = arith.constant 0 : index
    %91 = vector.load %arg3[%c2_68, %c0_69, %c0_70] : memref<9x8x128xbf16, #tpu.memory_space<vmem>>, vector<1x8x128xbf16>
    %92 = vector.shape_cast %91 : vector<1x8x128xbf16> to vector<8x128xbf16>
    %cst_71 = arith.constant dense<0.000000e+00> : vector<144x128xf32>
    %93 = tpu.matmul %90, %92, %cst_71 {dimension_numbers = #tpu.dot_dimension_numbers<[1], [0], [0], [1], [0, 0, 1, 1], [], []>} : vector<144x8xbf16>, vector<8x128xbf16>, vector<144x128xf32> -> vector<144x128xf32>
    %94 = arith.addf %87, %93 : vector<144x128xf32>
    %c0_72 = arith.constant 0 : index
    %c162 = arith.constant 162 : index
    %c0_73 = arith.constant 0 : index
    %95 = vector.load %arg1[%c0_72, %c162, %c0_73] : memref<1x342x8xf32, #tpu.memory_space<vmem>>, vector<1x144x8xf32>
    %96 = vector.shape_cast %95 : vector<1x144x8xf32> to vector<144x8xf32>
    %97 = arith.truncf %96 : vector<144x8xf32> to vector<144x8xbf16>
    %c3_74 = arith.constant 3 : index
    %c0_75 = arith.constant 0 : index
    %c0_76 = arith.constant 0 : index
    %98 = vector.load %arg3[%c3_74, %c0_75, %c0_76] : memref<9x8x128xbf16, #tpu.memory_space<vmem>>, vector<1x8x128xbf16>
    %99 = vector.shape_cast %98 : vector<1x8x128xbf16> to vector<8x128xbf16>
    %cst_77 = arith.constant dense<0.000000e+00> : vector<144x128xf32>
    %100 = tpu.matmul %97, %99, %cst_77 {dimension_numbers = #tpu.dot_dimension_numbers<[1], [0], [0], [1], [0, 0, 1, 1], [], []>} : vector<144x8xbf16>, vector<8x128xbf16>, vector<144x128xf32> -> vector<144x128xf32>
    %101 = arith.addf %94, %100 : vector<144x128xf32>
    %c0_78 = arith.constant 0 : index
    %c163 = arith.constant 163 : index
    %c0_79 = arith.constant 0 : index
    %102 = vector.load %arg1[%c0_78, %c163, %c0_79] : memref<1x342x8xf32, #tpu.memory_space<vmem>>, vector<1x144x8xf32>
    %103 = vector.shape_cast %102 : vector<1x144x8xf32> to vector<144x8xf32>
    %104 = arith.truncf %103 : vector<144x8xf32> to vector<144x8xbf16>
    %c4_80 = arith.constant 4 : index
    %c0_81 = arith.constant 0 : index
    %c0_82 = arith.constant 0 : index
    %105 = vector.load %arg3[%c4_80, %c0_81, %c0_82] : memref<9x8x128xbf16, #tpu.memory_space<vmem>>, vector<1x8x128xbf16>
    %106 = vector.shape_cast %105 : vector<1x8x128xbf16> to vector<8x128xbf16>
    %cst_83 = arith.constant dense<0.000000e+00> : vector<144x128xf32>
    %107 = tpu.matmul %104, %106, %cst_83 {dimension_numbers = #tpu.dot_dimension_numbers<[1], [0], [0], [1], [0, 0, 1, 1], [], []>} : vector<144x8xbf16>, vector<8x128xbf16>, vector<144x128xf32> -> vector<144x128xf32>
    %108 = arith.addf %101, %107 : vector<144x128xf32>
    %c0_84 = arith.constant 0 : index
    %c164 = arith.constant 164 : index
    %c0_85 = arith.constant 0 : index
    %109 = vector.load %arg1[%c0_84, %c164, %c0_85] : memref<1x342x8xf32, #tpu.memory_space<vmem>>, vector<1x144x8xf32>
    %110 = vector.shape_cast %109 : vector<1x144x8xf32> to vector<144x8xf32>
    %111 = arith.truncf %110 : vector<144x8xf32> to vector<144x8xbf16>
    %c5_86 = arith.constant 5 : index
    %c0_87 = arith.constant 0 : index
    %c0_88 = arith.constant 0 : index
    %112 = vector.load %arg3[%c5_86, %c0_87, %c0_88] : memref<9x8x128xbf16, #tpu.memory_space<vmem>>, vector<1x8x128xbf16>
    %113 = vector.shape_cast %112 : vector<1x8x128xbf16> to vector<8x128xbf16>
    %cst_89 = arith.constant dense<0.000000e+00> : vector<144x128xf32>
    %114 = tpu.matmul %111, %113, %cst_89 {dimension_numbers = #tpu.dot_dimension_numbers<[1], [0], [0], [1], [0, 0, 1, 1], [], []>} : vector<144x8xbf16>, vector<8x128xbf16>, vector<144x128xf32> -> vector<144x128xf32>
    %115 = arith.addf %108, %114 : vector<144x128xf32>
    %c0_90 = arith.constant 0 : index
    %c180 = arith.constant 180 : index
    %c0_91 = arith.constant 0 : index
    %116 = vector.load %arg1[%c0_90, %c180, %c0_91] : memref<1x342x8xf32, #tpu.memory_space<vmem>>, vector<1x144x8xf32>
    %117 = vector.shape_cast %116 : vector<1x144x8xf32> to vector<144x8xf32>
    %118 = arith.truncf %117 : vector<144x8xf32> to vector<144x8xbf16>
    %c6_92 = arith.constant 6 : index
    %c0_93 = arith.constant 0 : index
    %c0_94 = arith.constant 0 : index
    %119 = vector.load %arg3[%c6_92, %c0_93, %c0_94] : memref<9x8x128xbf16, #tpu.memory_space<vmem>>, vector<1x8x128xbf16>
    %120 = vector.shape_cast %119 : vector<1x8x128xbf16> to vector<8x128xbf16>
    %cst_95 = arith.constant dense<0.000000e+00> : vector<144x128xf32>
    %121 = tpu.matmul %118, %120, %cst_95 {dimension_numbers = #tpu.dot_dimension_numbers<[1], [0], [0], [1], [0, 0, 1, 1], [], []>} : vector<144x8xbf16>, vector<8x128xbf16>, vector<144x128xf32> -> vector<144x128xf32>
    %122 = arith.addf %115, %121 : vector<144x128xf32>
    %c0_96 = arith.constant 0 : index
    %c181 = arith.constant 181 : index
    %c0_97 = arith.constant 0 : index
    %123 = vector.load %arg1[%c0_96, %c181, %c0_97] : memref<1x342x8xf32, #tpu.memory_space<vmem>>, vector<1x144x8xf32>
    %124 = vector.shape_cast %123 : vector<1x144x8xf32> to vector<144x8xf32>
    %125 = arith.truncf %124 : vector<144x8xf32> to vector<144x8xbf16>
    %c7_98 = arith.constant 7 : index
    %c0_99 = arith.constant 0 : index
    %c0_100 = arith.constant 0 : index
    %126 = vector.load %arg3[%c7_98, %c0_99, %c0_100] : memref<9x8x128xbf16, #tpu.memory_space<vmem>>, vector<1x8x128xbf16>
    %127 = vector.shape_cast %126 : vector<1x8x128xbf16> to vector<8x128xbf16>
    %cst_101 = arith.constant dense<0.000000e+00> : vector<144x128xf32>
    %128 = tpu.matmul %125, %127, %cst_101 {dimension_numbers = #tpu.dot_dimension_numbers<[1], [0], [0], [1], [0, 0, 1, 1], [], []>} : vector<144x8xbf16>, vector<8x128xbf16>, vector<144x128xf32> -> vector<144x128xf32>
    %129 = arith.addf %122, %128 : vector<144x128xf32>
    %c0_102 = arith.constant 0 : index
    %c182 = arith.constant 182 : index
    %c0_103 = arith.constant 0 : index
    %130 = vector.load %arg1[%c0_102, %c182, %c0_103] : memref<1x342x8xf32, #tpu.memory_space<vmem>>, vector<1x144x8xf32>
    %131 = vector.shape_cast %130 : vector<1x144x8xf32> to vector<144x8xf32>
    %132 = arith.truncf %131 : vector<144x8xf32> to vector<144x8xbf16>
    %c8_104 = arith.constant 8 : index
    %c0_105 = arith.constant 0 : index
    %c0_106 = arith.constant 0 : index
    %133 = vector.load %arg3[%c8_104, %c0_105, %c0_106] : memref<9x8x128xbf16, #tpu.memory_space<vmem>>, vector<1x8x128xbf16>
    %134 = vector.shape_cast %133 : vector<1x8x128xbf16> to vector<8x128xbf16>
    %cst_107 = arith.constant dense<0.000000e+00> : vector<144x128xf32>
    %135 = tpu.matmul %132, %134, %cst_107 {dimension_numbers = #tpu.dot_dimension_numbers<[1], [0], [0], [1], [0, 0, 1, 1], [], []>} : vector<144x8xbf16>, vector<8x128xbf16>, vector<144x128xf32> -> vector<144x128xf32>
    %136 = arith.addf %129, %135 : vector<144x128xf32>
    %cst_108 = arith.constant 0.000000e+00 : f32
    %137 = vector.broadcast %cst_108 : f32 to vector<144x128xf32>
    %138 = arith.maximumf %136, %137 : vector<144x128xf32>
    %139 = vector.broadcast %0 : vector<144x1xf32> to vector<144x128xf32>
    %140 = arith.mulf %138, %139 : vector<144x128xf32>
    %cst_109 = arith.constant dense<0.000000e+00> : vector<128xf32>
    %141 = vector.multi_reduction <add>, %140, %cst_109 [0] : vector<144x128xf32> to vector<128xf32>
    %142 = vector.shape_cast %141 : vector<128xf32> to vector<1x128xf32>
    %143 = arith.addf %72, %142 : vector<1x128xf32>
    %cst_110 = arith.constant 3.906250e-03 : f32
    %144 = vector.broadcast %cst_110 : f32 to vector<1x128xf32>
    %145 = arith.mulf %143, %144 : vector<1x128xf32>
    %c0_111 = arith.constant 0 : index
    %c0_112 = arith.constant 0 : index
    %146 = vector.load %arg4[%c0_111, %c0_112] : memref<128x128xf32, #tpu.memory_space<vmem>>, vector<128x128xf32>
    %cst_113 = arith.constant dense<0.000000e+00> : vector<1x128xf32>
    %147 = tpu.matmul %145, %146, %cst_113 {dimension_numbers = #tpu.dot_dimension_numbers<[1], [0], [0], [1], [0, 0, 1, 1], [], []>} : vector<1x128xf32>, vector<128x128xf32>, vector<1x128xf32> -> vector<1x128xf32>
    %c0_114 = arith.constant 0 : index
    %c0_115 = arith.constant 0 : index
    %148 = vector.load %arg5[%c0_114, %c0_115] : memref<1x128xf32, #tpu.memory_space<vmem>>, vector<1x128xf32>
    %149 = arith.addf %147, %148 : vector<1x128xf32>
    %150 = vector.shape_cast %149 : vector<1x128xf32> to vector<1x128xf32>
    %151 = vector.broadcast %150 : vector<1x128xf32> to vector<8x128xf32>
    %c0_116 = arith.constant 0 : index
    %c0_117 = arith.constant 0 : index
    %c0_118 = arith.constant 0 : index
    %152 = vector.load %arg6[%c0_116, %c0_117, %c0_118] : memref<1x8x128xf32, #tpu.memory_space<vmem>>, vector<1x8x128xf32>
    %153 = vector.shape_cast %152 : vector<1x8x128xf32> to vector<8x128xf32>
    %154 = vector.shape_cast %151 : vector<8x128xf32> to vector<1x8x128xf32>
    tpu.vector_store %arg6[%c0_116, %c0_117, %c0_118], %154 {strides = array<i32>} : memref<1x8x128xf32, #tpu.memory_space<vmem>>, vector<1x8x128xf32>,
    return
  }
  func.func @transform_0(%arg0: i32) -> (i32, i32, i32) {
    %c0_i32 = arith.constant 0 : i32
    %c0_i32_0 = arith.constant 0 : i32
    %c0_i32_1 = arith.constant 0 : i32
    return %arg0, %c0_i32, %c0_i32_0 : i32, i32, i32
  }
  func.func @transform_1(%arg0: i32) -> (i32, i32) {
    %c0_i32 = arith.constant 0 : i32
    %c0_i32_0 = arith.constant 0 : i32
    %c0_i32_1 = arith.constant 0 : i32
    return %c0_i32, %c0_i32_0 : i32, i32
  }
  func.func @transform_2(%arg0: i32) -> (i32, i32, i32) {
    %c0_i32 = arith.constant 0 : i32
    %c0_i32_0 = arith.constant 0 : i32
    %c0_i32_1 = arith.constant 0 : i32
    %c0_i32_2 = arith.constant 0 : i32
    return %c0_i32, %c0_i32_0, %c0_i32_1 : i32, i32, i32
  }
  func.func @transform_3(%arg0: i32) -> (i32, i32) {
    %c0_i32 = arith.constant 0 : i32
    %c0_i32_0 = arith.constant 0 : i32
    %c0_i32_1 = arith.constant 0 : i32
    return %c0_i32, %c0_i32_0 : i32, i32
  }
  func.func @transform_4(%arg0: i32) -> (i32, i32) {
    %c0_i32 = arith.constant 0 : i32
    %c0_i32_0 = arith.constant 0 : i32
    %c0_i32_1 = arith.constant 0 : i32
    return %c0_i32, %c0_i32_0 : i32, i32
  }
  func.func @transform_5(%arg0: i32) -> (i32, i32, i32) {
    %c0_i32 = arith.constant 0 : i32
    %c0_i32_0 = arith.constant 0 : i32
    %c0_i32_1 = arith.constant 0 : i32
    return %arg0, %c0_i32, %c0_i32_0 : i32, i32, i32
  }
}

</mosaic_0001>

<llo_original>
// kernel: connection_classifier_forward.1
$region0: #{connection_classifier_forward.1}
  #allocation0 [shape = 'u32[]', space=smem, size = 0x4, offset = 0x4, fixed_abs, tag = 'smem constant byte address 0x4 - core index']
  #allocation1 [shape = 'u32[144,128]{1,0:T(1,128)}', space=vmem, size = 0x12000, scoped, tag = 'internal scratch']
  %s0 = inlined_call_operand.vmem [shape: f32[2,342,8], index: 0, kind: input, shape index: {}]
  %s1 = inlined_call_operand.vmem [shape: f32[144,1], index: 1, kind: input, shape index: {}]
  %s2 = inlined_call_operand.vmem [shape: bf16[9,8,128], index: 2, kind: input, shape index: {}]
  %s3 = inlined_call_operand.vmem [shape: f32[128,128], index: 3, kind: input, shape index: {}]
  %s4 = inlined_call_operand.vmem [shape: f32[1,128], index: 4, kind: input, shape index: {}]
  %s5 = inlined_call_operand.vmem [shape: f32[2,8,128], index: 5, kind: output, shape index: {}]
  %s6 = sld [smem:[#allocation0]]
  $region53: #{connection_classifier_forward.1} parent=0
    _
  %s8 = ssub.s32 1, %s6
  %s9 = scalar_select 0, %s8, %s6
  loop: start=0, step=1, limit=4
  $region2: #{connection_classifier_forward.1} parent=0 // loop_pre_header
    _
  $region3: #{connection_classifier_forward.1} parent=0 // loop_header
    %s11 = sphi 0, %s15
    %p12 = scmp.ge.s32.totalorder %s11, 4
    %s21 = sphi 0, %s23
    %s24 = sphi 0, %s21
    %s25 = sphi 0, %s24
    %s41 = sphi 0, %s25
    %s45 = sphi 0, %s45
    %s47 = sphi 0, %s45
    %s48 = sphi 0, %s47
    %s62 = sphi 0, %s48
    %s66 = sphi 0, %s66
    %s68 = sphi 0, %s66
    %s69 = sphi 0, %s68
    %s83 = sphi 0, %s69
    %s87 = sphi 0, %s87
    %s89 = sphi 0, %s87
    %s90 = sphi 0, %s89
    %s104 = sphi 0, %s90
    %s108 = sphi 0, %s108
    %s110 = sphi 0, %s108
    %s111 = sphi 0, %s110
    %s125 = sphi 0, %s111
    %s131 = sphi 0, %s133
    %s134 = sphi 0, %s131
    %s135 = sphi 0, %s134
    %s151 = sphi 0, %s135
  $region4: #{connection_classifier_forward.1} parent=0 // loop_header_branch
    %14 = sbr.rel (%p12) target = $region8
  $region5: #{connection_classifier_forward.1} parent=0 // loop_body
    %s16 = ssub.s32 %s11, 1
    %s17 = ssub.s32 %s11, 2
    %s18 = sadd.s32 %s11, 1
    %s19 = ssub.s32 %s11, %s18
    %p20 = scmp.eq.s32.totalorder %s19, 0
    %s22 = sadd.s32 %s21, 1
    %s23 = scalar_select %p20, %s21, %s22
    %p26 = pneg %p20
    %p27 = scmp.eq.s32.totalorder %s11, 1
    %p28 = por %p26, %p27
    %p29 = scmp.ne.s32.totalorder %s21, %s24
    %p30 = scmp.eq.s32.totalorder %s11, 0
    %p31 = por %p29, %p30
    %p32 = scmp.ne.s32.totalorder %s21, %s24
    %p33 = scmp.eq.s32.totalorder %s16, 1
    %p34 = por %p32, %p33
    %p35 = scmp.ne.s32.totalorder %s24, %s25
    %p36 = scmp.eq.s32.totalorder %s16, 0
    %p37 = por %p35, %p36
    %p38 = scmp.ne.s32.totalorder %s24, %s25
    %p39 = scmp.eq.s32.totalorder %s17, 1
    %p40 = por %p38, %p39
    %p42 = scmp.ne.s32.totalorder %s25, %s41
    %p43 = scmp.eq.s32.totalorder %s17, 0
    %p44 = por %p42, %p43
    %s46 = sadd.s32 %s45, 1
    %p49 = scmp.eq.s32.totalorder %s11, 1
    %p50 = scmp.ne.s32.totalorder %s45, %s47
    %p51 = scmp.eq.s32.totalorder %s11, 0
    %p52 = por %p50, %p51
    %p53 = scmp.ne.s32.totalorder %s45, %s47
    %p54 = scmp.eq.s32.totalorder %s16, 1
    %p55 = por %p53, %p54
    %p56 = scmp.ne.s32.totalorder %s47, %s48
    %p57 = scmp.eq.s32.totalorder %s16, 0
    %p58 = por %p56, %p57
    %p59 = scmp.ne.s32.totalorder %s47, %s48
    %p60 = scmp.eq.s32.totalorder %s17, 1
    %p61 = por %p59, %p60
    %p63 = scmp.ne.s32.totalorder %s48, %s62
    %p64 = scmp.eq.s32.totalorder %s17, 0
    %p65 = por %p63, %p64
    %s67 = sadd.s32 %s66, 1
    %p70 = scmp.eq.s32.totalorder %s11, 1
    %p71 = scmp.ne.s32.totalorder %s66, %s68
    %p72 = scmp.eq.s32.totalorder %s11, 0
    %p73 = por %p71, %p72
    %p74 = scmp.ne.s32.totalorder %s66, %s68
    %p75 = scmp.eq.s32.totalorder %s16, 1
    %p76 = por %p74, %p75
    %p77 = scmp.ne.s32.totalorder %s68, %s69
    %p78 = scmp.eq.s32.totalorder %s16, 0
    %p79 = por %p77, %p78
    %p80 = scmp.ne.s32.totalorder %s68, %s69
    %p81 = scmp.eq.s32.totalorder %s17, 1
    %p82 = por %p80, %p81
    %p84 = scmp.ne.s32.totalorder %s69, %s83
    %p85 = scmp.eq.s32.totalorder %s17, 0
    %p86 = por %p84, %p85
    %s88 = sadd.s32 %s87, 1
    %p91 = scmp.eq.s32.totalorder %s11, 1
    %p92 = scmp.ne.s32.totalorder %s87, %s89
    %p93 = scmp.eq.s32.totalorder %s11, 0
    %p94 = por %p92, %p93
    %p95 = scmp.ne.s32.totalorder %s87, %s89
    %p96 = scmp.eq.s32.totalorder %s16, 1
    %p97 = por %p95, %p96
    %p98 = scmp.ne.s32.totalorder %s89, %s90
    %p99 = scmp.eq.s32.totalorder %s16, 0
    %p100 = por %p98, %p99
    %p101 = scmp.ne.s32.totalorder %s89, %s90
    %p102 = scmp.eq.s32.totalorder %s17, 1
    %p103 = por %p101, %p102
    %p105 = scmp.ne.s32.totalorder %s90, %s104
    %p106 = scmp.eq.s32.totalorder %s17, 0
    %p107 = por %p105, %p106
    %s109 = sadd.s32 %s108, 1
    %p112 = scmp.eq.s32.totalorder %s11, 1
    %p113 = scmp.ne.s32.totalorder %s108, %s110
    %p114 = scmp.eq.s32.totalorder %s11, 0
    %p115 = por %p113, %p114
    %p116 = scmp.ne.s32.totalorder %s108, %s110
    %p117 = scmp.eq.s32.totalorder %s16, 1
    %p118 = por %p116, %p117
    %p119 = scmp.ne.s32.totalorder %s110, %s111
    %p120 = scmp.eq.s32.totalorder %s16, 0
    %p121 = por %p119, %p120
    %p122 = scmp.ne.s32.totalorder %s110, %s111
    %p123 = scmp.eq.s32.totalorder %s17, 1
    %p124 = por %p122, %p123
    %p126 = scmp.ne.s32.totalorder %s111, %s125
    %p127 = scmp.eq.s32.totalorder %s17, 0
    %p128 = por %p126, %p127
    %s129 = ssub.s32 %s11, %s18
    %p130 = scmp.eq.s32.totalorder %s129, 0
    %s132 = sadd.s32 %s131, 1
    %s133 = scalar_select %p130, %s131, %s132
    %p136 = pneg %p130
    %p137 = scmp.eq.s32.totalorder %s11, 1
    %p138 = por %p136, %p137
    %p139 = scmp.ne.s32.totalorder %s131, %s134
    %p140 = scmp.eq.s32.totalorder %s11, 0
    %p141 = por %p139, %p140
    %p142 = scmp.ne.s32.totalorder %s131, %s134
    %p143 = scmp.eq.s32.totalorder %s16, 1
    %p144 = por %p142, %p143
    %p145 = scmp.ne.s32.totalorder %s134, %s135
    %p146 = scmp.eq.s32.totalorder %s16, 0
    %p147 = por %p145, %p146
    %p148 = scmp.ne.s32.totalorder %s134, %s135
    %p149 = scmp.eq.s32.totalorder %s17, 1
    %p150 = por %p148, %p149
    %p152 = scmp.ne.s32.totalorder %s135, %s151
    %p153 = scmp.eq.s32.totalorder %s17, 0
    %p154 = por %p152, %p153
    %p155 = scmp.le.s32.totalorder 1, %s11
    %p156 = scmp.lt.s32.totalorder %s11, 3
    %p157 = pnand %p155, %p156
    %p158 = pneg %p157
    // Predicated region
    $region9: #{connection_classifier_forward.1} parent=5 // pred_check
      _
    $region10: #{connection_classifier_forward.1} parent=5 // pred_check_branch
      %160 = sbr.rel (%p157) target = $region12
    $region11: #{connection_classifier_forward.1} parent=5 // pred_region
      %s161 = ssub.s32 %s11, 1
      // Predicated region
      $region13: #{connection_classifier_forward.1} parent=11 // pred_check
        %p162 = pneg %p58
      $region14: #{connection_classifier_forward.1} parent=11 // pred_check_branch
        %164 = sbr.rel (%p162) target = $region16
      $region15: #{connection_classifier_forward.1} parent=11 // pred_region
        _
      $region16: #{connection_classifier_forward.1} parent=11 // pred_fallthru
        _
      // Predicated region
      $region17: #{connection_classifier_forward.1} parent=11 // pred_check
        %p165 = pneg %p79
      $region18: #{connection_classifier_forward.1} parent=11 // pred_check_branch
        %167 = sbr.rel (%p165) target = $region20
      $region19: #{connection_classifier_forward.1} parent=11 // pred_region
        _
      $region20: #{connection_classifier_forward.1} parent=11 // pred_fallthru
        _
      // Predicated region
      $region21: #{connection_classifier_forward.1} parent=11 // pred_check
        %p168 = pneg %p100
      $region22: #{connection_classifier_forward.1} parent=11 // pred_check_branch
        %170 = sbr.rel (%p168) target = $region24
      $region23: #{connection_classifier_forward.1} parent=11 // pred_region
        _
      $region24: #{connection_classifier_forward.1} parent=11 // pred_fallthru
        _
      // Predicated region
      $region25: #{connection_classifier_forward.1} parent=11 // pred_check
        %p171 = pneg %p121
      $region26: #{connection_classifier_forward.1} parent=11 // pred_check_branch
        %173 = sbr.rel (%p171) target = $region28
      $region27: #{connection_classifier_forward.1} parent=11 // pred_region
        _
      $region28: #{connection_classifier_forward.1} parent=11 // pred_fallthru
        _
    $region12: #{connection_classifier_forward.1} parent=5 // pred_fallthru
      _
    %p174 = scmp.lt.s32.totalorder %s11, 2
    // Predicated region
    $region29: #{connection_classifier_forward.1} parent=5 // pred_check
      %p175 = pneg %p174
    $region30: #{connection_classifier_forward.1} parent=5 // pred_check_branch
      %177 = sbr.rel (%p175) target = $region32
    $region31: #{connection_classifier_forward.1} parent=5 // pred_region
      // Predicated region
      $region33: #{connection_classifier_forward.1} parent=31 // pred_check
        %p178 = pneg %p31
      $region34: #{connection_classifier_forward.1} parent=31 // pred_check_branch
        %180 = sbr.rel (%p178) target = $region36
      $region35: #{connection_classifier_forward.1} parent=31 // pred_region
        %p181 = scmp.lt.s32.totalorder %s11, 1
        %s182 = scalar_select %p181, %s11, 1
        %s183 = smul.addr %s182, 43
        %s184 = smul.addr %s183, 8
        %s185 = scalar_lea.vmem %s0, %s184
      $region36: #{connection_classifier_forward.1} parent=31 // pred_fallthru
        _
    $region32: #{connection_classifier_forward.1} parent=5 // pred_fallthru
      _
    %p186 = scmp.le.s32.totalorder 1, %s11
    %p187 = scmp.lt.s32.totalorder %s11, 3
    %p188 = pnand %p186, %p187
    %p189 = pneg %p188
    // Predicated region
    $region37: #{connection_classifier_forward.1} parent=5 // pred_check
      _
    $region38: #{connection_classifier_forward.1} parent=5 // pred_check_branch
      %191 = sbr.rel (%p188) target = $region40
    $region39: #{connection_classifier_forward.1} parent=5 // pred_region
      %s192 = ssub.s32 %s11, 1
      %p193 = scmp.lt.s32.totalorder %s16, 1
      %s194 = scalar_select %p193, %s16, 1
      %s195 = smul.addr %s194, 43
      %s196 = smul.addr %s195, 8
      %s197 = scalar_lea.vmem %s0, %s196
      %p198 = pneg %p37
      %p199 = pneg %p34
      %p200 = pneg %p58
      %p201 = pneg %p55
      %p202 = pneg %p79
      %p203 = pneg %p76
      %p204 = pneg %p100
      %p205 = pneg %p97
      %p206 = pneg %p121
      %p207 = pneg %p118
      %p208 = pneg %p147
      %p209 = pneg %p144
      %p210 = scmp.lt.s32.totalorder %s16, 1
      %s211 = scalar_select %p210, %s16, 1
      %s212 = smul.addr %s211, 8
      %s213 = scalar_lea.vmem %s5, %s212
      %p214 = scmp.lt.s32.totalorder %s16, 1
      %s215 = scalar_select %p214, %s16, 1
      %s216 = smul.addr %s215, 43
      %s217 = smul.addr %s216, 8
      %s218 = scalar_lea.vmem %s0, %s217
      %p219 = scmp.lt.s32.totalorder %s16, 1
      %s220 = scalar_select %p219, %s16, 1
      %s221 = smul.addr %s220, 8
      %s222 = scalar_lea.vmem %s5, %s221
      %v224 = vld [vmem:[%s1] sm:$0xff]
      %v225 = vld [vmem:[%s1 + $0x8] sm:$0xff]
      %v226 = vld [vmem:[%s1 + $0x10] sm:$0xff]
      %v227 = vld [vmem:[%s1 + $0x18] sm:$0xff]
      %v228 = vld [vmem:[%s1 + $0x20] sm:$0xff]
      %v229 = vld [vmem:[%s1 + $0x28] sm:$0xff]
      %v230 = vld [vmem:[%s1 + $0x30] sm:$0xff]
      %v231 = vld [vmem:[%s1 + $0x38] sm:$0xff]
      %v232 = vld [vmem:[%s1 + $0x40] sm:$0xff]
      %v233 = vld [vmem:[%s1 + $0x48] sm:$0xff]
      %v234 = vld [vmem:[%s1 + $0x50] sm:$0xff]
      %v235 = vld [vmem:[%s1 + $0x58] sm:$0xff]
      %v236 = vld [vmem:[%s1 + $0x60] sm:$0xff]
      %v237 = vld [vmem:[%s1 + $0x68] sm:$0xff]
      %v238 = vld [vmem:[%s1 + $0x70] sm:$0xff]
      %v239 = vld [vmem:[%s1 + $0x78] sm:$0xff]
      %v240 = vld [vmem:[%s1 + $0x80] sm:$0xff]
      %v241 = vld [vmem:[%s1 + $0x88] sm:$0xff]
      %v242 = vld [vmem:[%s218] sm:$0xff]
      %v243 = vld [vmem:[%s218 + $0x8] sm:$0xff]
      %v244 = vld [vmem:[%s218 + $0x10] sm:$0xff]
      %v245 = vld [vmem:[%s218 + $0x18] sm:$0xff]
      %v246 = vld [vmem:[%s218 + $0x20] sm:$0xff]
      %v247 = vld [vmem:[%s218 + $0x28] sm:$0xff]
      %v248 = vld [vmem:[%s218 + $0x30] sm:$0xff]
      %v249 = vld [vmem:[%s218 + $0x38] sm:$0xff]
      %v250 = vld [vmem:[%s218 + $0x40] sm:$0xff]
      %v251 = vld [vmem:[%s218 + $0x48] sm:$0xff]
      %v252 = vld [vmem:[%s218 + $0x50] sm:$0xff]
      %v253 = vld [vmem:[%s218 + $0x58] sm:$0xff]
      %v254 = vld [vmem:[%s218 + $0x60] sm:$0xff]
      %v255 = vld [vmem:[%s218 + $0x68] sm:$0xff]
      %v256 = vld [vmem:[%s218 + $0x70] sm:$0xff]
      %v257 = vld [vmem:[%s218 + $0x78] sm:$0xff]
      %v258 = vld [vmem:[%s218 + $0x80] sm:$0xff]
      %v259 = vld [vmem:[%s218 + $0x88] sm:$0xff]
      %v260 = vpack.c.bf16 %v243, %v242
      %v261 = vpack.c.bf16 %v245, %v244
      %v262 = vpack.c.bf16 %v247, %v246
      %v263 = vpack.c.bf16 %v249, %v248
      %v264 = vpack.c.bf16 %v251, %v250
      %v265 = vpack.c.bf16 %v253, %v252
      %v266 = vpack.c.bf16 %v255, %v254
      %v267 = vpack.c.bf16 %v257, %v256
      %v268 = vpack.c.bf16 %v259, %v258
      %v269 = vld [vmem:[%s2] sm:$0xf]
      %v270 = vld [vmem:[%s218 + $0x1] sm:$0xff]
      %v271 = vld [vmem:[%s218 + $0x9] sm:$0xff]
      %v272 = vld [vmem:[%s218 + $0x11] sm:$0xff]
      %v273 = vld [vmem:[%s218 + $0x19] sm:$0xff]
      %v274 = vld [vmem:[%s218 + $0x21] sm:$0xff]
      %v275 = vld [vmem:[%s218 + $0x29] sm:$0xff]
      %v276 = vld [vmem:[%s218 + $0x31] sm:$0xff]
      %v277 = vld [vmem:[%s218 + $0x39] sm:$0xff]
      %v278 = vld [vmem:[%s218 + $0x41] sm:$0xff]
      %v279 = vld [vmem:[%s218 + $0x49] sm:$0xff]
      %v280 = vld [vmem:[%s218 + $0x51] sm:$0xff]
      %v281 = vld [vmem:[%s218 + $0x59] sm:$0xff]
      %v282 = vld [vmem:[%s218 + $0x61] sm:$0xff]
      %v283 = vld [vmem:[%s218 + $0x69] sm:$0xff]
      %v284 = vld [vmem:[%s218 + $0x71] sm:$0xff]
      %v285 = vld [vmem:[%s218 + $0x79] sm:$0xff]
      %v286 = vld [vmem:[%s218 + $0x81] sm:$0xff]
      %v287 = vld [vmem:[%s218 + $0x89] sm:$0xff]
      %v288 = vpack.c.bf16 %v271, %v270
      %v289 = vpack.c.bf16 %v273, %v272
      %v290 = vpack.c.bf16 %v275, %v274
      %v291 = vpack.c.bf16 %v277, %v276
      %v292 = vpack.c.bf16 %v279, %v278
      %v293 = vpack.c.bf16 %v281, %v280
      %v294 = vpack.c.bf16 %v283, %v282
      %v295 = vpack.c.bf16 %v285, %v284
      %v296 = vpack.c.bf16 %v287, %v286
      %s297 = scalar_lea.vmem %s2, 4
      %v298 = vld [vmem:[%s297] sm:$0xf]
      %vm299 = vcmask 64512
      %v301 = vsel %vm299, %v288, 0
      %v304 = vsel %vm299, %v289, 0
      %v307 = vsel %vm299, %v290, 0
      %v310 = vsel %vm299, %v291, 0
      %v313 = vsel %vm299, %v292, 0
      %v316 = vsel %vm299, %v293, 0
      %v319 = vsel %vm299, %v294, 0
      %v322 = vsel %vm299, %v295, 0
      %v325 = vsel %vm299, %v296, 0
      %vm327 = vcmask 1043456
      %v329 = vsel %vm327, %v298, 0
      %331 = vmatprep.subr.bf16.mxu0 0
      %332 = vmatpush1.bf16.msra.mxu0 %v329
      %333 = vmatprep.subr.bf16.mxu0 0
      %334 = vmatpush1.bf16.msra.mxu0 0
      %335 = vmatprep.subr.bf16.mxu0 0
      %336 = vmatpush1.bf16.msra.mxu0 0
      %337 = vmatprep.subr.bf16.mxu0 0
      %338 = vmatpush1.bf16.msra.mxu0 0
      %339 = vmatprep.subr.bf16.mxu0 0
      %340 = vmatpush1.bf16.msra.mxu0 0
      %341 = vmatprep.subr.bf16.mxu0 0
      %342 = vmatpush1.bf16.msra.mxu0 0
      %343 = vmatprep.subr.bf16.mxu0 0
      %344 = vmatpush1.bf16.msra.mxu0 0
      %345 = vmatprep.subr.bf16.mxu0 0
      %346 = vmatpush1.bf16.msra.mxu0 0
      %347 = vmatprep.subr.bf16.mxu0 0
      %348 = vmatpush1.bf16.msra.mxu0 0
      %349 = vmatprep.subr.bf16.mxu0 0
      %350 = vmatpush1.bf16.msra.mxu0 0
      %351 = vmatprep.subr.bf16.mxu0 0
      %352 = vmatpush1.bf16.msra.mxu0 0
      %353 = vmatprep.subr.bf16.mxu0 0
      %354 = vmatpush1.bf16.msra.mxu0 0
      %355 = vmatprep.subr.bf16.mxu0 0
      %356 = vmatpush1.bf16.msra.mxu0 0
      %357 = vmatprep.subr.bf16.mxu0 0
      %358 = vmatpush1.bf16.msra.mxu0 0
      %359 = vmatprep.subr.bf16.mxu0 0
      %360 = vmatpush1.bf16.msra.mxu0 0
      %361 = vmatprep.subr.bf16.mxu0 0
      %362 = vmatpush1.bf16.msra.mxu0 0
      %363 = vmatprep.mubr.bf16.mxu0 0
      %364 = vmatmul.mubr.bf16.gmra.mrb[0].mxu0 %v301
      %v365 = vpop.f32.mrb[0].mxu0
      %v366 = vadd.f32 0.0, %v365
      %v367 = vpop.f32.mrb[0].mxu0
      %v368 = vpop.f32.mrb[0].mxu0
      %v369 = vadd.f32 0.0, %v368
      %v370 = vpop.f32.mrb[0].mxu0
      %371 = vmatprep.mubr.bf16.mxu0 0
      %372 = vmatmul.mubr.bf16.gmra.mrb[0].mxu0 %v304
      %v373 = vpop.f32.mrb[0].mxu0
      %v374 = vadd.f32 0.0, %v373
      %v375 = vpop.f32.mrb[0].mxu0
      %v376 = vpop.f32.mrb[0].mxu0
      %v377 = vadd.f32 0.0, %v376
      %v378 = vpop.f32.mrb[0].mxu0
      %379 = vmatprep.mubr.bf16.mxu0 0
      %380 = vmatmul.mubr.bf16.gmra.mrb[0].mxu0 %v307
      %v381 = vpop.f32.mrb[0].mxu0
      %v382 = vadd.f32 0.0, %v381
      %v383 = vpop.f32.mrb[0].mxu0
      %v384 = vpop.f32.mrb[0].mxu0
      %v385 = vadd.f32 0.0, %v384
      %v386 = vpop.f32.mrb[0].mxu0
      %387 = vmatprep.mubr.bf16.mxu0 0
      %388 = vmatmul.mubr.bf16.gmra.mrb[0].mxu0 %v310
      %v389 = vpop.f32.mrb[0].mxu0
      %v390 = vadd.f32 0.0, %v389
      %v391 = vpop.f32.mrb[0].mxu0
      %v392 = vpop.f32.mrb[0].mxu0
      %v393 = vadd.f32 0.0, %v392
      %v394 = vpop.f32.mrb[0].mxu0
      %395 = vmatprep.mubr.bf16.mxu0 0
      %396 = vmatmul.mubr.bf16.gmra.mrb[0].mxu0 %v313
      %v397 = vpop.f32.mrb[0].mxu0
      %v398 = vadd.f32 0.0, %v397
      %v399 = vpop.f32.mrb[0].mxu0
      %v400 = vpop.f32.mrb[0].mxu0
      %v401 = vadd.f32 0.0, %v400
      %v402 = vpop.f32.mrb[0].mxu0
      %403 = vmatprep.mubr.bf16.mxu0 0
      %404 = vmatmul.mubr.bf16.gmra.mrb[0].mxu0 %v316
      %v405 = vpop.f32.mrb[0].mxu0
      %v406 = vadd.f32 0.0, %v405
      %v407 = vpop.f32.mrb[0].mxu0
      %v408 = vpop.f32.mrb[0].mxu0
      %v409 = vadd.f32 0.0, %v408
      %v410 = vpop.f32.mrb[0].mxu0
      %411 = vmatprep.mubr.bf16.mxu0 0
      %412 = vmatmul.mubr.bf16.gmra.mrb[0].mxu0 %v319
      %v413 = vpop.f32.mrb[0].mxu0
      %v414 = vadd.f32 0.0, %v413
      %v415 = vpop.f32.mrb[0].mxu0
      %v416 = vpop.f32.mrb[0].mxu0
      %v417 = vadd.f32 0.0, %v416
      %v418 = vpop.f32.mrb[0].mxu0
      %419 = vmatprep.mubr.bf16.mxu0 0
      %420 = vmatmul.mubr.bf16.gmra.mrb[0].mxu0 %v322
      %v421 = vpop.f32.mrb[0].mxu0
      %v422 = vadd.f32 0.0, %v421
      %v423 = vpop.f32.mrb[0].mxu0
      %v424 = vpop.f32.mrb[0].mxu0
      %v425 = vadd.f32 0.0, %v424
      %v426 = vpop.f32.mrb[0].mxu0
      %427 = vmatprep.mubr.bf16.mxu0 0
      %428 = vmatmul.mubr.bf16.gmra.mrb[0].mxu0 %v325
      %v429 = vpop.f32.mrb[0].mxu0
      %v430 = vadd.f32 0.0, %v429
      %v431 = vpop.f32.mrb[0].mxu0
      %v432 = vpop.f32.mrb[0].mxu0
      %v433 = vadd.f32 0.0, %v432
      %v434 = vpop.f32.mrb[0].mxu0
      %435 = vdwg.mxu0
      %v437 = vsel %vm299, %v260, 0
      %v440 = vsel %vm299, %v261, 0
      %v443 = vsel %vm299, %v262, 0
      %v446 = vsel %vm299, %v263, 0
      %v449 = vsel %vm299, %v264, 0
      %v452 = vsel %vm299, %v265, 0
      %v455 = vsel %vm299, %v266, 0
      %v458 = vsel %vm299, %v267, 0
      %v461 = vsel %vm299, %v268, 0
      %v464 = vsel %vm327, %v269, 0
      %466 = vmatprep.subr.bf16.mxu0 0
      %467 = vmatpush1.bf16.msra.mxu0 %v464
      %468 = vmatprep.subr.bf16.mxu0 0
      %469 = vmatpush1.bf16.msra.mxu0 0
      %470 = vmatprep.subr.bf16.mxu0 0
      %471 = vmatpush1.bf16.msra.mxu0 0
      %472 = vmatprep.subr.bf16.mxu0 0
      %473 = vmatpush1.bf16.msra.mxu0 0
      %474 = vmatprep.subr.bf16.mxu0 0
      %475 = vmatpush1.bf16.msra.mxu0 0
      %476 = vmatprep.subr.bf16.mxu0 0
      %477 = vmatpush1.bf16.msra.mxu0 0
      %478 = vmatprep.subr.bf16.mxu0 0
      %479 = vmatpush1.bf16.msra.mxu0 0
      %480 = vmatprep.subr.bf16.mxu0 0
      %481 = vmatpush1.bf16.msra.mxu0 0
      %482 = vmatprep.subr.bf16.mxu0 0
      %483 = vmatpush1.bf16.msra.mxu0 0
      %484 = vmatprep.subr.bf16.mxu0 0
      %485 = vmatpush1.bf16.msra.mxu0 0
      %486 = vmatprep.subr.bf16.mxu0 0
      %487 = vmatpush1.bf16.msra.mxu0 0
      %488 = vmatprep.subr.bf16.mxu0 0
      %489 = vmatpush1.bf16.msra.mxu0 0
      %490 = vmatprep.subr.bf16.mxu0 0
      %491 = vmatpush1.bf16.msra.mxu0 0
      %492 = vmatprep.subr.bf16.mxu0 0
      %493 = vmatpush1.bf16.msra.mxu0 0
      %494 = vmatprep.subr.bf16.mxu0 0
      %495 = vmatpush1.bf16.msra.mxu0 0
      %496 = vmatprep.subr.bf16.mxu0 0
      %497 = vmatpush1.bf16.msra.mxu0 0
      %498 = vmatprep.mubr.bf16.mxu0 0
      %499 = vmatmul.mubr.bf16.gmra.mrb[0].mxu0 %v437
      %v500 = vpop.f32.mrb[0].mxu0
      %v501 = vadd.f32 %v366, %v500
      %v502 = vpop.f32.mrb[0].mxu0
      %v503 = vpop.f32.mrb[0].mxu0
      %v504 = vadd.f32 %v369, %v503
      %v505 = vpop.f32.mrb[0].mxu0
      %506 = vmatprep.mubr.bf16.mxu0 0
      %507 = vmatmul.mubr.bf16.gmra.mrb[0].mxu0 %v440
      %v508 = vpop.f32.mrb[0].mxu0
      %v509 = vadd.f32 %v374, %v508
      %v510 = vpop.f32.mrb[0].mxu0
      %v511 = vpop.f32.mrb[0].mxu0
      %v512 = vadd.f32 %v377, %v511
      %v513 = vpop.f32.mrb[0].mxu0
      %514 = vmatprep.mubr.bf16.mxu0 0
      %515 = vmatmul.mubr.bf16.gmra.mrb[0].mxu0 %v443
      %v516 = vpop.f32.mrb[0].mxu0
      %v517 = vadd.f32 %v382, %v516
      %v518 = vpop.f32.mrb[0].mxu0
      %v519 = vpop.f32.mrb[0].mxu0
      %v520 = vadd.f32 %v385, %v519
      %v521 = vpop.f32.mrb[0].mxu0
      %522 = vmatprep.mubr.bf16.mxu0 0
      %523 = vmatmul.mubr.bf16.gmra.mrb[0].mxu0 %v446
      %v524 = vpop.f32.mrb[0].mxu0
      %v525 = vadd.f32 %v390, %v524
      %v526 = vpop.f32.mrb[0].mxu0
      %v527 = vpop.f32.mrb[0].mxu0
      %v528 = vadd.f32 %v393, %v527
      %v529 = vpop.f32.mrb[0].mxu0
      %530 = vmatprep.mubr.bf16.mxu0 0
      %531 = vmatmul.mubr.bf16.gmra.mrb[0].mxu0 %v449
      %v532 = vpop.f32.mrb[0].mxu0
      %v533 = vadd.f32 %v398, %v532
      %v534 = vpop.f32.mrb[0].mxu0
      %v535 = vpop.f32.mrb[0].mxu0
      %v536 = vadd.f32 %v401, %v535
      %v537 = vpop.f32.mrb[0].mxu0
      %538 = vmatprep.mubr.bf16.mxu0 0
      %539 = vmatmul.mubr.bf16.gmra.mrb[0].mxu0 %v452
      %v540 = vpop.f32.mrb[0].mxu0
      %v541 = vadd.f32 %v406, %v540
      %v542 = vpop.f32.mrb[0].mxu0
      %v543 = vpop.f32.mrb[0].mxu0
      %v544 = vadd.f32 %v409, %v543
      %v545 = vpop.f32.mrb[0].mxu0
      %546 = vmatprep.mubr.bf16.mxu0 0
      %547 = vmatmul.mubr.bf16.gmra.mrb[0].mxu0 %v455
      %v548 = vpop.f32.mrb[0].mxu0
      %v549 = vadd.f32 %v414, %v548
      %v550 = vpop.f32.mrb[0].mxu0
      %v551 = vpop.f32.mrb[0].mxu0
      %v552 = vadd.f32 %v417, %v551
      %v553 = vpop.f32.mrb[0].mxu0
      %554 = vmatprep.mubr.bf16.mxu0 0
      %555 = vmatmul.mubr.bf16.gmra.mrb[0].mxu0 %v458
      %v556 = vpop.f32.mrb[0].mxu0
      %v557 = vadd.f32 %v422, %v556
      %v558 = vpop.f32.mrb[0].mxu0
      %v559 = vpop.f32.mrb[0].mxu0
      %v560 = vadd.f32 %v425, %v559
      %v561 = vpop.f32.mrb[0].mxu0
      %562 = vmatprep.mubr.bf16.mxu0 0
      %563 = vmatmul.mubr.bf16.gmra.mrb[0].mxu0 %v461
      %v564 = vpop.f32.mrb[0].mxu0
      %v565 = vadd.f32 %v430, %v564
      %v566 = vpop.f32.mrb[0].mxu0
      %v567 = vpop.f32.mrb[0].mxu0
      %v568 = vadd.f32 %v433, %v567
      %v569 = vpop.f32.mrb[0].mxu0
      %570 = vdwg.mxu0
      %v571 = vld [vmem:[%s218 + $0x2] sm:$0xff]
      %v572 = vld [vmem:[%s218 + $0xa] sm:$0xff]
      %v573 = vld [vmem:[%s218 + $0x12] sm:$0xff]
      %v574 = vld [vmem:[%s218 + $0x1a] sm:$0xff]
      %v575 = vld [vmem:[%s218 + $0x22] sm:$0xff]
      %v576 = vld [vmem:[%s218 + $0x2a] sm:$0xff]
      %v577 = vld [vmem:[%s218 + $0x32] sm:$0xff]
      %v578 = vld [vmem:[%s218 + $0x3a] sm:$0xff]
      %v579 = vld [vmem:[%s218 + $0x42] sm:$0xff]
      %v580 = vld [vmem:[%s218 + $0x4a] sm:$0xff]
      %v581 = vld [vmem:[%s218 + $0x52] sm:$0xff]
      %v582 = vld [vmem:[%s218 + $0x5a] sm:$0xff]
      %v583 = vld [vmem:[%s218 + $0x62] sm:$0xff]
      %v584 = vld [vmem:[%s218 + $0x6a] sm:$0xff]
      %v585 = vld [vmem:[%s218 + $0x72] sm:$0xff]
      %v586 = vld [vmem:[%s218 + $0x7a] sm:$0xff]
      %v587 = vld [vmem:[%s218 + $0x82] sm:$0xff]
      %v588 = vld [vmem:[%s218 + $0x8a] sm:$0xff]
      %v589 = vpack.c.bf16 %v572, %v571
      %v590 = vpack.c.bf16 %v574, %v573
      %v591 = vpack.c.bf16 %v576, %v575
      %v592 = vpack.c.bf16 %v578, %v577
      %v593 = vpack.c.bf16 %v580, %v579
      %v594 = vpack.c.bf16 %v582, %v581
      %v595 = vpack.c.bf16 %v584, %v583
      %v596 = vpack.c.bf16 %v586, %v585
      %v597 = vpack.c.bf16 %v588, %v587
      %s598 = scalar_lea.vmem %s2, 8
      %v599 = vld [vmem:[%s598] sm:$0xf]
      %v601 = vsel %vm299, %v589, 0
      %v604 = vsel %vm299, %v590, 0
      %v607 = vsel %vm299, %v591, 0
      %v610 = vsel %vm299, %v592, 0
      %v613 = vsel %vm299, %v593, 0
      %v616 = vsel %vm299, %v594, 0
      %v619 = vsel %vm299, %v595, 0
      %v622 = vsel %vm299, %v596, 0
      %v625 = vsel %vm299, %v597, 0
      %v628 = vsel %vm327, %v599, 0
      %630 = vmatprep.subr.bf16.mxu0 0
      %631 = vmatpush1.bf16.msra.mxu0 %v628
      %632 = vmatprep.subr.bf16.mxu0 0
      %633 = vmatpush1.bf16.msra.mxu0 0
      %634 = vmatprep.subr.bf16.mxu0 0
      %635 = vmatpush1.bf16.msra.mxu0 0
      %636 = vmatprep.subr.bf16.mxu0 0
      %637 = vmatpush1.bf16.msra.mxu0 0
      %638 = vmatprep.subr.bf16.mxu0 0
      %639 = vmatpush1.bf16.msra.mxu0 0
      %640 = vmatprep.subr.bf16.mxu0 0
      %641 = vmatpush1.bf16.msra.mxu0 0
      %642 = vmatprep.subr.bf16.mxu0 0
      %643 = vmatpush1.bf16.msra.mxu0 0
      %644 = vmatprep.subr.bf16.mxu0 0
      %645 = vmatpush1.bf16.msra.mxu0 0
      %646 = vmatprep.subr.bf16.mxu0 0
      %647 = vmatpush1.bf16.msra.mxu0 0
      %648 = vmatprep.subr.bf16.mxu0 0
      %649 = vmatpush1.bf16.msra.mxu0 0
      %650 = vmatprep.subr.bf16.mxu0 0
      %651 = vmatpush1.bf16.msra.mxu0 0
      %652 = vmatprep.subr.bf16.mxu0 0
      %653 = vmatpush1.bf16.msra.mxu0 0
      %654 = vmatprep.subr.bf16.mxu0 0
      %655 = vmatpush1.bf16.msra.mxu0 0
      %656 = vmatprep.subr.bf16.mxu0 0
      %657 = vmatpush1.bf16.msra.mxu0 0
      %658 = vmatprep.subr.bf16.mxu0 0
      %659 = vmatpush1.bf16.msra.mxu0 0
      %660 = vmatprep.subr.bf16.mxu0 0
      %661 = vmatpush1.bf16.msra.mxu0 0
      %662 = vmatprep.mubr.bf16.mxu0 0
      %663 = vmatmul.mubr.bf16.gmra.mrb[0].mxu0 %v601
      %v664 = vpop.f32.mrb[0].mxu0
      %v665 = vadd.f32 0.0, %v664
      %v666 = vpop.f32.mrb[0].mxu0
      %v667 = vpop.f32.mrb[0].mxu0
      %v668 = vadd.f32 0.0, %v667
      %v669 = vpop.f32.mrb[0].mxu0
      %670 = vmatprep.mubr.bf16.mxu0 0
      %671 = vmatmul.mubr.bf16.gmra.mrb[0].mxu0 %v604
      %v672 = vpop.f32.mrb[0].mxu0
      %v673 = vadd.f32 0.0, %v672
      %v674 = vpop.f32.mrb[0].mxu0
      %v675 = vpop.f32.mrb[0].mxu0
      %v676 = vadd.f32 0.0, %v675
      %v677 = vpop.f32.mrb[0].mxu0
      %678 = vmatprep.mubr.bf16.mxu0 0
      %679 = vmatmul.mubr.bf16.gmra.mrb[0].mxu0 %v607
      %v680 = vpop.f32.mrb[0].mxu0
      %v681 = vadd.f32 0.0, %v680
      %v682 = vpop.f32.mrb[0].mxu0
      %v683 = vpop.f32.mrb[0].mxu0
      %v684 = vadd.f32 0.0, %v683
      %v685 = vpop.f32.mrb[0].mxu0
      %686 = vmatprep.mubr.bf16.mxu0 0
      %687 = vmatmul.mubr.bf16.gmra.mrb[0].mxu0 %v610
      %v688 = vpop.f32.mrb[0].mxu0
      %v689 = vadd.f32 0.0, %v688
      %v690 = vpop.f32.mrb[0].mxu0
      %v691 = vpop.f32.mrb[0].mxu0
      %v692 = vadd.f32 0.0, %v691
      %v693 = vpop.f32.mrb[0].mxu0
      %694 = vmatprep.mubr.bf16.mxu0 0
      %695 = vmatmul.mubr.bf16.gmra.mrb[0].mxu0 %v613
      %v696 = vpop.f32.mrb[0].mxu0
      %v697 = vadd.f32 0.0, %v696
      %v698 = vpop.f32.mrb[0].mxu0
      %v699 = vpop.f32.mrb[0].mxu0
      %v700 = vadd.f32 0.0, %v699
      %v701 = vpop.f32.mrb[0].mxu0
      %702 = vmatprep.mubr.bf16.mxu0 0
      %703 = vmatmul.mubr.bf16.gmra.mrb[0].mxu0 %v616
      %v704 = vpop.f32.mrb[0].mxu0
      %v705 = vadd.f32 0.0, %v704
      %v706 = vpop.f32.mrb[0].mxu0
      %v707 = vpop.f32.mrb[0].mxu0
      %v708 = vadd.f32 0.0, %v707
      %v709 = vpop.f32.mrb[0].mxu0
      %710 = vmatprep.mubr.bf16.mxu0 0
      %711 = vmatmul.mubr.bf16.gmra.mrb[0].mxu0 %v619
      %v712 = vpop.f32.mrb[0].mxu0
      %v713 = vadd.f32 0.0, %v712
      %v714 = vpop.f32.mrb[0].mxu0
      %v715 = vpop.f32.mrb[0].mxu0
      %v716 = vadd.f32 0.0, %v715
      %v717 = vpop.f32.mrb[0].mxu0
      %718 = vmatprep.mubr.bf16.mxu0 0
      %719 = vmatmul.mubr.bf16.gmra.mrb[0].mxu0 %v622
      %v720 = vpop.f32.mrb[0].mxu0
      %v721 = vadd.f32 0.0, %v720
      %v722 = vpop.f32.mrb[0].mxu0
      %v723 = vpop.f32.mrb[0].mxu0
      %v724 = vadd.f32 0.0, %v723
      %v725 = vpop.f32.mrb[0].mxu0
      %726 = vmatprep.mubr.bf16.mxu0 0
      %727 = vmatmul.mubr.bf16.gmra.mrb[0].mxu0 %v625
      %v728 = vpop.f32.mrb[0].mxu0
      %v729 = vadd.f32 0.0, %v728
      %v730 = vpop.f32.mrb[0].mxu0
      %v731 = vpop.f32.mrb[0].mxu0
      %v732 = vadd.f32 0.0, %v731
      %v733 = vpop.f32.mrb[0].mxu0
      %734 = vdwg.mxu0
      %v735 = vadd.f32 %v501, %v665
      %v736 = vadd.f32 %v504, %v668
      %v737 = vadd.f32 %v509, %v673
      %v738 = vadd.f32 %v512, %v676
      %v739 = vadd.f32 %v517, %v681
      %v740 = vadd.f32 %v520, %v684
      %v741 = vadd.f32 %v525, %v689
      %v742 = vadd.f32 %v528, %v692
      %v743 = vadd.f32 %v533, %v697
      %v744 = vadd.f32 %v536, %v700
      %v745 = vadd.f32 %v541, %v705
      %v746 = vadd.f32 %v544, %v708
      %v747 = vadd.f32 %v549, %v713
      %v748 = vadd.f32 %v552, %v716
      %v749 = vadd.f32 %v557, %v721
      %v750 = vadd.f32 %v560, %v724
      %v751 = vadd.f32 %v565, %v729
      %v752 = vadd.f32 %v568, %v732
      %v753 = vld [vmem:[%s218 + $0x12] sm:$0xff]
      %v754 = vld [vmem:[%s218 + $0x1a] sm:$0xff]
      %v755 = vld [vmem:[%s218 + $0x22] sm:$0xff]
      %v756 = vld [vmem:[%s218 + $0x2a] sm:$0xff]
      %v757 = vld [vmem:[%s218 + $0x32] sm:$0xff]
      %v758 = vld [vmem:[%s218 + $0x3a] sm:$0xff]
      %v759 = vld [vmem:[%s218 + $0x42] sm:$0xff]
      %v760 = vld [vmem:[%s218 + $0x4a] sm:$0xff]
      %v761 = vld [vmem:[%s218 + $0x52] sm:$0xff]
      %v762 = vld [vmem:[%s218 + $0x5a] sm:$0xff]
      %v763 = vld [vmem:[%s218 + $0x62] sm:$0xff]
      %v764 = vld [vmem:[%s218 + $0x6a] sm:$0xff]
      %v765 = vld [vmem:[%s218 + $0x72] sm:$0xff]
      %v766 = vld [vmem:[%s218 + $0x7a] sm:$0xff]
      %v767 = vld [vmem:[%s218 + $0x82] sm:$0xff]
      %v768 = vld [vmem:[%s218 + $0x8a] sm:$0xff]
      %v769 = vld [vmem:[%s218 + $0x92] sm:$0xff]
      %v770 = vld [vmem:[%s218 + $0x9a] sm:$0xff]
      %v771 = vpack.c.bf16 %v754, %v753
      %v772 = vpack.c.bf16 %v756, %v755
      %v773 = vpack.c.bf16 %v758, %v757
      %v774 = vpack.c.bf16 %v760, %v759
      %v775 = vpack.c.bf16 %v762, %v761
      %v776 = vpack.c.bf16 %v764, %v763
      %v777 = vpack.c.bf16 %v766, %v765
      %v778 = vpack.c.bf16 %v768, %v767
      %v779 = vpack.c.bf16 %v770, %v769
      %s780 = scalar_lea.vmem %s2, 12
      %v781 = vld [vmem:[%s780] sm:$0xf]
      %v783 = vsel %vm299, %v771, 0
      %v786 = vsel %vm299, %v772, 0
      %v789 = vsel %vm299, %v773, 0
      %v792 = vsel %vm299, %v774, 0
      %v795 = vsel %vm299, %v775, 0
      %v798 = vsel %vm299, %v776, 0
      %v801 = vsel %vm299, %v777, 0
      %v804 = vsel %vm299, %v778, 0
      %v807 = vsel %vm299, %v779, 0
      %v810 = vsel %vm327, %v781, 0
      %812 = vmatprep.subr.bf16.mxu0 0
      %813 = vmatpush1.bf16.msra.mxu0 %v810
      %814 = vmatprep.subr.bf16.mxu0 0
      %815 = vmatpush1.bf16.msra.mxu0 0
      %816 = vmatprep.subr.bf16.mxu0 0
      %817 = vmatpush1.bf16.msra.mxu0 0
      %818 = vmatprep.subr.bf16.mxu0 0
      %819 = vmatpush1.bf16.msra.mxu0 0
      %820 = vmatprep.subr.bf16.mxu0 0
      %821 = vmatpush1.bf16.msra.mxu0 0
      %822 = vmatprep.subr.bf16.mxu0 0
      %823 = vmatpush1.bf16.msra.mxu0 0
      %824 = vmatprep.subr.bf16.mxu0 0
      %825 = vmatpush1.bf16.msra.mxu0 0
      %826 = vmatprep.subr.bf16.mxu0 0
      %827 = vmatpush1.bf16.msra.mxu0 0
      %828 = vmatprep.subr.bf16.mxu0 0
      %829 = vmatpush1.bf16.msra.mxu0 0
      %830 = vmatprep.subr.bf16.mxu0 0
      %831 = vmatpush1.bf16.msra.mxu0 0
      %832 = vmatprep.subr.bf16.mxu0 0
      %833 = vmatpush1.bf16.msra.mxu0 0
      %834 = vmatprep.subr.bf16.mxu0 0
      %835 = vmatpush1.bf16.msra.mxu0 0
      %836 = vmatprep.subr.bf16.mxu0 0
      %837 = vmatpush1.bf16.msra.mxu0 0
      %838 = vmatprep.subr.bf16.mxu0 0
      %839 = vmatpush1.bf16.msra.mxu0 0
      %840 = vmatprep.subr.bf16.mxu0 0
      %841 = vmatpush1.bf16.msra.mxu0 0
      %842 = vmatprep.subr.bf16.mxu0 0
      %843 = vmatpush1.bf16.msra.mxu0 0
      %844 = vmatprep.mubr.bf16.mxu0 0
      %845 = vmatmul.mubr.bf16.gmra.mrb[0].mxu0 %v783
      %v846 = vpop.f32.mrb[0].mxu0
      %v847 = vadd.f32 0.0, %v846
      %v848 = vpop.f32.mrb[0].mxu0
      %v849 = vpop.f32.mrb[0].mxu0
      %v850 = vadd.f32 0.0, %v849
      %v851 = vpop.f32.mrb[0].mxu0
      %852 = vmatprep.mubr.bf16.mxu0 0
      %853 = vmatmul.mubr.bf16.gmra.mrb[0].mxu0 %v786
      %v854 = vpop.f32.mrb[0].mxu0
      %v855 = vadd.f32 0.0, %v854
      %v856 = vpop.f32.mrb[0].mxu0
      %v857 = vpop.f32.mrb[0].mxu0
      %v858 = vadd.f32 0.0, %v857
      %v859 = vpop.f32.mrb[0].mxu0
      %860 = vmatprep.mubr.bf16.mxu0 0
      %861 = vmatmul.mubr.bf16.gmra.mrb[0].mxu0 %v789
      %v862 = vpop.f32.mrb[0].mxu0
      %v863 = vadd.f32 0.0, %v862
      %v864 = vpop.f32.mrb[0].mxu0
      %v865 = vpop.f32.mrb[0].mxu0
      %v866 = vadd.f32 0.0, %v865
      %v867 = vpop.f32.mrb[0].mxu0
      %868 = vmatprep.mubr.bf16.mxu0 0
      %869 = vmatmul.mubr.bf16.gmra.mrb[0].mxu0 %v792
      %v870 = vpop.f32.mrb[0].mxu0
      %v871 = vadd.f32 0.0, %v870
      %v872 = vpop.f32.mrb[0].mxu0
      %v873 = vpop.f32.mrb[0].mxu0
      %v874 = vadd.f32 0.0, %v873
      %v875 = vpop.f32.mrb[0].mxu0
      %876 = vmatprep.mubr.bf16.mxu0 0
      %877 = vmatmul.mubr.bf16.gmra.mrb[0].mxu0 %v795
      %v878 = vpop.f32.mrb[0].mxu0
      %v879 = vadd.f32 0.0, %v878
      %v880 = vpop.f32.mrb[0].mxu0
      %v881 = vpop.f32.mrb[0].mxu0
      %v882 = vadd.f32 0.0, %v881
      %v883 = vpop.f32.mrb[0].mxu0
      %884 = vmatprep.mubr.bf16.mxu0 0
      %885 = vmatmul.mubr.bf16.gmra.mrb[0].mxu0 %v798
      %v886 = vpop.f32.mrb[0].mxu0
      %v887 = vadd.f32 0.0, %v886
      %v888 = vpop.f32.mrb[0].mxu0
      %v889 = vpop.f32.mrb[0].mxu0
      %v890 = vadd.f32 0.0, %v889
      %v891 = vpop.f32.mrb[0].mxu0
      %892 = vmatprep.mubr.bf16.mxu0 0
      %893 = vmatmul.mubr.bf16.gmra.mrb[0].mxu0 %v801
      %v894 = vpop.f32.mrb[0].mxu0
      %v895 = vadd.f32 0.0, %v894
      %v896 = vpop.f32.mrb[0].mxu0
      %v897 = vpop.f32.mrb[0].mxu0
      %v898 = vadd.f32 0.0, %v897
      %v899 = vpop.f32.mrb[0].mxu0
      %900 = vmatprep.mubr.bf16.mxu0 0
      %901 = vmatmul.mubr.bf16.gmra.mrb[0].mxu0 %v804
      %v902 = vpop.f32.mrb[0].mxu0
      %v903 = vadd.f32 0.0, %v902
      %v904 = vpop.f32.mrb[0].mxu0
      %v905 = vpop.f32.mrb[0].mxu0
      %v906 = vadd.f32 0.0, %v905
      %v907 = vpop.f32.mrb[0].mxu0
      %908 = vmatprep.mubr.bf16.mxu0 0
      %909 = vmatmul.mubr.bf16.gmra.mrb[0].mxu0 %v807
      %v910 = vpop.f32.mrb[0].mxu0
      %v911 = vadd.f32 0.0, %v910
      %v912 = vpop.f32.mrb[0].mxu0
      %v913 = vpop.f32.mrb[0].mxu0
      %v914 = vadd.f32 0.0, %v913
      %v915 = vpop.f32.mrb[0].mxu0
      %916 = vdwg.mxu0
      %v917 = vadd.f32 %v735, %v847
      %v918 = vadd.f32 %v736, %v850
      %v919 = vadd.f32 %v737, %v855
      %v920 = vadd.f32 %v738, %v858
      %v921 = vadd.f32 %v739, %v863
      %v922 = vadd.f32 %v740, %v866
      %v923 = vadd.f32 %v741, %v871
      %v924 = vadd.f32 %v742, %v874
      %v925 = vadd.f32 %v743, %v879
      %v926 = vadd.f32 %v744, %v882
      %v927 = vadd.f32 %v745, %v887
      %v928 = vadd.f32 %v746, %v890
      %v929 = vadd.f32 %v747, %v895
      %v930 = vadd.f32 %v748, %v898
      %v931 = vadd.f32 %v749, %v903
      %v932 = vadd.f32 %v750, %v906
      %v933 = vadd.f32 %v751, %v911
      %v934 = vadd.f32 %v752, %v914
      %v935 = vld [vmem:[%s218 + $0x13] sm:$0xff]
      %v936 = vld [vmem:[%s218 + $0x1b] sm:$0xff]
      %v937 = vld [vmem:[%s218 + $0x23] sm:$0xff]
      %v938 = vld [vmem:[%s218 + $0x2b] sm:$0xff]
      %v939 = vld [vmem:[%s218 + $0x33] sm:$0xff]
      %v940 = vld [vmem:[%s218 + $0x3b] sm:$0xff]
      %v941 = vld [vmem:[%s218 + $0x43] sm:$0xff]
      %v942 = vld [vmem:[%s218 + $0x4b] sm:$0xff]
      %v943 = vld [vmem:[%s218 + $0x53] sm:$0xff]
      %v944 = vld [vmem:[%s218 + $0x5b] sm:$0xff]
      %v945 = vld [vmem:[%s218 + $0x63] sm:$0xff]
      %v946 = vld [vmem:[%s218 + $0x6b] sm:$0xff]
      %v947 = vld [vmem:[%s218 + $0x73] sm:$0xff]
      %v948 = vld [vmem:[%s218 + $0x7b] sm:$0xff]
      %v949 = vld [vmem:[%s218 + $0x83] sm:$0xff]
      %v950 = vld [vmem:[%s218 + $0x8b] sm:$0xff]
      %v951 = vld [vmem:[%s218 + $0x93] sm:$0xff]
      %v952 = vld [vmem:[%s218 + $0x9b] sm:$0xff]
      %v953 = vpack.c.bf16 %v936, %v935
      %v954 = vpack.c.bf16 %v938, %v937
      %v955 = vpack.c.bf16 %v940, %v939
      %v956 = vpack.c.bf16 %v942, %v941
      %v957 = vpack.c.bf16 %v944, %v943
      %v958 = vpack.c.bf16 %v946, %v945
      %v959 = vpack.c.bf16 %v948, %v947
      %v960 = vpack.c.bf16 %v950, %v949
      %v961 = vpack.c.bf16 %v952, %v951
      %s962 = scalar_lea.vmem %s2, 16
      %v963 = vld [vmem:[%s962] sm:$0xf]
      %v965 = vsel %vm299, %v953, 0
      %v968 = vsel %vm299, %v954, 0
      %v971 = vsel %vm299, %v955, 0
      %v974 = vsel %vm299, %v956, 0
      %v977 = vsel %vm299, %v957, 0
      %v980 = vsel %vm299, %v958, 0
      %v983 = vsel %vm299, %v959, 0
      %v986 = vsel %vm299, %v960, 0
      %v989 = vsel %vm299, %v961, 0
      %v992 = vsel %vm327, %v963, 0
      %994 = vmatprep.subr.bf16.mxu0 0
      %995 = vmatpush1.bf16.msra.mxu0 %v992
      %996 = vmatprep.subr.bf16.mxu0 0
      %997 = vmatpush1.bf16.msra.mxu0 0
      %998 = vmatprep.subr.bf16.mxu0 0
      %999 = vmatpush1.bf16.msra.mxu0 0
      %1000 = vmatprep.subr.bf16.mxu0 0
      %1001 = vmatpush1.bf16.msra.mxu0 0
      %1002 = vmatprep.subr.bf16.mxu0 0
      %1003 = vmatpush1.bf16.msra.mxu0 0
      %1004 = vmatprep.subr.bf16.mxu0 0
      %1005 = vmatpush1.bf16.msra.mxu0 0
      %1006 = vmatprep.subr.bf16.mxu0 0
      %1007 = vmatpush1.bf16.msra.mxu0 0
      %1008 = vmatprep.subr.bf16.mxu0 0
      %1009 = vmatpush1.bf16.msra.mxu0 0
      %1010 = vmatprep.subr.bf16.mxu0 0
      %1011 = vmatpush1.bf16.msra.mxu0 0
      %1012 = vmatprep.subr.bf16.mxu0 0
      %1013 = vmatpush1.bf16.msra.mxu0 0
      %1014 = vmatprep.subr.bf16.mxu0 0
      %1015 = vmatpush1.bf16.msra.mxu0 0
      %1016 = vmatprep.subr.bf16.mxu0 0
      %1017 = vmatpush1.bf16.msra.mxu0 0
      %1018 = vmatprep.subr.bf16.mxu0 0
      %1019 = vmatpush1.bf16.msra.mxu0 0
      %1020 = vmatprep.subr.bf16.mxu0 0
      %1021 = vmatpush1.bf16.msra.mxu0 0
      %1022 = vmatprep.subr.bf16.mxu0 0
      %1023 = vmatpush1.bf16.msra.mxu0 0
      %1024 = vmatprep.subr.bf16.mxu0 0
      %1025 = vmatpush1.bf16.msra.mxu0 0
      %1026 = vmatprep.mubr.bf16.mxu0 0
      %1027 = vmatmul.mubr.bf16.gmra.mrb[0].mxu0 %v965
      %v1028 = vpop.f32.mrb[0].mxu0
      %v1029 = vadd.f32 0.0, %v1028
      %v1030 = vpop.f32.mrb[0].mxu0
      %v1031 = vpop.f32.mrb[0].mxu0
      %v1032 = vadd.f32 0.0, %v1031
      %v1033 = vpop.f32.mrb[0].mxu0
      %1034 = vmatprep.mubr.bf16.mxu0 0
      %1035 = vmatmul.mubr.bf16.gmra.mrb[0].mxu0 %v968
      %v1036 = vpop.f32.mrb[0].mxu0
      %v1037 = vadd.f32 0.0, %v1036
      %v1038 = vpop.f32.mrb[0].mxu0
      %v1039 = vpop.f32.mrb[0].mxu0
      %v1040 = vadd.f32 0.0, %v1039
      %v1041 = vpop.f32.mrb[0].mxu0
      %1042 = vmatprep.mubr.bf16.mxu0 0
      %1043 = vmatmul.mubr.bf16.gmra.mrb[0].mxu0 %v971
      %v1044 = vpop.f32.mrb[0].mxu0
      %v1045 = vadd.f32 0.0, %v1044
      %v1046 = vpop.f32.mrb[0].mxu0
      %v1047 = vpop.f32.mrb[0].mxu0
      %v1048 = vadd.f32 0.0, %v1047
      %v1049 = vpop.f32.mrb[0].mxu0
      %1050 = vmatprep.mubr.bf16.mxu0 0
      %1051 = vmatmul.mubr.bf16.gmra.mrb[0].mxu0 %v974
      %v1052 = vpop.f32.mrb[0].mxu0
      %v1053 = vadd.f32 0.0, %v1052
      %v1054 = vpop.f32.mrb[0].mxu0
      %v1055 = vpop.f32.mrb[0].mxu0
      %v1056 = vadd.f32 0.0, %v1055
      %v1057 = vpop.f32.mrb[0].mxu0
      %1058 = vmatprep.mubr.bf16.mxu0 0
      %1059 = vmatmul.mubr.bf16.gmra.mrb[0].mxu0 %v977
      %v1060 = vpop.f32.mrb[0].mxu0
      %v1061 = vadd.f32 0.0, %v1060
      %v1062 = vpop.f32.mrb[0].mxu0
      %v1063 = vpop.f32.mrb[0].mxu0
      %v1064 = vadd.f32 0.0, %v1063
      %v1065 = vpop.f32.mrb[0].mxu0
      %1066 = vmatprep.mubr.bf16.mxu0 0
      %1067 = vmatmul.mubr.bf16.gmra.mrb[0].mxu0 %v980
      %v1068 = vpop.f32.mrb[0].mxu0
      %v1069 = vadd.f32 0.0, %v1068
      %v1070 = vpop.f32.mrb[0].mxu0
      %v1071 = vpop.f32.mrb[0].mxu0
      %v1072 = vadd.f32 0.0, %v1071
      %v1073 = vpop.f32.mrb[0].mxu0
      %1074 = vmatprep.mubr.bf16.mxu0 0
      %1075 = vmatmul.mubr.bf16.gmra.mrb[0].mxu0 %v983
      %v1076 = vpop.f32.mrb[0].mxu0
      %v1077 = vadd.f32 0.0, %v1076
      %v1078 = vpop.f32.mrb[0].mxu0
      %v1079 = vpop.f32.mrb[0].mxu0
      %v1080 = vadd.f32 0.0, %v1079
      %v1081 = vpop.f32.mrb[0].mxu0
      %1082 = vmatprep.mubr.bf16.mxu0 0
      %1083 = vmatmul.mubr.bf16.gmra.mrb[0].mxu0 %v986
      %v1084 = vpop.f32.mrb[0].mxu0
      %v1085 = vadd.f32 0.0, %v1084
      %v1086 = vpop.f32.mrb[0].mxu0
      %v1087 = vpop.f32.mrb[0].mxu0
      %v1088 = vadd.f32 0.0, %v1087
      %v1089 = vpop.f32.mrb[0].mxu0
      %1090 = vmatprep.mubr.bf16.mxu0 0
      %1091 = vmatmul.mubr.bf16.gmra.mrb[0].mxu0 %v989
      %v1092 = vpop.f32.mrb[0].mxu0
      %v1093 = vadd.f32 0.0, %v1092
      %v1094 = vpop.f32.mrb[0].mxu0
      %v1095 = vpop.f32.mrb[0].mxu0
      %v1096 = vadd.f32 0.0, %v1095
      %v1097 = vpop.f32.mrb[0].mxu0
      %1098 = vdwg.mxu0
      %v1099 = vadd.f32 %v917, %v1029
      %v1100 = vadd.f32 %v918, %v1032
      %v1101 = vadd.f32 %v919, %v1037
      %v1102 = vadd.f32 %v920, %v1040
      %v1103 = vadd.f32 %v921, %v1045
      %v1104 = vadd.f32 %v922, %v1048
      %v1105 = vadd.f32 %v923, %v1053
      %v1106 = vadd.f32 %v924, %v1056
      %v1107 = vadd.f32 %v925, %v1061
      %v1108 = vadd.f32 %v926, %v1064
      %v1109 = vadd.f32 %v927, %v1069
      %v1110 = vadd.f32 %v928, %v1072
      %v1111 = vadd.f32 %v929, %v1077
      %v1112 = vadd.f32 %v930, %v1080
      %v1113 = vadd.f32 %v931, %v1085
      %v1114 = vadd.f32 %v932, %v1088
      %v1115 = vadd.f32 %v933, %v1093
      %v1116 = vadd.f32 %v934, %v1096
      %v1117 = vld [vmem:[%s218 + $0x14] sm:$0xff]
      %v1118 = vld [vmem:[%s218 + $0x1c] sm:$0xff]
      %v1119 = vld [vmem:[%s218 + $0x24] sm:$0xff]
      %v1120 = vld [vmem:[%s218 + $0x2c] sm:$0xff]
      %v1121 = vld [vmem:[%s218 + $0x34] sm:$0xff]
      %v1122 = vld [vmem:[%s218 + $0x3c] sm:$0xff]
      %v1123 = vld [vmem:[%s218 + $0x44] sm:$0xff]
      %v1124 = vld [vmem:[%s218 + $0x4c] sm:$0xff]
      %v1125 = vld [vmem:[%s218 + $0x54] sm:$0xff]
      %v1126 = vld [vmem:[%s218 + $0x5c] sm:$0xff]
      %v1127 = vld [vmem:[%s218 + $0x64] sm:$0xff]
      %v1128 = vld [vmem:[%s218 + $0x6c] sm:$0xff]
      %v1129 = vld [vmem:[%s218 + $0x74] sm:$0xff]
      %v1130 = vld [vmem:[%s218 + $0x7c] sm:$0xff]
      %v1131 = vld [vmem:[%s218 + $0x84] sm:$0xff]
      %v1132 = vld [vmem:[%s218 + $0x8c] sm:$0xff]
      %v1133 = vld [vmem:[%s218 + $0x94] sm:$0xff]
      %v1134 = vld [vmem:[%s218 + $0x9c] sm:$0xff]
      %v1135 = vpack.c.bf16 %v1118, %v1117
      %v1136 = vpack.c.bf16 %v1120, %v1119
      %v1137 = vpack.c.bf16 %v1122, %v1121
      %v1138 = vpack.c.bf16 %v1124, %v1123
      %v1139 = vpack.c.bf16 %v1126, %v1125
      %v1140 = vpack.c.bf16 %v1128, %v1127
      %v1141 = vpack.c.bf16 %v1130, %v1129
      %v1142 = vpack.c.bf16 %v1132, %v1131
      %v1143 = vpack.c.bf16 %v1134, %v1133
      %s1144 = scalar_lea.vmem %s2, 20
      %v1145 = vld [vmem:[%s1144] sm:$0xf]
      %v1147 = vsel %vm299, %v1135, 0
      %v1150 = vsel %vm299, %v1136, 0
      %v1153 = vsel %vm299, %v1137, 0
      %v1156 = vsel %vm299, %v1138, 0
      %v1159 = vsel %vm299, %v1139, 0
      %v1162 = vsel %vm299, %v1140, 0
      %v1165 = vsel %vm299, %v1141, 0
      %v1168 = vsel %vm299, %v1142, 0
      %v1171 = vsel %vm299, %v1143, 0
      %v1174 = vsel %vm327, %v1145, 0
      %1176 = vmatprep.subr.bf16.mxu0 0
      %1177 = vmatpush1.bf16.msra.mxu0 %v1174
      %1178 = vmatprep.subr.bf16.mxu0 0
      %1179 = vmatpush1.bf16.msra.mxu0 0
      %1180 = vmatprep.subr.bf16.mxu0 0
      %1181 = vmatpush1.bf16.msra.mxu0 0
      %1182 = vmatprep.subr.bf16.mxu0 0
      %1183 = vmatpush1.bf16.msra.mxu0 0
      %1184 = vmatprep.subr.bf16.mxu0 0
      %1185 = vmatpush1.bf16.msra.mxu0 0
      %1186 = vmatprep.subr.bf16.mxu0 0
      %1187 = vmatpush1.bf16.msra.mxu0 0
      %1188 = vmatprep.subr.bf16.mxu0 0
      %1189 = vmatpush1.bf16.msra.mxu0 0
      %1190 = vmatprep.subr.bf16.mxu0 0
      %1191 = vmatpush1.bf16.msra.mxu0 0
      %1192 = vmatprep.subr.bf16.mxu0 0
      %1193 = vmatpush1.bf16.msra.mxu0 0
      %1194 = vmatprep.subr.bf16.mxu0 0
      %1195 = vmatpush1.bf16.msra.mxu0 0
      %1196 = vmatprep.subr.bf16.mxu0 0
      %1197 = vmatpush1.bf16.msra.mxu0 0
      %1198 = vmatprep.subr.bf16.mxu0 0
      %1199 = vmatpush1.bf16.msra.mxu0 0
      %1200 = vmatprep.subr.bf16.mxu0 0
      %1201 = vmatpush1.bf16.msra.mxu0 0
      %1202 = vmatprep.subr.bf16.mxu0 0
      %1203 = vmatpush1.bf16.msra.mxu0 0
      %1204 = vmatprep.subr.bf16.mxu0 0
      %1205 = vmatpush1.bf16.msra.mxu0 0
      %1206 = vmatprep.subr.bf16.mxu0 0
      %1207 = vmatpush1.bf16.msra.mxu0 0
      %1208 = vmatprep.mubr.bf16.mxu0 0
      %1209 = vmatmul.mubr.bf16.gmra.mrb[0].mxu0 %v1147
      %v1210 = vpop.f32.mrb[0].mxu0
      %v1211 = vadd.f32 0.0, %v1210
      %v1212 = vpop.f32.mrb[0].mxu0
      %v1213 = vpop.f32.mrb[0].mxu0
      %v1214 = vadd.f32 0.0, %v1213
      %v1215 = vpop.f32.mrb[0].mxu0
      %1216 = vmatprep.mubr.bf16.mxu0 0
      %1217 = vmatmul.mubr.bf16.gmra.mrb[0].mxu0 %v1150
      %v1218 = vpop.f32.mrb[0].mxu0
      %v1219 = vadd.f32 0.0, %v1218
      %v1220 = vpop.f32.mrb[0].mxu0
      %v1221 = vpop.f32.mrb[0].mxu0
      %v1222 = vadd.f32 0.0, %v1221
      %v1223 = vpop.f32.mrb[0].mxu0
      %1224 = vmatprep.mubr.bf16.mxu0 0
      %1225 = vmatmul.mubr.bf16.gmra.mrb[0].mxu0 %v1153
      %v1226 = vpop.f32.mrb[0].mxu0
      %v1227 = vadd.f32 0.0, %v1226
      %v1228 = vpop.f32.mrb[0].mxu0
      %v1229 = vpop.f32.mrb[0].mxu0
      %v1230 = vadd.f32 0.0, %v1229
      %v1231 = vpop.f32.mrb[0].mxu0
      %1232 = vmatprep.mubr.bf16.mxu0 0
      %1233 = vmatmul.mubr.bf16.gmra.mrb[0].mxu0 %v1156
      %v1234 = vpop.f32.mrb[0].mxu0
      %v1235 = vadd.f32 0.0, %v1234
      %v1236 = vpop.f32.mrb[0].mxu0
      %v1237 = vpop.f32.mrb[0].mxu0
      %v1238 = vadd.f32 0.0, %v1237
      %v1239 = vpop.f32.mrb[0].mxu0
      %1240 = vmatprep.mubr.bf16.mxu0 0
      %1241 = vmatmul.mubr.bf16.gmra.mrb[0].mxu0 %v1159
      %v1242 = vpop.f32.mrb[0].mxu0
      %v1243 = vadd.f32 0.0, %v1242
      %v1244 = vpop.f32.mrb[0].mxu0
      %v1245 = vpop.f32.mrb[0].mxu0
      %v1246 = vadd.f32 0.0, %v1245
      %v1247 = vpop.f32.mrb[0].mxu0
      %1248 = vmatprep.mubr.bf16.mxu0 0
      %1249 = vmatmul.mubr.bf16.gmra.mrb[0].mxu0 %v1162
      %v1250 = vpop.f32.mrb[0].mxu0
      %v1251 = vadd.f32 0.0, %v1250
      %v1252 = vpop.f32.mrb[0].mxu0
      %v1253 = vpop.f32.mrb[0].mxu0
      %v1254 = vadd.f32 0.0, %v1253
      %v1255 = vpop.f32.mrb[0].mxu0
      %1256 = vmatprep.mubr.bf16.mxu0 0
      %1257 = vmatmul.mubr.bf16.gmra.mrb[0].mxu0 %v1165
      %v1258 = vpop.f32.mrb[0].mxu0
      %v1259 = vadd.f32 0.0, %v1258
      %v1260 = vpop.f32.mrb[0].mxu0
      %v1261 = vpop.f32.mrb[0].mxu0
      %v1262 = vadd.f32 0.0, %v1261
      %v1263 = vpop.f32.mrb[0].mxu0
      %1264 = vmatprep.mubr.bf16.mxu0 0
      %1265 = vmatmul.mubr.bf16.gmra.mrb[0].mxu0 %v1168
      %v1266 = vpop.f32.mrb[0].mxu0
      %v1267 = vadd.f32 0.0, %v1266
      %v1268 = vpop.f32.mrb[0].mxu0
      %v1269 = vpop.f32.mrb[0].mxu0
      %v1270 = vadd.f32 0.0, %v1269
      %v1271 = vpop.f32.mrb[0].mxu0
      %1272 = vmatprep.mubr.bf16.mxu0 0
      %1273 = vmatmul.mubr.bf16.gmra.mrb[0].mxu0 %v1171
      %v1274 = vpop.f32.mrb[0].mxu0
      %v1275 = vadd.f32 0.0, %v1274
      %v1276 = vpop.f32.mrb[0].mxu0
      %v1277 = vpop.f32.mrb[0].mxu0
      %v1278 = vadd.f32 0.0, %v1277
      %v1279 = vpop.f32.mrb[0].mxu0
      %1280 = vdwg.mxu0
      %v1281 = vadd.f32 %v1099, %v1211
      %v1282 = vadd.f32 %v1100, %v1214
      %v1283 = vadd.f32 %v1101, %v1219
      %v1284 = vadd.f32 %v1102, %v1222
      %v1285 = vadd.f32 %v1103, %v1227
      %v1286 = vadd.f32 %v1104, %v1230
      %v1287 = vadd.f32 %v1105, %v1235
      %v1288 = vadd.f32 %v1106, %v1238
      %v1289 = vadd.f32 %v1107, %v1243
      %v1290 = vadd.f32 %v1108, %v1246
      %v1291 = vadd.f32 %v1109, %v1251
      %v1292 = vadd.f32 %v1110, %v1254
      %v1293 = vadd.f32 %v1111, %v1259
      %v1294 = vadd.f32 %v1112, %v1262
      %v1295 = vadd.f32 %v1113, %v1267
      %v1296 = vadd.f32 %v1114, %v1270
      %v1297 = vadd.f32 %v1115, %v1275
      %v1298 = vadd.f32 %v1116, %v1278
      %v1299 = vld [vmem:[%s218 + $0x24] sm:$0xff]
      %v1300 = vld [vmem:[%s218 + $0x2c] sm:$0xff]
      %v1301 = vld [vmem:[%s218 + $0x34] sm:$0xff]
      %v1302 = vld [vmem:[%s218 + $0x3c] sm:$0xff]
      %v1303 = vld [vmem:[%s218 + $0x44] sm:$0xff]
      %v1304 = vld [vmem:[%s218 + $0x4c] sm:$0xff]
      %v1305 = vld [vmem:[%s218 + $0x54] sm:$0xff]
      %v1306 = vld [vmem:[%s218 + $0x5c] sm:$0xff]
      %v1307 = vld [vmem:[%s218 + $0x64] sm:$0xff]
      %v1308 = vld [vmem:[%s218 + $0x6c] sm:$0xff]
      %v1309 = vld [vmem:[%s218 + $0x74] sm:$0xff]
      %v1310 = vld [vmem:[%s218 + $0x7c] sm:$0xff]
      %v1311 = vld [vmem:[%s218 + $0x84] sm:$0xff]
      %v1312 = vld [vmem:[%s218 + $0x8c] sm:$0xff]
      %v1313 = vld [vmem:[%s218 + $0x94] sm:$0xff]
      %v1314 = vld [vmem:[%s218 + $0x9c] sm:$0xff]
      %v1315 = vld [vmem:[%s218 + $0xa4] sm:$0xff]
      %v1316 = vld [vmem:[%s218 + $0xac] sm:$0xff]
      %v1317 = vpack.c.bf16 %v1300, %v1299
      %v1318 = vpack.c.bf16 %v1302, %v1301
      %v1319 = vpack.c.bf16 %v1304, %v1303
      %v1320 = vpack.c.bf16 %v1306, %v1305
      %v1321 = vpack.c.bf16 %v1308, %v1307
      %v1322 = vpack.c.bf16 %v1310, %v1309
      %v1323 = vpack.c.bf16 %v1312, %v1311
      %v1324 = vpack.c.bf16 %v1314, %v1313
      %v1325 = vpack.c.bf16 %v1316, %v1315
      %s1326 = scalar_lea.vmem %s2, 24
      %v1327 = vld [vmem:[%s1326] sm:$0xf]
      %v1329 = vsel %vm299, %v1317, 0
      %v1332 = vsel %vm299, %v1318, 0
      %v1335 = vsel %vm299, %v1319, 0
      %v1338 = vsel %vm299, %v1320, 0
      %v1341 = vsel %vm299, %v1321, 0
      %v1344 = vsel %vm299, %v1322, 0
      %v1347 = vsel %vm299, %v1323, 0
      %v1350 = vsel %vm299, %v1324, 0
      %v1353 = vsel %vm299, %v1325, 0
      %v1356 = vsel %vm327, %v1327, 0
      %1358 = vmatprep.subr.bf16.mxu0 0
      %1359 = vmatpush1.bf16.msra.mxu0 %v1356
      %1360 = vmatprep.subr.bf16.mxu0 0
      %1361 = vmatpush1.bf16.msra.mxu0 0
      %1362 = vmatprep.subr.bf16.mxu0 0
      %1363 = vmatpush1.bf16.msra.mxu0 0
      %1364 = vmatprep.subr.bf16.mxu0 0
      %1365 = vmatpush1.bf16.msra.mxu0 0
      %1366 = vmatprep.subr.bf16.mxu0 0
      %1367 = vmatpush1.bf16.msra.mxu0 0
      %1368 = vmatprep.subr.bf16.mxu0 0
      %1369 = vmatpush1.bf16.msra.mxu0 0
      %1370 = vmatprep.subr.bf16.mxu0 0
      %1371 = vmatpush1.bf16.msra.mxu0 0
      %1372 = vmatprep.subr.bf16.mxu0 0
      %1373 = vmatpush1.bf16.msra.mxu0 0
      %1374 = vmatprep.subr.bf16.mxu0 0
      %1375 = vmatpush1.bf16.msra.mxu0 0
      %1376 = vmatprep.subr.bf16.mxu0 0
      %1377 = vmatpush1.bf16.msra.mxu0 0
      %1378 = vmatprep.subr.bf16.mxu0 0
      %1379 = vmatpush1.bf16.msra.mxu0 0
      %1380 = vmatprep.subr.bf16.mxu0 0
      %1381 = vmatpush1.bf16.msra.mxu0 0
      %1382 = vmatprep.subr.bf16.mxu0 0
      %1383 = vmatpush1.bf16.msra.mxu0 0
      %1384 = vmatprep.subr.bf16.mxu0 0
      %1385 = vmatpush1.bf16.msra.mxu0 0
      %1386 = vmatprep.subr.bf16.mxu0 0
      %1387 = vmatpush1.bf16.msra.mxu0 0
      %1388 = vmatprep.subr.bf16.mxu0 0
      %1389 = vmatpush1.bf16.msra.mxu0 0
      %1390 = vmatprep.mubr.bf16.mxu0 0
      %1391 = vmatmul.mubr.bf16.gmra.mrb[0].mxu0 %v1329
      %v1392 = vpop.f32.mrb[0].mxu0
      %v1393 = vadd.f32 0.0, %v1392
      %v1394 = vpop.f32.mrb[0].mxu0
      %v1395 = vpop.f32.mrb[0].mxu0
      %v1396 = vadd.f32 0.0, %v1395
      %v1397 = vpop.f32.mrb[0].mxu0
      %1398 = vmatprep.mubr.bf16.mxu0 0
      %1399 = vmatmul.mubr.bf16.gmra.mrb[0].mxu0 %v1332
      %v1400 = vpop.f32.mrb[0].mxu0
      %v1401 = vadd.f32 0.0, %v1400
      %v1402 = vpop.f32.mrb[0].mxu0
      %v1403 = vpop.f32.mrb[0].mxu0
      %v1404 = vadd.f32 0.0, %v1403
      %v1405 = vpop.f32.mrb[0].mxu0
      %1406 = vmatprep.mubr.bf16.mxu0 0
      %1407 = vmatmul.mubr.bf16.gmra.mrb[0].mxu0 %v1335
      %v1408 = vpop.f32.mrb[0].mxu0
      %v1409 = vadd.f32 0.0, %v1408
      %v1410 = vpop.f32.mrb[0].mxu0
      %v1411 = vpop.f32.mrb[0].mxu0
      %v1412 = vadd.f32 0.0, %v1411
      %v1413 = vpop.f32.mrb[0].mxu0
      %1414 = vmatprep.mubr.bf16.mxu0 0
      %1415 = vmatmul.mubr.bf16.gmra.mrb[0].mxu0 %v1338
      %v1416 = vpop.f32.mrb[0].mxu0
      %v1417 = vadd.f32 0.0, %v1416
      %v1418 = vpop.f32.mrb[0].mxu0
      %v1419 = vpop.f32.mrb[0].mxu0
      %v1420 = vadd.f32 0.0, %v1419
      %v1421 = vpop.f32.mrb[0].mxu0
      %1422 = vmatprep.mubr.bf16.mxu0 0
      %1423 = vmatmul.mubr.bf16.gmra.mrb[0].mxu0 %v1341
      %v1424 = vpop.f32.mrb[0].mxu0
      %v1425 = vadd.f32 0.0, %v1424
      %v1426 = vpop.f32.mrb[0].mxu0
      %v1427 = vpop.f32.mrb[0].mxu0
      %v1428 = vadd.f32 0.0, %v1427
      %v1429 = vpop.f32.mrb[0].mxu0
      %1430 = vmatprep.mubr.bf16.mxu0 0
      %1431 = vmatmul.mubr.bf16.gmra.mrb[0].mxu0 %v1344
      %v1432 = vpop.f32.mrb[0].mxu0
      %v1433 = vadd.f32 0.0, %v1432
      %v1434 = vpop.f32.mrb[0].mxu0
      %v1435 = vpop.f32.mrb[0].mxu0
      %v1436 = vadd.f32 0.0, %v1435
      %v1437 = vpop.f32.mrb[0].mxu0
      %1438 = vmatprep.mubr.bf16.mxu0 0
      %1439 = vmatmul.mubr.bf16.gmra.mrb[0].mxu0 %v1347
      %v1440 = vpop.f32.mrb[0].mxu0
      %v1441 = vadd.f32 0.0, %v1440
      %v1442 = vpop.f32.mrb[0].mxu0
      %v1443 = vpop.f32.mrb[0].mxu0
      %v1444 = vadd.f32 0.0, %v1443
      %v1445 = vpop.f32.mrb[0].mxu0
      %1446 = vmatprep.mubr.bf16.mxu0 0
      %1447 = vmatmul.mubr.bf16.gmra.mrb[0].mxu0 %v1350
      %v1448 = vpop.f32.mrb[0].mxu0
      %v1449 = vadd.f32 0.0, %v1448
      %v1450 = vpop.f32.mrb[0].mxu0
      %v1451 = vpop.f32.mrb[0].mxu0
      %v1452 = vadd.f32 0.0, %v1451
      %v1453 = vpop.f32.mrb[0].mxu0
      %1454 = vmatprep.mubr.bf16.mxu0 0
      %1455 = vmatmul.mubr.bf16.gmra.mrb[0].mxu0 %v1353
      %v1456 = vpop.f32.mrb[0].mxu0
      %v1457 = vadd.f32 0.0, %v1456
      %v1458 = vpop.f32.mrb[0].mxu0
      %v1459 = vpop.f32.mrb[0].mxu0
      %v1460 = vadd.f32 0.0, %v1459
      %v1461 = vpop.f32.mrb[0].mxu0
      %1462 = vdwg.mxu0
      %v1463 = vadd.f32 %v1281, %v1393
      %v1464 = vadd.f32 %v1282, %v1396
      %v1465 = vadd.f32 %v1283, %v1401
      %v1466 = vadd.f32 %v1284, %v1404
      %v1467 = vadd.f32 %v1285, %v1409
      %v1468 = vadd.f32 %v1286, %v1412
      %v1469 = vadd.f32 %v1287, %v1417
      %v1470 = vadd.f32 %v1288, %v1420
      %v1471 = vadd.f32 %v1289, %v1425
      %v1472 = vadd.f32 %v1290, %v1428
      %v1473 = vadd.f32 %v1291, %v1433
      %v1474 = vadd.f32 %v1292, %v1436
      %v1475 = vadd.f32 %v1293, %v1441
      %v1476 = vadd.f32 %v1294, %v1444
      %v1477 = vadd.f32 %v1295, %v1449
      %v1478 = vadd.f32 %v1296, %v1452
      %v1479 = vadd.f32 %v1297, %v1457
      %v1480 = vadd.f32 %v1298, %v1460
      %v1481 = vld [vmem:[%s218 + $0x25] sm:$0xff]
      %v1482 = vld [vmem:[%s218 + $0x2d] sm:$0xff]
      %v1483 = vld [vmem:[%s218 + $0x35] sm:$0xff]
      %v1484 = vld [vmem:[%s218 + $0x3d] sm:$0xff]
      %v1485 = vld [vmem:[%s218 + $0x45] sm:$0xff]
      %v1486 = vld [vmem:[%s218 + $0x4d] sm:$0xff]
      %v1487 = vld [vmem:[%s218 + $0x55] sm:$0xff]
      %v1488 = vld [vmem:[%s218 + $0x5d] sm:$0xff]
      %v1489 = vld [vmem:[%s218 + $0x65] sm:$0xff]
      %v1490 = vld [vmem:[%s218 + $0x6d] sm:$0xff]
      %v1491 = vld [vmem:[%s218 + $0x75] sm:$0xff]
      %v1492 = vld [vmem:[%s218 + $0x7d] sm:$0xff]
      %v1493 = vld [vmem:[%s218 + $0x85] sm:$0xff]
      %v1494 = vld [vmem:[%s218 + $0x8d] sm:$0xff]
      %v1495 = vld [vmem:[%s218 + $0x95] sm:$0xff]
      %v1496 = vld [vmem:[%s218 + $0x9d] sm:$0xff]
      %v1497 = vld [vmem:[%s218 + $0xa5] sm:$0xff]
      %v1498 = vld [vmem:[%s218 + $0xad] sm:$0xff]
      %v1499 = vpack.c.bf16 %v1482, %v1481
      %v1500 = vpack.c.bf16 %v1484, %v1483
      %v1501 = vpack.c.bf16 %v1486, %v1485
      %v1502 = vpack.c.bf16 %v1488, %v1487
      %v1503 = vpack.c.bf16 %v1490, %v1489
      %v1504 = vpack.c.bf16 %v1492, %v1491
      %v1505 = vpack.c.bf16 %v1494, %v1493
      %v1506 = vpack.c.bf16 %v1496, %v1495
      %v1507 = vpack.c.bf16 %v1498, %v1497
      %s1508 = scalar_lea.vmem %s2, 28
      %v1509 = vld [vmem:[%s1508] sm:$0xf]
      %v1511 = vsel %vm299, %v1499, 0
      %v1514 = vsel %vm299, %v1500, 0
      %v1517 = vsel %vm299, %v1501, 0
      %v1520 = vsel %vm299, %v1502, 0
      %v1523 = vsel %vm299, %v1503, 0
      %v1526 = vsel %vm299, %v1504, 0
      %v1529 = vsel %vm299, %v1505, 0
      %v1532 = vsel %vm299, %v1506, 0
      %v1535 = vsel %vm299, %v1507, 0
      %v1538 = vsel %vm327, %v1509, 0
      %1540 = vmatprep.subr.bf16.mxu0 0
      %1541 = vmatpush1.bf16.msra.mxu0 %v1538
      %1542 = vmatprep.subr.bf16.mxu0 0
      %1543 = vmatpush1.bf16.msra.mxu0 0
      %1544 = vmatprep.subr.bf16.mxu0 0
      %1545 = vmatpush1.bf16.msra.mxu0 0
      %1546 = vmatprep.subr.bf16.mxu0 0
      %1547 = vmatpush1.bf16.msra.mxu0 0
      %1548 = vmatprep.subr.bf16.mxu0 0
      %1549 = vmatpush1.bf16.msra.mxu0 0
      %1550 = vmatprep.subr.bf16.mxu0 0
      %1551 = vmatpush1.bf16.msra.mxu0 0
      %1552 = vmatprep.subr.bf16.mxu0 0
      %1553 = vmatpush1.bf16.msra.mxu0 0
      %1554 = vmatprep.subr.bf16.mxu0 0
      %1555 = vmatpush1.bf16.msra.mxu0 0
      %1556 = vmatprep.subr.bf16.mxu0 0
      %1557 = vmatpush1.bf16.msra.mxu0 0
      %1558 = vmatprep.subr.bf16.mxu0 0
      %1559 = vmatpush1.bf16.msra.mxu0 0
      %1560 = vmatprep.subr.bf16.mxu0 0
      %1561 = vmatpush1.bf16.msra.mxu0 0
      %1562 = vmatprep.subr.bf16.mxu0 0
      %1563 = vmatpush1.bf16.msra.mxu0 0
      %1564 = vmatprep.subr.bf16.mxu0 0
      %1565 = vmatpush1.bf16.msra.mxu0 0
      %1566 = vmatprep.subr.bf16.mxu0 0
      %1567 = vmatpush1.bf16.msra.mxu0 0
      %1568 = vmatprep.subr.bf16.mxu0 0
      %1569 = vmatpush1.bf16.msra.mxu0 0
      %1570 = vmatprep.subr.bf16.mxu0 0
      %1571 = vmatpush1.bf16.msra.mxu0 0
      %1572 = vmatprep.mubr.bf16.mxu0 0
      %1573 = vmatmul.mubr.bf16.gmra.mrb[0].mxu0 %v1511
      %v1574 = vpop.f32.mrb[0].mxu0
      %v1575 = vadd.f32 0.0, %v1574
      %v1576 = vpop.f32.mrb[0].mxu0
      %v1577 = vpop.f32.mrb[0].mxu0
      %v1578 = vadd.f32 0.0, %v1577
      %v1579 = vpop.f32.mrb[0].mxu0
      %1580 = vmatprep.mubr.bf16.mxu0 0
      %1581 = vmatmul.mubr.bf16.gmra.mrb[0].mxu0 %v1514
      %v1582 = vpop.f32.mrb[0].mxu0
      %v1583 = vadd.f32 0.0, %v1582
      %v1584 = vpop.f32.mrb[0].mxu0
      %v1585 = vpop.f32.mrb[0].mxu0
      %v1586 = vadd.f32 0.0, %v1585
      %v1587 = vpop.f32.mrb[0].mxu0
      %1588 = vmatprep.mubr.bf16.mxu0 0
      %1589 = vmatmul.mubr.bf16.gmra.mrb[0].mxu0 %v1517
      %v1590 = vpop.f32.mrb[0].mxu0
      %v1591 = vadd.f32 0.0, %v1590
      %v1592 = vpop.f32.mrb[0].mxu0
      %v1593 = vpop.f32.mrb[0].mxu0
      %v1594 = vadd.f32 0.0, %v1593
      %v1595 = vpop.f32.mrb[0].mxu0
      %1596 = vmatprep.mubr.bf16.mxu0 0
      %1597 = vmatmul.mubr.bf16.gmra.mrb[0].mxu0 %v1520
      %v1598 = vpop.f32.mrb[0].mxu0
      %v1599 = vadd.f32 0.0, %v1598
      %v1600 = vpop.f32.mrb[0].mxu0
      %v1601 = vpop.f32.mrb[0].mxu0
      %v1602 = vadd.f32 0.0, %v1601
      %v1603 = vpop.f32.mrb[0].mxu0
      %1604 = vmatprep.mubr.bf16.mxu0 0
      %1605 = vmatmul.mubr.bf16.gmra.mrb[0].mxu0 %v1523
      %v1606 = vpop.f32.mrb[0].mxu0
      %v1607 = vadd.f32 0.0, %v1606
      %v1608 = vpop.f32.mrb[0].mxu0
      %v1609 = vpop.f32.mrb[0].mxu0
      %v1610 = vadd.f32 0.0, %v1609
      %v1611 = vpop.f32.mrb[0].mxu0
      %1612 = vmatprep.mubr.bf16.mxu0 0
      %1613 = vmatmul.mubr.bf16.gmra.mrb[0].mxu0 %v1526
      %v1614 = vpop.f32.mrb[0].mxu0
      %v1615 = vadd.f32 0.0, %v1614
      %v1616 = vpop.f32.mrb[0].mxu0
      %v1617 = vpop.f32.mrb[0].mxu0
      %v1618 = vadd.f32 0.0, %v1617
      %v1619 = vpop.f32.mrb[0].mxu0
      %1620 = vmatprep.mubr.bf16.mxu0 0
      %1621 = vmatmul.mubr.bf16.gmra.mrb[0].mxu0 %v1529
      %v1622 = vpop.f32.mrb[0].mxu0
      %v1623 = vadd.f32 0.0, %v1622
      %v1624 = vpop.f32.mrb[0].mxu0
      %v1625 = vpop.f32.mrb[0].mxu0
      %v1626 = vadd.f32 0.0, %v1625
      %v1627 = vpop.f32.mrb[0].mxu0
      %1628 = vmatprep.mubr.bf16.mxu0 0
      %1629 = vmatmul.mubr.bf16.gmra.mrb[0].mxu0 %v1532
      %v1630 = vpop.f32.mrb[0].mxu0
      %v1631 = vadd.f32 0.0, %v1630
      %v1632 = vpop.f32.mrb[0].mxu0
      %v1633 = vpop.f32.mrb[0].mxu0
      %v1634 = vadd.f32 0.0, %v1633
      %v1635 = vpop.f32.mrb[0].mxu0
      %1636 = vmatprep.mubr.bf16.mxu0 0
      %1637 = vmatmul.mubr.bf16.gmra.mrb[0].mxu0 %v1535
      %v1638 = vpop.f32.mrb[0].mxu0
      %v1639 = vadd.f32 0.0, %v1638
      %v1640 = vpop.f32.mrb[0].mxu0
      %v1641 = vpop.f32.mrb[0].mxu0
      %v1642 = vadd.f32 0.0, %v1641
      %v1643 = vpop.f32.mrb[0].mxu0
      %1644 = vdwg.mxu0
      %v1645 = vadd.f32 %v1463, %v1575
      %v1646 = vadd.f32 %v1464, %v1578
      %v1647 = vadd.f32 %v1465, %v1583
      %v1648 = vadd.f32 %v1466, %v1586
      %v1649 = vadd.f32 %v1467, %v1591
      %v1650 = vadd.f32 %v1468, %v1594
      %v1651 = vadd.f32 %v1469, %v1599
      %v1652 = vadd.f32 %v1470, %v1602
      %v1653 = vadd.f32 %v1471, %v1607
      %v1654 = vadd.f32 %v1472, %v1610
      %v1655 = vadd.f32 %v1473, %v1615
      %v1656 = vadd.f32 %v1474, %v1618
      %v1657 = vadd.f32 %v1475, %v1623
      %v1658 = vadd.f32 %v1476, %v1626
      %v1659 = vadd.f32 %v1477, %v1631
      %v1660 = vadd.f32 %v1478, %v1634
      %v1661 = vadd.f32 %v1479, %v1639
      %v1662 = vadd.f32 %v1480, %v1642
      %v1663 = vld [vmem:[%s218 + $0x26] sm:$0xff]
      %v1664 = vld [vmem:[%s218 + $0x2e] sm:$0xff]
      %v1665 = vld [vmem:[%s218 + $0x36] sm:$0xff]
      %v1666 = vld [vmem:[%s218 + $0x3e] sm:$0xff]
      %v1667 = vld [vmem:[%s218 + $0x46] sm:$0xff]
      %v1668 = vld [vmem:[%s218 + $0x4e] sm:$0xff]
      %v1669 = vld [vmem:[%s218 + $0x56] sm:$0xff]
      %v1670 = vld [vmem:[%s218 + $0x5e] sm:$0xff]
      %v1671 = vld [vmem:[%s218 + $0x66] sm:$0xff]
      %v1672 = vld [vmem:[%s218 + $0x6e] sm:$0xff]
      %v1673 = vld [vmem:[%s218 + $0x76] sm:$0xff]
      %v1674 = vld [vmem:[%s218 + $0x7e] sm:$0xff]
      %v1675 = vld [vmem:[%s218 + $0x86] sm:$0xff]
      %v1676 = vld [vmem:[%s218 + $0x8e] sm:$0xff]
      %v1677 = vld [vmem:[%s218 + $0x96] sm:$0xff]
      %v1678 = vld [vmem:[%s218 + $0x9e] sm:$0xff]
      %v1679 = vld [vmem:[%s218 + $0xa6] sm:$0xff]
      %v1680 = vld [vmem:[%s218 + $0xae] sm:$0xff]
      %v1681 = vpack.c.bf16 %v1664, %v1663
      %v1682 = vpack.c.bf16 %v1666, %v1665
      %v1683 = vpack.c.bf16 %v1668, %v1667
      %v1684 = vpack.c.bf16 %v1670, %v1669
      %v1685 = vpack.c.bf16 %v1672, %v1671
      %v1686 = vpack.c.bf16 %v1674, %v1673
      %v1687 = vpack.c.bf16 %v1676, %v1675
      %v1688 = vpack.c.bf16 %v1678, %v1677
      %v1689 = vpack.c.bf16 %v1680, %v1679
      %s1690 = scalar_lea.vmem %s2, 32
      %v1691 = vld [vmem:[%s1690] sm:$0xf]
      %v1693 = vsel %vm299, %v1681, 0
      %v1696 = vsel %vm299, %v1682, 0
      %v1699 = vsel %vm299, %v1683, 0
      %v1702 = vsel %vm299, %v1684, 0
      %v1705 = vsel %vm299, %v1685, 0
      %v1708 = vsel %vm299, %v1686, 0
      %v1711 = vsel %vm299, %v1687, 0
      %v1714 = vsel %vm299, %v1688, 0
      %v1717 = vsel %vm299, %v1689, 0
      %v1720 = vsel %vm327, %v1691, 0
      %1722 = vmatprep.subr.bf16.mxu0 0
      %1723 = vmatpush1.bf16.msra.mxu0 %v1720
      %1724 = vmatprep.subr.bf16.mxu0 0
      %1725 = vmatpush1.bf16.msra.mxu0 0
      %1726 = vmatprep.subr.bf16.mxu0 0
      %1727 = vmatpush1.bf16.msra.mxu0 0
      %1728 = vmatprep.subr.bf16.mxu0 0
      %1729 = vmatpush1.bf16.msra.mxu0 0
      %1730 = vmatprep.subr.bf16.mxu0 0
      %1731 = vmatpush1.bf16.msra.mxu0 0
      %1732 = vmatprep.subr.bf16.mxu0 0
      %1733 = vmatpush1.bf16.msra.mxu0 0
      %1734 = vmatprep.subr.bf16.mxu0 0
      %1735 = vmatpush1.bf16.msra.mxu0 0
      %1736 = vmatprep.subr.bf16.mxu0 0
      %1737 = vmatpush1.bf16.msra.mxu0 0
      %1738 = vmatprep.subr.bf16.mxu0 0
      %1739 = vmatpush1.bf16.msra.mxu0 0
      %1740 = vmatprep.subr.bf16.mxu0 0
      %1741 = vmatpush1.bf16.msra.mxu0 0
      %1742 = vmatprep.subr.bf16.mxu0 0
      %1743 = vmatpush1.bf16.msra.mxu0 0
      %1744 = vmatprep.subr.bf16.mxu0 0
      %1745 = vmatpush1.bf16.msra.mxu0 0
      %1746 = vmatprep.subr.bf16.mxu0 0
      %1747 = vmatpush1.bf16.msra.mxu0 0
      %1748 = vmatprep.subr.bf16.mxu0 0
      %1749 = vmatpush1.bf16.msra.mxu0 0
      %1750 = vmatprep.subr.bf16.mxu0 0
      %1751 = vmatpush1.bf16.msra.mxu0 0
      %1752 = vmatprep.subr.bf16.mxu0 0
      %1753 = vmatpush1.bf16.msra.mxu0 0
      %1754 = vmatprep.mubr.bf16.mxu0 0
      %1755 = vmatmul.mubr.bf16.gmra.mrb[0].mxu0 %v1693
      %v1756 = vpop.f32.mrb[0].mxu0
      %v1757 = vadd.f32 0.0, %v1756
      %v1758 = vpop.f32.mrb[0].mxu0
      %v1759 = vpop.f32.mrb[0].mxu0
      %v1760 = vadd.f32 0.0, %v1759
      %v1761 = vpop.f32.mrb[0].mxu0
      %1762 = vmatprep.mubr.bf16.mxu0 0
      %1763 = vmatmul.mubr.bf16.gmra.mrb[0].mxu0 %v1696
      %v1764 = vpop.f32.mrb[0].mxu0
      %v1765 = vadd.f32 0.0, %v1764
      %v1766 = vpop.f32.mrb[0].mxu0
      %v1767 = vpop.f32.mrb[0].mxu0
      %v1768 = vadd.f32 0.0, %v1767
      %v1769 = vpop.f32.mrb[0].mxu0
      %1770 = vmatprep.mubr.bf16.mxu0 0
      %1771 = vmatmul.mubr.bf16.gmra.mrb[0].mxu0 %v1699
      %v1772 = vpop.f32.mrb[0].mxu0
      %v1773 = vadd.f32 0.0, %v1772
      %v1774 = vpop.f32.mrb[0].mxu0
      %v1775 = vpop.f32.mrb[0].mxu0
      %v1776 = vadd.f32 0.0, %v1775
      %v1777 = vpop.f32.mrb[0].mxu0
      %1778 = vmatprep.mubr.bf16.mxu0 0
      %1779 = vmatmul.mubr.bf16.gmra.mrb[0].mxu0 %v1702
      %v1780 = vpop.f32.mrb[0].mxu0
      %v1781 = vadd.f32 0.0, %v1780
      %v1782 = vpop.f32.mrb[0].mxu0
      %v1783 = vpop.f32.mrb[0].mxu0
      %v1784 = vadd.f32 0.0, %v1783
      %v1785 = vpop.f32.mrb[0].mxu0
      %1786 = vmatprep.mubr.bf16.mxu0 0
      %1787 = vmatmul.mubr.bf16.gmra.mrb[0].mxu0 %v1705
      %v1788 = vpop.f32.mrb[0].mxu0
      %v1789 = vadd.f32 0.0, %v1788
      %v1790 = vpop.f32.mrb[0].mxu0
      %v1791 = vpop.f32.mrb[0].mxu0
      %v1792 = vadd.f32 0.0, %v1791
      %v1793 = vpop.f32.mrb[0].mxu0
      %1794 = vmatprep.mubr.bf16.mxu0 0
      %1795 = vmatmul.mubr.bf16.gmra.mrb[0].mxu0 %v1708
      %v1796 = vpop.f32.mrb[0].mxu0
      %v1797 = vadd.f32 0.0, %v1796
      %v1798 = vpop.f32.mrb[0].mxu0
      %v1799 = vpop.f32.mrb[0].mxu0
      %v1800 = vadd.f32 0.0, %v1799
      %v1801 = vpop.f32.mrb[0].mxu0
      %1802 = vmatprep.mubr.bf16.mxu0 0
      %1803 = vmatmul.mubr.bf16.gmra.mrb[0].mxu0 %v1711
      %v1804 = vpop.f32.mrb[0].mxu0
      %v1805 = vadd.f32 0.0, %v1804
      %v1806 = vpop.f32.mrb[0].mxu0
      %v1807 = vpop.f32.mrb[0].mxu0
      %v1808 = vadd.f32 0.0, %v1807
      %v1809 = vpop.f32.mrb[0].mxu0
      %1810 = vmatprep.mubr.bf16.mxu0 0
      %1811 = vmatmul.mubr.bf16.gmra.mrb[0].mxu0 %v1714
      %v1812 = vpop.f32.mrb[0].mxu0
      %v1813 = vadd.f32 0.0, %v1812
      %v1814 = vpop.f32.mrb[0].mxu0
      %v1815 = vpop.f32.mrb[0].mxu0
      %v1816 = vadd.f32 0.0, %v1815
      %v1817 = vpop.f32.mrb[0].mxu0
      %1818 = vmatprep.mubr.bf16.mxu0 0
      %1819 = vmatmul.mubr.bf16.gmra.mrb[0].mxu0 %v1717
      %v1820 = vpop.f32.mrb[0].mxu0
      %v1821 = vadd.f32 0.0, %v1820
      %v1822 = vpop.f32.mrb[0].mxu0
      %v1823 = vpop.f32.mrb[0].mxu0
      %v1824 = vadd.f32 0.0, %v1823
      %v1825 = vpop.f32.mrb[0].mxu0
      %1826 = vdwg.mxu0
      %v1827 = vadd.f32 %v1645, %v1757
      %v1828 = vadd.f32 %v1646, %v1760
      %v1829 = vadd.f32 %v1647, %v1765
      %v1830 = vadd.f32 %v1648, %v1768
      %v1831 = vadd.f32 %v1649, %v1773
      %v1832 = vadd.f32 %v1650, %v1776
      %v1833 = vadd.f32 %v1651, %v1781
      %v1834 = vadd.f32 %v1652, %v1784
      %v1835 = vadd.f32 %v1653, %v1789
      %v1836 = vadd.f32 %v1654, %v1792
      %v1837 = vadd.f32 %v1655, %v1797
      %v1838 = vadd.f32 %v1656, %v1800
      %v1839 = vadd.f32 %v1657, %v1805
      %v1840 = vadd.f32 %v1658, %v1808
      %v1841 = vadd.f32 %v1659, %v1813
      %v1842 = vadd.f32 %v1660, %v1816
      %v1843 = vadd.f32 %v1661, %v1821
      %v1844 = vadd.f32 %v1662, %v1824
      %v1845 = vmax.f32 %v1827, 0.0
      %v1846 = vmax.f32 %v1828, 0.0
      %v1847 = vmax.f32 %v1829, 0.0
      %v1848 = vmax.f32 %v1830, 0.0
      %v1849 = vmax.f32 %v1831, 0.0
      %v1850 = vmax.f32 %v1832, 0.0
      %v1851 = vmax.f32 %v1833, 0.0
      %v1852 = vmax.f32 %v1834, 0.0
      %v1853 = vmax.f32 %v1835, 0.0
      %v1854 = vmax.f32 %v1836, 0.0
      %v1855 = vmax.f32 %v1837, 0.0
      %v1856 = vmax.f32 %v1838, 0.0
      %v1857 = vmax.f32 %v1839, 0.0
      %v1858 = vmax.f32 %v1840, 0.0
      %v1859 = vmax.f32 %v1841, 0.0
      %v1860 = vmax.f32 %v1842, 0.0
      %v1861 = vmax.f32 %v1843, 0.0
      %v1862 = vmax.f32 %v1844, 0.0
      %1864 = vset.pattern.permute.xlu0 0
      %1865 = vperm.xlu0 %1864, %v224
      %v1866 = vpop.permute.xlu0 %1865
      %1869 = vset.pattern.permute.xlu0 0
      %1870 = vperm.xlu0 %1869, %v225
      %v1871 = vpop.permute.xlu0 %1870
      %1874 = vset.pattern.permute.xlu0 0
      %1875 = vperm.xlu0 %1874, %v226
      %v1876 = vpop.permute.xlu0 %1875
      %1879 = vset.pattern.permute.xlu0 0
      %1880 = vperm.xlu0 %1879, %v227
      %v1881 = vpop.permute.xlu0 %1880
      %1884 = vset.pattern.permute.xlu0 0
      %1885 = vperm.xlu0 %1884, %v228
      %v1886 = vpop.permute.xlu0 %1885
      %1889 = vset.pattern.permute.xlu0 0
      %1890 = vperm.xlu0 %1889, %v229
      %v1891 = vpop.permute.xlu0 %1890
      %1894 = vset.pattern.permute.xlu0 0
      %1895 = vperm.xlu0 %1894, %v230
      %v1896 = vpop.permute.xlu0 %1895
      %1899 = vset.pattern.permute.xlu0 0
      %1900 = vperm.xlu0 %1899, %v231
      %v1901 = vpop.permute.xlu0 %1900
      %1904 = vset.pattern.permute.xlu0 0
      %1905 = vperm.xlu0 %1904, %v232
      %v1906 = vpop.permute.xlu0 %1905
      %1909 = vset.pattern.permute.xlu0 0
      %1910 = vperm.xlu0 %1909, %v233
      %v1911 = vpop.permute.xlu0 %1910
      %1914 = vset.pattern.permute.xlu0 0
      %1915 = vperm.xlu0 %1914, %v234
      %v1916 = vpop.permute.xlu0 %1915
      %1919 = vset.pattern.permute.xlu0 0
      %1920 = vperm.xlu0 %1919, %v235
      %v1921 = vpop.permute.xlu0 %1920
      %1924 = vset.pattern.permute.xlu0 0
      %1925 = vperm.xlu0 %1924, %v236
      %v1926 = vpop.permute.xlu0 %1925
      %1929 = vset.pattern.permute.xlu0 0
      %1930 = vperm.xlu0 %1929, %v237
      %v1931 = vpop.permute.xlu0 %1930
      %1934 = vset.pattern.permute.xlu0 0
      %1935 = vperm.xlu0 %1934, %v238
      %v1936 = vpop.permute.xlu0 %1935
      %1939 = vset.pattern.permute.xlu0 0
      %1940 = vperm.xlu0 %1939, %v239
      %v1941 = vpop.permute.xlu0 %1940
      %1944 = vset.pattern.permute.xlu0 0
      %1945 = vperm.xlu0 %1944, %v240
      %v1946 = vpop.permute.xlu0 %1945
      %1949 = vset.pattern.permute.xlu0 0
      %1950 = vperm.xlu0 %1949, %v241
      %v1951 = vpop.permute.xlu0 %1950
      %v1953 = vmul.f32 %v1845, %v1866
      %v1954 = vmul.f32 %v1846, %v1871
      %v1955 = vmul.f32 %v1847, %v1876
      %v1956 = vmul.f32 %v1848, %v1881
      %v1957 = vmul.f32 %v1849, %v1886
      %v1958 = vmul.f32 %v1850, %v1891
      %v1959 = vmul.f32 %v1851, %v1896
      %v1960 = vmul.f32 %v1852, %v1901
      %v1961 = vmul.f32 %v1853, %v1906
      %v1962 = vmul.f32 %v1854, %v1911
      %v1963 = vmul.f32 %v1855, %v1916
      %v1964 = vmul.f32 %v1856, %v1921
      %v1965 = vmul.f32 %v1857, %v1926
      %v1966 = vmul.f32 %v1858, %v1931
      %v1967 = vmul.f32 %v1859, %v1936
      %v1968 = vmul.f32 %v1860, %v1941
      %v1969 = vmul.f32 %v1861, %v1946
      %v1970 = vmul.f32 %v1862, %v1951
      %v1971 = vadd.f32 %v1953, %v1954
      %v1972 = vadd.f32 %v1971, %v1955
      %v1973 = vadd.f32 %v1972, %v1956
      %v1974 = vadd.f32 %v1973, %v1957
      %v1975 = vadd.f32 %v1974, %v1958
      %v1976 = vadd.f32 %v1975, %v1959
      %v1977 = vadd.f32 %v1976, %v1960
      %v1978 = vadd.f32 %v1977, %v1961
      %v1979 = vadd.f32 %v1978, %v1962
      %v1980 = vadd.f32 %v1979, %v1963
      %v1981 = vadd.f32 %v1980, %v1964
      %v1982 = vadd.f32 %v1981, %v1965
      %v1983 = vadd.f32 %v1982, %v1966
      %v1984 = vadd.f32 %v1983, %v1967
      %v1985 = vadd.f32 %v1984, %v1968
      %v1986 = vadd.f32 %v1985, %v1969
      %v1987 = vadd.f32 %v1986, %v1970
      %v1988 = vrot.slane %v1987, 4
      %v1989 = vadd.f32 %v1987, %v1988
      %v1990 = vrot.slane %v1989, 2
      %v1991 = vadd.f32 %v1989, %v1990
      %v1992 = vrot.slane %v1991, 1
      %v1993 = vadd.f32 %v1991, %v1992
      %v1994 = vadd.f32 %v1993, 0.0
      %v1995 = vld [vmem:[%s218 + $0x90] sm:$0xff]
      %v1996 = vld [vmem:[%s218 + $0x98] sm:$0xff]
      %v1997 = vld [vmem:[%s218 + $0xa0] sm:$0xff]
      %v1998 = vld [vmem:[%s218 + $0xa8] sm:$0xff]
      %v1999 = vld [vmem:[%s218 + $0xb0] sm:$0xff]
      %v2000 = vld [vmem:[%s218 + $0xb8] sm:$0xff]
      %v2001 = vld [vmem:[%s218 + $0xc0] sm:$0xff]
      %v2002 = vld [vmem:[%s218 + $0xc8] sm:$0xff]
      %v2003 = vld [vmem:[%s218 + $0xd0] sm:$0xff]
      %v2004 = vld [vmem:[%s218 + $0xd8] sm:$0xff]
      %v2005 = vld [vmem:[%s218 + $0xe0] sm:$0xff]
      %v2006 = vld [vmem:[%s218 + $0xe8] sm:$0xff]
      %v2007 = vld [vmem:[%s218 + $0xf0] sm:$0xff]
      %v2008 = vld [vmem:[%s218 + $0xf8] sm:$0xff]
      %v2009 = vld [vmem:[%s218 + $0x100] sm:$0xff]
      %v2010 = vld [vmem:[%s218 + $0x108] sm:$0xff]
      %v2011 = vld [vmem:[%s218 + $0x110] sm:$0xff]
      %v2012 = vld [vmem:[%s218 + $0x118] sm:$0xff]
      %v2013 = vpack.c.bf16 %v1996, %v1995
      %v2014 = vpack.c.bf16 %v1998, %v1997
      %v2015 = vpack.c.bf16 %v2000, %v1999
      %v2016 = vpack.c.bf16 %v2002, %v2001
      %v2017 = vpack.c.bf16 %v2004, %v2003
      %v2018 = vpack.c.bf16 %v2006, %v2005
      %v2019 = vpack.c.bf16 %v2008, %v2007
      %v2020 = vpack.c.bf16 %v2010, %v2009
      %v2021 = vpack.c.bf16 %v2012, %v2011
      %v2022 = vld [vmem:[%s218 + $0x91] sm:$0xff]
      %v2023 = vld [vmem:[%s218 + $0x99] sm:$0xff]
      %v2024 = vld [vmem:[%s218 + $0xa1] sm:$0xff]
      %v2025 = vld [vmem:[%s218 + $0xa9] sm:$0xff]
      %v2026 = vld [vmem:[%s218 + $0xb1] sm:$0xff]
      %v2027 = vld [vmem:[%s218 + $0xb9] sm:$0xff]
      %v2028 = vld [vmem:[%s218 + $0xc1] sm:$0xff]
      %v2029 = vld [vmem:[%s218 + $0xc9] sm:$0xff]
      %v2030 = vld [vmem:[%s218 + $0xd1] sm:$0xff]
      %v2031 = vld [vmem:[%s218 + $0xd9] sm:$0xff]
      %v2032 = vld [vmem:[%s218 + $0xe1] sm:$0xff]
      %v2033 = vld [vmem:[%s218 + $0xe9] sm:$0xff]
      %v2034 = vld [vmem:[%s218 + $0xf1] sm:$0xff]
      %v2035 = vld [vmem:[%s218 + $0xf9] sm:$0xff]
      %v2036 = vld [vmem:[%s218 + $0x101] sm:$0xff]
      %v2037 = vld [vmem:[%s218 + $0x109] sm:$0xff]
      %v2038 = vld [vmem:[%s218 + $0x111] sm:$0xff]
      %v2039 = vld [vmem:[%s218 + $0x119] sm:$0xff]
      %v2040 = vpack.c.bf16 %v2023, %v2022
      %v2041 = vpack.c.bf16 %v2025, %v2024
      %v2042 = vpack.c.bf16 %v2027, %v2026
      %v2043 = vpack.c.bf16 %v2029, %v2028
      %v2044 = vpack.c.bf16 %v2031, %v2030
      %v2045 = vpack.c.bf16 %v2033, %v2032
      %v2046 = vpack.c.bf16 %v2035, %v2034
      %v2047 = vpack.c.bf16 %v2037, %v2036
      %v2048 = vpack.c.bf16 %v2039, %v2038
      %v2050 = vsel %vm299, %v2040, 0
      %v2053 = vsel %vm299, %v2041, 0
      %v2056 = vsel %vm299, %v2042, 0
      %v2059 = vsel %vm299, %v2043, 0
      %v2062 = vsel %vm299, %v2044, 0
      %v2065 = vsel %vm299, %v2045, 0
      %v2068 = vsel %vm299, %v2046, 0
      %v2071 = vsel %vm299, %v2047, 0
      %v2074 = vsel %vm299, %v2048, 0
      %2076 = vmatprep.subr.bf16.mxu0 0
      %2077 = vmatpush1.bf16.msra.mxu0 %v329
      %2078 = vmatprep.subr.bf16.mxu0 0
      %2079 = vmatpush1.bf16.msra.mxu0 0
      %2080 = vmatprep.subr.bf16.mxu0 0
      %2081 = vmatpush1.bf16.msra.mxu0 0
      %2082 = vmatprep.subr.bf16.mxu0 0
      %2083 = vmatpush1.bf16.msra.mxu0 0
      %2084 = vmatprep.subr.bf16.mxu0 0
      %2085 = vmatpush1.bf16.msra.mxu0 0
      %2086 = vmatprep.subr.bf16.mxu0 0
      %2087 = vmatpush1.bf16.msra.mxu0 0
      %2088 = vmatprep.subr.bf16.mxu0 0
      %2089 = vmatpush1.bf16.msra.mxu0 0
      %2090 = vmatprep.subr.bf16.mxu0 0
      %2091 = vmatpush1.bf16.msra.mxu0 0
      %2092 = vmatprep.subr.bf16.mxu0 0
      %2093 = vmatpush1.bf16.msra.mxu0 0
      %2094 = vmatprep.subr.bf16.mxu0 0
      %2095 = vmatpush1.bf16.msra.mxu0 0
      %2096 = vmatprep.subr.bf16.mxu0 0
      %2097 = vmatpush1.bf16.msra.mxu0 0
      %2098 = vmatprep.subr.bf16.mxu0 0
      %2099 = vmatpush1.bf16.msra.mxu0 0
      %2100 = vmatprep.subr.bf16.mxu0 0
      %2101 = vmatpush1.bf16.msra.mxu0 0
      %2102 = vmatprep.subr.bf16.mxu0 0
      %2103 = vmatpush1.bf16.msra.mxu0 0
      %2104 = vmatprep.subr.bf16.mxu0 0
      %2105 = vmatpush1.bf16.msra.mxu0 0
      %2106 = vmatprep.subr.bf16.mxu0 0
      %2107 = vmatpush1.bf16.msra.mxu0 0
      %2108 = vmatprep.mubr.bf16.mxu0 0
      %2109 = vmatmul.mubr.bf16.gmra.mrb[0].mxu0 %v2050
      %v2110 = vpop.f32.mrb[0].mxu0
      %v2111 = vadd.f32 0.0, %v2110
      %v2112 = vpop.f32.mrb[0].mxu0
      %v2113 = vpop.f32.mrb[0].mxu0
      %v2114 = vadd.f32 0.0, %v2113
      %v2115 = vpop.f32.mrb[0].mxu0
      %2116 = vmatprep.mubr.bf16.mxu0 0
      %2117 = vmatmul.mubr.bf16.gmra.mrb[0].mxu0 %v2053
      %v2118 = vpop.f32.mrb[0].mxu0
      %v2119 = vadd.f32 0.0, %v2118
      %v2120 = vpop.f32.mrb[0].mxu0
      %v2121 = vpop.f32.mrb[0].mxu0
      %v2122 = vadd.f32 0.0, %v2121
      %v2123 = vpop.f32.mrb[0].mxu0
      %2124 = vmatprep.mubr.bf16.mxu0 0
      %2125 = vmatmul.mubr.bf16.gmra.mrb[0].mxu0 %v2056
      %v2126 = vpop.f32.mrb[0].mxu0
      %v2127 = vadd.f32 0.0, %v2126
      %v2128 = vpop.f32.mrb[0].mxu0
      %v2129 = vpop.f32.mrb[0].mxu0
      %v2130 = vadd.f32 0.0, %v2129
      %v2131 = vpop.f32.mrb[0].mxu0
      %2132 = vmatprep.mubr.bf16.mxu0 0
      %2133 = vmatmul.mubr.bf16.gmra.mrb[0].mxu0 %v2059
      %v2134 = vpop.f32.mrb[0].mxu0
      %v2135 = vadd.f32 0.0, %v2134
      %v2136 = vpop.f32.mrb[0].mxu0
      %v2137 = vpop.f32.mrb[0].mxu0
      %v2138 = vadd.f32 0.0, %v2137
      %v2139 = vpop.f32.mrb[0].mxu0
      %2140 = vmatprep.mubr.bf16.mxu0 0
      %2141 = vmatmul.mubr.bf16.gmra.mrb[0].mxu0 %v2062
      %v2142 = vpop.f32.mrb[0].mxu0
      %v2143 = vadd.f32 0.0, %v2142
      %v2144 = vpop.f32.mrb[0].mxu0
      %v2145 = vpop.f32.mrb[0].mxu0
      %v2146 = vadd.f32 0.0, %v2145
      %v2147 = vpop.f32.mrb[0].mxu0
      %2148 = vmatprep.mubr.bf16.mxu0 0
      %2149 = vmatmul.mubr.bf16.gmra.mrb[0].mxu0 %v2065
      %v2150 = vpop.f32.mrb[0].mxu0
      %v2151 = vadd.f32 0.0, %v2150
      %v2152 = vpop.f32.mrb[0].mxu0
      %v2153 = vpop.f32.mrb[0].mxu0
      %v2154 = vadd.f32 0.0, %v2153
      %v2155 = vpop.f32.mrb[0].mxu0
      %2156 = vmatprep.mubr.bf16.mxu0 0
      %2157 = vmatmul.mubr.bf16.gmra.mrb[0].mxu0 %v2068
      %v2158 = vpop.f32.mrb[0].mxu0
      %v2159 = vadd.f32 0.0, %v2158
      %v2160 = vpop.f32.mrb[0].mxu0
      %v2161 = vpop.f32.mrb[0].mxu0
      %v2162 = vadd.f32 0.0, %v2161
      %v2163 = vpop.f32.mrb[0].mxu0
      %2164 = vmatprep.mubr.bf16.mxu0 0
      %2165 = vmatmul.mubr.bf16.gmra.mrb[0].mxu0 %v2071
      %v2166 = vpop.f32.mrb[0].mxu0
      %v2167 = vadd.f32 0.0, %v2166
      %v2168 = vpop.f32.mrb[0].mxu0
      %v2169 = vpop.f32.mrb[0].mxu0
      %v2170 = vadd.f32 0.0, %v2169
      %v2171 = vpop.f32.mrb[0].mxu0
      %2172 = vmatprep.mubr.bf16.mxu0 0
      %2173 = vmatmul.mubr.bf16.gmra.mrb[0].mxu0 %v2074
      %v2174 = vpop.f32.mrb[0].mxu0
      %v2175 = vadd.f32 0.0, %v2174
      %v2176 = vpop.f32.mrb[0].mxu0
      %v2177 = vpop.f32.mrb[0].mxu0
      %v2178 = vadd.f32 0.0, %v2177
      %v2179 = vpop.f32.mrb[0].mxu0
      %2180 = vdwg.mxu0
      %v2182 = vsel %vm299, %v2013, 0
      %v2185 = vsel %vm299, %v2014, 0
      %v2188 = vsel %vm299, %v2015, 0
      %v2191 = vsel %vm299, %v2016, 0
      %v2194 = vsel %vm299, %v2017, 0
      %v2197 = vsel %vm299, %v2018, 0
      %v2200 = vsel %vm299, %v2019, 0
      %v2203 = vsel %vm299, %v2020, 0
      %v2206 = vsel %vm299, %v2021, 0
      %2208 = vmatprep.subr.bf16.mxu0 0
      %2209 = vmatpush1.bf16.msra.mxu0 %v464
      %2210 = vmatprep.subr.bf16.mxu0 0
      %2211 = vmatpush1.bf16.msra.mxu0 0
      %2212 = vmatprep.subr.bf16.mxu0 0
      %2213 = vmatpush1.bf16.msra.mxu0 0
      %2214 = vmatprep.subr.bf16.mxu0 0
      %2215 = vmatpush1.bf16.msra.mxu0 0
      %2216 = vmatprep.subr.bf16.mxu0 0
      %2217 = vmatpush1.bf16.msra.mxu0 0
      %2218 = vmatprep.subr.bf16.mxu0 0
      %2219 = vmatpush1.bf16.msra.mxu0 0
      %2220 = vmatprep.subr.bf16.mxu0 0
      %2221 = vmatpush1.bf16.msra.mxu0 0
      %2222 = vmatprep.subr.bf16.mxu0 0
      %2223 = vmatpush1.bf16.msra.mxu0 0
      %2224 = vmatprep.subr.bf16.mxu0 0
      %2225 = vmatpush1.bf16.msra.mxu0 0
      %2226 = vmatprep.subr.bf16.mxu0 0
      %2227 = vmatpush1.bf16.msra.mxu0 0
      %2228 = vmatprep.subr.bf16.mxu0 0
      %2229 = vmatpush1.bf16.msra.mxu0 0
      %2230 = vmatprep.subr.bf16.mxu0 0
      %2231 = vmatpush1.bf16.msra.mxu0 0
      %2232 = vmatprep.subr.bf16.mxu0 0
      %2233 = vmatpush1.bf16.msra.mxu0 0
      %2234 = vmatprep.subr.bf16.mxu0 0
      %2235 = vmatpush1.bf16.msra.mxu0 0
      %2236 = vmatprep.subr.bf16.mxu0 0
      %2237 = vmatpush1.bf16.msra.mxu0 0
      %2238 = vmatprep.subr.bf16.mxu0 0
      %2239 = vmatpush1.bf16.msra.mxu0 0
      %2240 = vmatprep.mubr.bf16.mxu0 0
      %2241 = vmatmul.mubr.bf16.gmra.mrb[0].mxu0 %v2182
      %v2242 = vpop.f32.mrb[0].mxu0
      %v2243 = vadd.f32 %v2111, %v2242
      %v2244 = vpop.f32.mrb[0].mxu0
      %v2245 = vpop.f32.mrb[0].mxu0
      %v2246 = vadd.f32 %v2114, %v2245
      %v2247 = vpop.f32.mrb[0].mxu0
      %2248 = vmatprep.mubr.bf16.mxu0 0
      %2249 = vmatmul.mubr.bf16.gmra.mrb[0].mxu0 %v2185
      %v2250 = vpop.f32.mrb[0].mxu0
      %v2251 = vadd.f32 %v2119, %v2250
      %v2252 = vpop.f32.mrb[0].mxu0
      %v2253 = vpop.f32.mrb[0].mxu0
      %v2254 = vadd.f32 %v2122, %v2253
      %v2255 = vpop.f32.mrb[0].mxu0
      %2256 = vmatprep.mubr.bf16.mxu0 0
      %2257 = vmatmul.mubr.bf16.gmra.mrb[0].mxu0 %v2188
      %v2258 = vpop.f32.mrb[0].mxu0
      %v2259 = vadd.f32 %v2127, %v2258
      %v2260 = vpop.f32.mrb[0].mxu0
      %v2261 = vpop.f32.mrb[0].mxu0
      %v2262 = vadd.f32 %v2130, %v2261
      %v2263 = vpop.f32.mrb[0].mxu0
      %2264 = vmatprep.mubr.bf16.mxu0 0
      %2265 = vmatmul.mubr.bf16.gmra.mrb[0].mxu0 %v2191
      %v2266 = vpop.f32.mrb[0].mxu0
      %v2267 = vadd.f32 %v2135, %v2266
      %v2268 = vpop.f32.mrb[0].mxu0
      %v2269 = vpop.f32.mrb[0].mxu0
      %v2270 = vadd.f32 %v2138, %v2269
      %v2271 = vpop.f32.mrb[0].mxu0
      %2272 = vmatprep.mubr.bf16.mxu0 0
      %2273 = vmatmul.mubr.bf16.gmra.mrb[0].mxu0 %v2194
      %v2274 = vpop.f32.mrb[0].mxu0
      %v2275 = vadd.f32 %v2143, %v2274
      %v2276 = vpop.f32.mrb[0].mxu0
      %v2277 = vpop.f32.mrb[0].mxu0
      %v2278 = vadd.f32 %v2146, %v2277
      %v2279 = vpop.f32.mrb[0].mxu0
      %2280 = vmatprep.mubr.bf16.mxu0 0
      %2281 = vmatmul.mubr.bf16.gmra.mrb[0].mxu0 %v2197
      %v2282 = vpop.f32.mrb[0].mxu0
      %v2283 = vadd.f32 %v2151, %v2282
      %v2284 = vpop.f32.mrb[0].mxu0
      %v2285 = vpop.f32.mrb[0].mxu0
      %v2286 = vadd.f32 %v2154, %v2285
      %v2287 = vpop.f32.mrb[0].mxu0
      %2288 = vmatprep.mubr.bf16.mxu0 0
      %2289 = vmatmul.mubr.bf16.gmra.mrb[0].mxu0 %v2200
      %v2290 = vpop.f32.mrb[0].mxu0
      %v2291 = vadd.f32 %v2159, %v2290
      %v2292 = vpop.f32.mrb[0].mxu0
      %v2293 = vpop.f32.mrb[0].mxu0
      %v2294 = vadd.f32 %v2162, %v2293
      %v2295 = vpop.f32.mrb[0].mxu0
      %2296 = vmatprep.mubr.bf16.mxu0 0
      %2297 = vmatmul.mubr.bf16.gmra.mrb[0].mxu0 %v2203
      %v2298 = vpop.f32.mrb[0].mxu0
      %v2299 = vadd.f32 %v2167, %v2298
      %v2300 = vpop.f32.mrb[0].mxu0
      %v2301 = vpop.f32.mrb[0].mxu0
      %v2302 = vadd.f32 %v2170, %v2301
      %v2303 = vpop.f32.mrb[0].mxu0
      %2304 = vmatprep.mubr.bf16.mxu0 0
      %2305 = vmatmul.mubr.bf16.gmra.mrb[0].mxu0 %v2206
      %v2306 = vpop.f32.mrb[0].mxu0
      %v2307 = vadd.f32 %v2175, %v2306
      %v2308 = vpop.f32.mrb[0].mxu0
      %v2309 = vpop.f32.mrb[0].mxu0
      %v2310 = vadd.f32 %v2178, %v2309
      %v2311 = vpop.f32.mrb[0].mxu0
      %2312 = vdwg.mxu0
      %v2313 = vld [vmem:[%s218 + $0x92] sm:$0xff]
      %v2314 = vld [vmem:[%s218 + $0x9a] sm:$0xff]
      %v2315 = vld [vmem:[%s218 + $0xa2] sm:$0xff]
      %v2316 = vld [vmem:[%s218 + $0xaa] sm:$0xff]
      %v2317 = vld [vmem:[%s218 + $0xb2] sm:$0xff]
      %v2318 = vld [vmem:[%s218 + $0xba] sm:$0xff]
      %v2319 = vld [vmem:[%s218 + $0xc2] sm:$0xff]
      %v2320 = vld [vmem:[%s218 + $0xca] sm:$0xff]
      %v2321 = vld [vmem:[%s218 + $0xd2] sm:$0xff]
      %v2322 = vld [vmem:[%s218 + $0xda] sm:$0xff]
      %v2323 = vld [vmem:[%s218 + $0xe2] sm:$0xff]
      %v2324 = vld [vmem:[%s218 + $0xea] sm:$0xff]
      %v2325 = vld [vmem:[%s218 + $0xf2] sm:$0xff]
      %v2326 = vld [vmem:[%s218 + $0xfa] sm:$0xff]
      %v2327 = vld [vmem:[%s218 + $0x102] sm:$0xff]
      %v2328 = vld [vmem:[%s218 + $0x10a] sm:$0xff]
      %v2329 = vld [vmem:[%s218 + $0x112] sm:$0xff]
      %v2330 = vld [vmem:[%s218 + $0x11a] sm:$0xff]
      %v2331 = vpack.c.bf16 %v2314, %v2313
      %v2332 = vpack.c.bf16 %v2316, %v2315
      %v2333 = vpack.c.bf16 %v2318, %v2317
      %v2334 = vpack.c.bf16 %v2320, %v2319
      %v2335 = vpack.c.bf16 %v2322, %v2321
      %v2336 = vpack.c.bf16 %v2324, %v2323
      %v2337 = vpack.c.bf16 %v2326, %v2325
      %v2338 = vpack.c.bf16 %v2328, %v2327
      %v2339 = vpack.c.bf16 %v2330, %v2329
      %v2341 = vsel %vm299, %v2331, 0
      %v2344 = vsel %vm299, %v2332, 0
      %v2347 = vsel %vm299, %v2333, 0
      %v2350 = vsel %vm299, %v2334, 0
      %v2353 = vsel %vm299, %v2335, 0
      %v2356 = vsel %vm299, %v2336, 0
      %v2359 = vsel %vm299, %v2337, 0
      %v2362 = vsel %vm299, %v2338, 0
      %v2365 = vsel %vm299, %v2339, 0
      %2367 = vmatprep.subr.bf16.mxu0 0
      %2368 = vmatpush1.bf16.msra.mxu0 %v628
      %2369 = vmatprep.subr.bf16.mxu0 0
      %2370 = vmatpush1.bf16.msra.mxu0 0
      %2371 = vmatprep.subr.bf16.mxu0 0
      %2372 = vmatpush1.bf16.msra.mxu0 0
      %2373 = vmatprep.subr.bf16.mxu0 0
      %2374 = vmatpush1.bf16.msra.mxu0 0
      %2375 = vmatprep.subr.bf16.mxu0 0
      %2376 = vmatpush1.bf16.msra.mxu0 0
      %2377 = vmatprep.subr.bf16.mxu0 0
      %2378 = vmatpush1.bf16.msra.mxu0 0
      %2379 = vmatprep.subr.bf16.mxu0 0
      %2380 = vmatpush1.bf16.msra.mxu0 0
      %2381 = vmatprep.subr.bf16.mxu0 0
      %2382 = vmatpush1.bf16.msra.mxu0 0
      %2383 = vmatprep.subr.bf16.mxu0 0
      %2384 = vmatpush1.bf16.msra.mxu0 0
      %2385 = vmatprep.subr.bf16.mxu0 0
      %2386 = vmatpush1.bf16.msra.mxu0 0
      %2387 = vmatprep.subr.bf16.mxu0 0
      %2388 = vmatpush1.bf16.msra.mxu0 0
      %2389 = vmatprep.subr.bf16.mxu0 0
      %2390 = vmatpush1.bf16.msra.mxu0 0
      %2391 = vmatprep.subr.bf16.mxu0 0
      %2392 = vmatpush1.bf16.msra.mxu0 0
      %2393 = vmatprep.subr.bf16.mxu0 0
      %2394 = vmatpush1.bf16.msra.mxu0 0
      %2395 = vmatprep.subr.bf16.mxu0 0
      %2396 = vmatpush1.bf16.msra.mxu0 0
      %2397 = vmatprep.subr.bf16.mxu0 0
      %2398 = vmatpush1.bf16.msra.mxu0 0
      %2399 = vmatprep.mubr.bf16.mxu0 0
      %2400 = vmatmul.mubr.bf16.gmra.mrb[0].mxu0 %v2341
      %v2401 = vpop.f32.mrb[0].mxu0
      %v2402 = vadd.f32 0.0, %v2401
      %v2403 = vpop.f32.mrb[0].mxu0
      %v2404 = vpop.f32.mrb[0].mxu0
      %v2405 = vadd.f32 0.0, %v2404
      %v2406 = vpop.f32.mrb[0].mxu0
      %2407 = vmatprep.mubr.bf16.mxu0 0
      %2408 = vmatmul.mubr.bf16.gmra.mrb[0].mxu0 %v2344
      %v2409 = vpop.f32.mrb[0].mxu0
      %v2410 = vadd.f32 0.0, %v2409
      %v2411 = vpop.f32.mrb[0].mxu0
      %v2412 = vpop.f32.mrb[0].mxu0
      %v2413 = vadd.f32 0.0, %v2412
      %v2414 = vpop.f32.mrb[0].mxu0
      %2415 = vmatprep.mubr.bf16.mxu0 0
      %2416 = vmatmul.mubr.bf16.gmra.mrb[0].mxu0 %v2347
      %v2417 = vpop.f32.mrb[0].mxu0
      %v2418 = vadd.f32 0.0, %v2417
      %v2419 = vpop.f32.mrb[0].mxu0
      %v2420 = vpop.f32.mrb[0].mxu0
      %v2421 = vadd.f32 0.0, %v2420
      %v2422 = vpop.f32.mrb[0].mxu0
      %2423 = vmatprep.mubr.bf16.mxu0 0
      %2424 = vmatmul.mubr.bf16.gmra.mrb[0].mxu0 %v2350
      %v2425 = vpop.f32.mrb[0].mxu0
      %v2426 = vadd.f32 0.0, %v2425
      %v2427 = vpop.f32.mrb[0].mxu0
      %v2428 = vpop.f32.mrb[0].mxu0
      %v2429 = vadd.f32 0.0, %v2428
      %v2430 = vpop.f32.mrb[0].mxu0
      %2431 = vmatprep.mubr.bf16.mxu0 0
      %2432 = vmatmul.mubr.bf16.gmra.mrb[0].mxu0 %v2353
      %v2433 = vpop.f32.mrb[0].mxu0
      %v2434 = vadd.f32 0.0, %v2433
      %v2435 = vpop.f32.mrb[0].mxu0
      %v2436 = vpop.f32.mrb[0].mxu0
      %v2437 = vadd.f32 0.0, %v2436
      %v2438 = vpop.f32.mrb[0].mxu0
      %2439 = vmatprep.mubr.bf16.mxu0 0
      %2440 = vmatmul.mubr.bf16.gmra.mrb[0].mxu0 %v2356
      %v2441 = vpop.f32.mrb[0].mxu0
      %v2442 = vadd.f32 0.0, %v2441
      %v2443 = vpop.f32.mrb[0].mxu0
      %v2444 = vpop.f32.mrb[0].mxu0
      %v2445 = vadd.f32 0.0, %v2444
      %v2446 = vpop.f32.mrb[0].mxu0
      %2447 = vmatprep.mubr.bf16.mxu0 0
      %2448 = vmatmul.mubr.bf16.gmra.mrb[0].mxu0 %v2359
      %v2449 = vpop.f32.mrb[0].mxu0
      %v2450 = vadd.f32 0.0, %v2449
      %v2451 = vpop.f32.mrb[0].mxu0
      %v2452 = vpop.f32.mrb[0].mxu0
      %v2453 = vadd.f32 0.0, %v2452
      %v2454 = vpop.f32.mrb[0].mxu0
      %2455 = vmatprep.mubr.bf16.mxu0 0
      %2456 = vmatmul.mubr.bf16.gmra.mrb[0].mxu0 %v2362
      %v2457 = vpop.f32.mrb[0].mxu0
      %v2458 = vadd.f32 0.0, %v2457
      %v2459 = vpop.f32.mrb[0].mxu0
      %v2460 = vpop.f32.mrb[0].mxu0
      %v2461 = vadd.f32 0.0, %v2460
      %v2462 = vpop.f32.mrb[0].mxu0
      %2463 = vmatprep.mubr.bf16.mxu0 0
      %2464 = vmatmul.mubr.bf16.gmra.mrb[0].mxu0 %v2365
      %v2465 = vpop.f32.mrb[0].mxu0
      %v2466 = vadd.f32 0.0, %v2465
      %v2467 = vpop.f32.mrb[0].mxu0
      %v2468 = vpop.f32.mrb[0].mxu0
      %v2469 = vadd.f32 0.0, %v2468
      %v2470 = vpop.f32.mrb[0].mxu0
      %2471 = vdwg.mxu0
      %v2472 = vadd.f32 %v2243, %v2402
      %v2473 = vadd.f32 %v2246, %v2405
      %v2474 = vadd.f32 %v2251, %v2410
      %v2475 = vadd.f32 %v2254, %v2413
      %v2476 = vadd.f32 %v2259, %v2418
      %v2477 = vadd.f32 %v2262, %v2421
      %v2478 = vadd.f32 %v2267, %v2426
      %v2479 = vadd.f32 %v2270, %v2429
      %v2480 = vadd.f32 %v2275, %v2434
      %v2481 = vadd.f32 %v2278, %v2437
      %v2482 = vadd.f32 %v2283, %v2442
      %v2483 = vadd.f32 %v2286, %v2445
      %v2484 = vadd.f32 %v2291, %v2450
      %v2485 = vadd.f32 %v2294, %v2453
      %v2486 = vadd.f32 %v2299, %v2458
      %v2487 = vadd.f32 %v2302, %v2461
      %v2488 = vadd.f32 %v2307, %v2466
      %v2489 = vadd.f32 %v2310, %v2469
      %v2490 = vld [vmem:[%s218 + $0xa2] sm:$0xff]
      %v2491 = vld [vmem:[%s218 + $0xaa] sm:$0xff]
      %v2492 = vld [vmem:[%s218 + $0xb2] sm:$0xff]
      %v2493 = vld [vmem:[%s218 + $0xba] sm:$0xff]
      %v2494 = vld [vmem:[%s218 + $0xc2] sm:$0xff]
      %v2495 = vld [vmem:[%s218 + $0xca] sm:$0xff]
      %v2496 = vld [vmem:[%s218 + $0xd2] sm:$0xff]
      %v2497 = vld [vmem:[%s218 + $0xda] sm:$0xff]
      %v2498 = vld [vmem:[%s218 + $0xe2] sm:$0xff]
      %v2499 = vld [vmem:[%s218 + $0xea] sm:$0xff]
      %v2500 = vld [vmem:[%s218 + $0xf2] sm:$0xff]
      %v2501 = vld [vmem:[%s218 + $0xfa] sm:$0xff]
      %v2502 = vld [vmem:[%s218 + $0x102] sm:$0xff]
      %v2503 = vld [vmem:[%s218 + $0x10a] sm:$0xff]
      %v2504 = vld [vmem:[%s218 + $0x112] sm:$0xff]
      %v2505 = vld [vmem:[%s218 + $0x11a] sm:$0xff]
      %v2506 = vld [vmem:[%s218 + $0x122] sm:$0xff]
      %v2507 = vld [vmem:[%s218 + $0x12a] sm:$0xff]
      %v2508 = vpack.c.bf16 %v2491, %v2490
      %v2509 = vpack.c.bf16 %v2493, %v2492
      %v2510 = vpack.c.bf16 %v2495, %v2494
      %v2511 = vpack.c.bf16 %v2497, %v2496
      %v2512 = vpack.c.bf16 %v2499, %v2498
      %v2513 = vpack.c.bf16 %v2501, %v2500
      %v2514 = vpack.c.bf16 %v2503, %v2502
      %v2515 = vpack.c.bf16 %v2505, %v2504
      %v2516 = vpack.c.bf16 %v2507, %v2506
      %v2518 = vsel %vm299, %v2508, 0
      %v2521 = vsel %vm299, %v2509, 0
      %v2524 = vsel %vm299, %v2510, 0
      %v2527 = vsel %vm299, %v2511, 0
      %v2530 = vsel %vm299, %v2512, 0
      %v2533 = vsel %vm299, %v2513, 0
      %v2536 = vsel %vm299, %v2514, 0
      %v2539 = vsel %vm299, %v2515, 0
      %v2542 = vsel %vm299, %v2516, 0
      %2544 = vmatprep.subr.bf16.mxu0 0
      %2545 = vmatpush1.bf16.msra.mxu0 %v810
      %2546 = vmatprep.subr.bf16.mxu0 0
      %2547 = vmatpush1.bf16.msra.mxu0 0
      %2548 = vmatprep.subr.bf16.mxu0 0
      %2549 = vmatpush1.bf16.msra.mxu0 0
      %2550 = vmatprep.subr.bf16.mxu0 0
      %2551 = vmatpush1.bf16.msra.mxu0 0
      %2552 = vmatprep.subr.bf16.mxu0 0
      %2553 = vmatpush1.bf16.msra.mxu0 0
      %2554 = vmatprep.subr.bf16.mxu0 0
      %2555 = vmatpush1.bf16.msra.mxu0 0
      %2556 = vmatprep.subr.bf16.mxu0 0
      %2557 = vmatpush1.bf16.msra.mxu0 0
      %2558 = vmatprep.subr.bf16.mxu0 0
      %2559 = vmatpush1.bf16.msra.mxu0 0
      %2560 = vmatprep.subr.bf16.mxu0 0
      %2561 = vmatpush1.bf16.msra.mxu0 0
      %2562 = vmatprep.subr.bf16.mxu0 0
      %2563 = vmatpush1.bf16.msra.mxu0 0
      %2564 = vmatprep.subr.bf16.mxu0 0
      %2565 = vmatpush1.bf16.msra.mxu0 0
      %2566 = vmatprep.subr.bf16.mxu0 0
      %2567 = vmatpush1.bf16.msra.mxu0 0
      %2568 = vmatprep.subr.bf16.mxu0 0
      %2569 = vmatpush1.bf16.msra.mxu0 0
      %2570 = vmatprep.subr.bf16.mxu0 0
      %2571 = vmatpush1.bf16.msra.mxu0 0
      %2572 = vmatprep.subr.bf16.mxu0 0
      %2573 = vmatpush1.bf16.msra.mxu0 0
      %2574 = vmatprep.subr.bf16.mxu0 0
      %2575 = vmatpush1.bf16.msra.mxu0 0
      %2576 = vmatprep.mubr.bf16.mxu0 0
      %2577 = vmatmul.mubr.bf16.gmra.mrb[0].mxu0 %v2518
      %v2578 = vpop.f32.mrb[0].mxu0
      %v2579 = vadd.f32 0.0, %v2578
      %v2580 = vpop.f32.mrb[0].mxu0
      %v2581 = vpop.f32.mrb[0].mxu0
      %v2582 = vadd.f32 0.0, %v2581
      %v2583 = vpop.f32.mrb[0].mxu0
      %2584 = vmatprep.mubr.bf16.mxu0 0
      %2585 = vmatmul.mubr.bf16.gmra.mrb[0].mxu0 %v2521
      %v2586 = vpop.f32.mrb[0].mxu0
      %v2587 = vadd.f32 0.0, %v2586
      %v2588 = vpop.f32.mrb[0].mxu0
      %v2589 = vpop.f32.mrb[0].mxu0
      %v2590 = vadd.f32 0.0, %v2589
      %v2591 = vpop.f32.mrb[0].mxu0
      %2592 = vmatprep.mubr.bf16.mxu0 0
      %2593 = vmatmul.mubr.bf16.gmra.mrb[0].mxu0 %v2524
      %v2594 = vpop.f32.mrb[0].mxu0
      %v2595 = vadd.f32 0.0, %v2594
      %v2596 = vpop.f32.mrb[0].mxu0
      %v2597 = vpop.f32.mrb[0].mxu0
      %v2598 = vadd.f32 0.0, %v2597
      %v2599 = vpop.f32.mrb[0].mxu0
      %2600 = vmatprep.mubr.bf16.mxu0 0
      %2601 = vmatmul.mubr.bf16.gmra.mrb[0].mxu0 %v2527
      %v2602 = vpop.f32.mrb[0].mxu0
      %v2603 = vadd.f32 0.0, %v2602
      %v2604 = vpop.f32.mrb[0].mxu0
      %v2605 = vpop.f32.mrb[0].mxu0
      %v2606 = vadd.f32 0.0, %v2605
      %v2607 = vpop.f32.mrb[0].mxu0
      %2608 = vmatprep.mubr.bf16.mxu0 0
      %2609 = vmatmul.mubr.bf16.gmra.mrb[0].mxu0 %v2530
      %v2610 = vpop.f32.mrb[0].mxu0
      %v2611 = vadd.f32 0.0, %v2610
      %v2612 = vpop.f32.mrb[0].mxu0
      %v2613 = vpop.f32.mrb[0].mxu0
      %v2614 = vadd.f32 0.0, %v2613
      %v2615 = vpop.f32.mrb[0].mxu0
      %2616 = vmatprep.mubr.bf16.mxu0 0
      %2617 = vmatmul.mubr.bf16.gmra.mrb[0].mxu0 %v2533
      %v2618 = vpop.f32.mrb[0].mxu0
      %v2619 = vadd.f32 0.0, %v2618
      %v2620 = vpop.f32.mrb[0].mxu0
      %v2621 = vpop.f32.mrb[0].mxu0
      %v2622 = vadd.f32 0.0, %v2621
      %v2623 = vpop.f32.mrb[0].mxu0
      %2624 = vmatprep.mubr.bf16.mxu0 0
      %2625 = vmatmul.mubr.bf16.gmra.mrb[0].mxu0 %v2536
      %v2626 = vpop.f32.mrb[0].mxu0
      %v2627 = vadd.f32 0.0, %v2626
      %v2628 = vpop.f32.mrb[0].mxu0
      %v2629 = vpop.f32.mrb[0].mxu0
      %v2630 = vadd.f32 0.0, %v2629
      %v2631 = vpop.f32.mrb[0].mxu0
      %2632 = vmatprep.mubr.bf16.mxu0 0
      %2633 = vmatmul.mubr.bf16.gmra.mrb[0].mxu0 %v2539
      %v2634 = vpop.f32.mrb[0].mxu0
      %v2635 = vadd.f32 0.0, %v2634
      %v2636 = vpop.f32.mrb[0].mxu0
      %v2637 = vpop.f32.mrb[0].mxu0
      %v2638 = vadd.f32 0.0, %v2637
      %v2639 = vpop.f32.mrb[0].mxu0
      %2640 = vmatprep.mubr.bf16.mxu0 0
      %2641 = vmatmul.mubr.bf16.gmra.mrb[0].mxu0 %v2542
      %v2642 = vpop.f32.mrb[0].mxu0
      %v2643 = vadd.f32 0.0, %v2642
      %v2644 = vpop.f32.mrb[0].mxu0
      %v2645 = vpop.f32.mrb[0].mxu0
      %v2646 = vadd.f32 0.0, %v2645
      %v2647 = vpop.f32.mrb[0].mxu0
      %2648 = vdwg.mxu0
      %v2649 = vadd.f32 %v2472, %v2579
      %v2650 = vadd.f32 %v2473, %v2582
      %v2651 = vadd.f32 %v2474, %v2587
      %v2652 = vadd.f32 %v2475, %v2590
      %v2653 = vadd.f32 %v2476, %v2595
      %v2654 = vadd.f32 %v2477, %v2598
      %v2655 = vadd.f32 %v2478, %v2603
      %v2656 = vadd.f32 %v2479, %v2606
      %v2657 = vadd.f32 %v2480, %v2611
      %v2658 = vadd.f32 %v2481, %v2614
      %v2659 = vadd.f32 %v2482, %v2619
      %v2660 = vadd.f32 %v2483, %v2622
      %v2661 = vadd.f32 %v2484, %v2627
      %v2662 = vadd.f32 %v2485, %v2630
      %v2663 = vadd.f32 %v2486, %v2635
      %v2664 = vadd.f32 %v2487, %v2638
      %v2665 = vadd.f32 %v2488, %v2643
      %v2666 = vadd.f32 %v2489, %v2646
      %v2667 = vld [vmem:[%s218 + $0xa3] sm:$0xff]
      %v2668 = vld [vmem:[%s218 + $0xab] sm:$0xff]
      %v2669 = vld [vmem:[%s218 + $0xb3] sm:$0xff]
      %v2670 = vld [vmem:[%s218 + $0xbb] sm:$0xff]
      %v2671 = vld [vmem:[%s218 + $0xc3] sm:$0xff]
      %v2672 = vld [vmem:[%s218 + $0xcb] sm:$0xff]
      %v2673 = vld [vmem:[%s218 + $0xd3] sm:$0xff]
      %v2674 = vld [vmem:[%s218 + $0xdb] sm:$0xff]
      %v2675 = vld [vmem:[%s218 + $0xe3] sm:$0xff]
      %v2676 = vld [vmem:[%s218 + $0xeb] sm:$0xff]
      %v2677 = vld [vmem:[%s218 + $0xf3] sm:$0xff]
      %v2678 = vld [vmem:[%s218 + $0xfb] sm:$0xff]
      %v2679 = vld [vmem:[%s218 + $0x103] sm:$0xff]
      %v2680 = vld [vmem:[%s218 + $0x10b] sm:$0xff]
      %v2681 = vld [vmem:[%s218 + $0x113] sm:$0xff]
      %v2682 = vld [vmem:[%s218 + $0x11b] sm:$0xff]
      %v2683 = vld [vmem:[%s218 + $0x123] sm:$0xff]
      %v2684 = vld [vmem:[%s218 + $0x12b] sm:$0xff]
      %v2685 = vpack.c.bf16 %v2668, %v2667
      %v2686 = vpack.c.bf16 %v2670, %v2669
      %v2687 = vpack.c.bf16 %v2672, %v2671
      %v2688 = vpack.c.bf16 %v2674, %v2673
      %v2689 = vpack.c.bf16 %v2676, %v2675
      %v2690 = vpack.c.bf16 %v2678, %v2677
      %v2691 = vpack.c.bf16 %v2680, %v2679
      %v2692 = vpack.c.bf16 %v2682, %v2681
      %v2693 = vpack.c.bf16 %v2684, %v2683
      %v2695 = vsel %vm299, %v2685, 0
      %v2698 = vsel %vm299, %v2686, 0
      %v2701 = vsel %vm299, %v2687, 0
      %v2704 = vsel %vm299, %v2688, 0
      %v2707 = vsel %vm299, %v2689, 0
      %v2710 = vsel %vm299, %v2690, 0
      %v2713 = vsel %vm299, %v2691, 0
      %v2716 = vsel %vm299, %v2692, 0
      %v2719 = vsel %vm299, %v2693, 0
      %2721 = vmatprep.subr.bf16.mxu0 0
      %2722 = vmatpush1.bf16.msra.mxu0 %v992
      %2723 = vmatprep.subr.bf16.mxu0 0
      %2724 = vmatpush1.bf16.msra.mxu0 0
      %2725 = vmatprep.subr.bf16.mxu0 0
      %2726 = vmatpush1.bf16.msra.mxu0 0
      %2727 = vmatprep.subr.bf16.mxu0 0
      %2728 = vmatpush1.bf16.msra.mxu0 0
      %2729 = vmatprep.subr.bf16.mxu0 0
      %2730 = vmatpush1.bf16.msra.mxu0 0
      %2731 = vmatprep.subr.bf16.mxu0 0
      %2732 = vmatpush1.bf16.msra.mxu0 0
      %2733 = vmatprep.subr.bf16.mxu0 0
      %2734 = vmatpush1.bf16.msra.mxu0 0
      %2735 = vmatprep.subr.bf16.mxu0 0
      %2736 = vmatpush1.bf16.msra.mxu0 0
      %2737 = vmatprep.subr.bf16.mxu0 0
      %2738 = vmatpush1.bf16.msra.mxu0 0
      %2739 = vmatprep.subr.bf16.mxu0 0
      %2740 = vmatpush1.bf16.msra.mxu0 0
      %2741 = vmatprep.subr.bf16.mxu0 0
      %2742 = vmatpush1.bf16.msra.mxu0 0
      %2743 = vmatprep.subr.bf16.mxu0 0
      %2744 = vmatpush1.bf16.msra.mxu0 0
      %2745 = vmatprep.subr.bf16.mxu0 0
      %2746 = vmatpush1.bf16.msra.mxu0 0
      %2747 = vmatprep.subr.bf16.mxu0 0
      %2748 = vmatpush1.bf16.msra.mxu0 0
      %2749 = vmatprep.subr.bf16.mxu0 0
      %2750 = vmatpush1.bf16.msra.mxu0 0
      %2751 = vmatprep.subr.bf16.mxu0 0
      %2752 = vmatpush1.bf16.msra.mxu0 0
      %2753 = vmatprep.mubr.bf16.mxu0 0
      %2754 = vmatmul.mubr.bf16.gmra.mrb[0].mxu0 %v2695
      %v2755 = vpop.f32.mrb[0].mxu0
      %v2756 = vadd.f32 0.0, %v2755
      %v2757 = vpop.f32.mrb[0].mxu0
      %v2758 = vpop.f32.mrb[0].mxu0
      %v2759 = vadd.f32 0.0, %v2758
      %v2760 = vpop.f32.mrb[0].mxu0
      %2761 = vmatprep.mubr.bf16.mxu0 0
      %2762 = vmatmul.mubr.bf16.gmra.mrb[0].mxu0 %v2698
      %v2763 = vpop.f32.mrb[0].mxu0
      %v2764 = vadd.f32 0.0, %v2763
      %v2765 = vpop.f32.mrb[0].mxu0
      %v2766 = vpop.f32.mrb[0].mxu0
      %v2767 = vadd.f32 0.0, %v2766
      %v2768 = vpop.f32.mrb[0].mxu0
      %2769 = vmatprep.mubr.bf16.mxu0 0
      %2770 = vmatmul.mubr.bf16.gmra.mrb[0].mxu0 %v2701
      %v2771 = vpop.f32.mrb[0].mxu0
      %v2772 = vadd.f32 0.0, %v2771
      %v2773 = vpop.f32.mrb[0].mxu0
      %v2774 = vpop.f32.mrb[0].mxu0
      %v2775 = vadd.f32 0.0, %v2774
      %v2776 = vpop.f32.mrb[0].mxu0
      %2777 = vmatprep.mubr.bf16.mxu0 0
      %2778 = vmatmul.mubr.bf16.gmra.mrb[0].mxu0 %v2704
      %v2779 = vpop.f32.mrb[0].mxu0
      %v2780 = vadd.f32 0.0, %v2779
      %v2781 = vpop.f32.mrb[0].mxu0
      %v2782 = vpop.f32.mrb[0].mxu0
      %v2783 = vadd.f32 0.0, %v2782
      %v2784 = vpop.f32.mrb[0].mxu0
      %2785 = vmatprep.mubr.bf16.mxu0 0
      %2786 = vmatmul.mubr.bf16.gmra.mrb[0].mxu0 %v2707
      %v2787 = vpop.f32.mrb[0].mxu0
      %v2788 = vadd.f32 0.0, %v2787
      %v2789 = vpop.f32.mrb[0].mxu0
      %v2790 = vpop.f32.mrb[0].mxu0
      %v2791 = vadd.f32 0.0, %v2790
      %v2792 = vpop.f32.mrb[0].mxu0
      %2793 = vmatprep.mubr.bf16.mxu0 0
      %2794 = vmatmul.mubr.bf16.gmra.mrb[0].mxu0 %v2710
      %v2795 = vpop.f32.mrb[0].mxu0
      %v2796 = vadd.f32 0.0, %v2795
      %v2797 = vpop.f32.mrb[0].mxu0
      %v2798 = vpop.f32.mrb[0].mxu0
      %v2799 = vadd.f32 0.0, %v2798
      %v2800 = vpop.f32.mrb[0].mxu0
      %2801 = vmatprep.mubr.bf16.mxu0 0
      %2802 = vmatmul.mubr.bf16.gmra.mrb[0].mxu0 %v2713
      %v2803 = vpop.f32.mrb[0].mxu0
      %v2804 = vadd.f32 0.0, %v2803
      %v2805 = vpop.f32.mrb[0].mxu0
      %v2806 = vpop.f32.mrb[0].mxu0
      %v2807 = vadd.f32 0.0, %v2806
      %v2808 = vpop.f32.mrb[0].mxu0
      %2809 = vmatprep.mubr.bf16.mxu0 0
      %2810 = vmatmul.mubr.bf16.gmra.mrb[0].mxu0 %v2716
      %v2811 = vpop.f32.mrb[0].mxu0
      %v2812 = vadd.f32 0.0, %v2811
      %v2813 = vpop.f32.mrb[0].mxu0
      %v2814 = vpop.f32.mrb[0].mxu0
      %v2815 = vadd.f32 0.0, %v2814
      %v2816 = vpop.f32.mrb[0].mxu0
      %2817 = vmatprep.mubr.bf16.mxu0 0
      %2818 = vmatmul.mubr.bf16.gmra.mrb[0].mxu0 %v2719
      %v2819 = vpop.f32.mrb[0].mxu0
      %v2820 = vadd.f32 0.0, %v2819
      %v2821 = vpop.f32.mrb[0].mxu0
      %v2822 = vpop.f32.mrb[0].mxu0
      %v2823 = vadd.f32 0.0, %v2822
      %v2824 = vpop.f32.mrb[0].mxu0
      %2825 = vdwg.mxu0
      %v2826 = vadd.f32 %v2649, %v2756
      %v2827 = vadd.f32 %v2650, %v2759
      %v2828 = vadd.f32 %v2651, %v2764
      %v2829 = vadd.f32 %v2652, %v2767
      %v2830 = vadd.f32 %v2653, %v2772
      %v2831 = vadd.f32 %v2654, %v2775
      %v2832 = vadd.f32 %v2655, %v2780
      %v2833 = vadd.f32 %v2656, %v2783
      %v2834 = vadd.f32 %v2657, %v2788
      %v2835 = vadd.f32 %v2658, %v2791
      %v2836 = vadd.f32 %v2659, %v2796
      %v2837 = vadd.f32 %v2660, %v2799
      %v2838 = vadd.f32 %v2661, %v2804
      %v2839 = vadd.f32 %v2662, %v2807
      %v2840 = vadd.f32 %v2663, %v2812
      %v2841 = vadd.f32 %v2664, %v2815
      %v2842 = vadd.f32 %v2665, %v2820
      %v2843 = vadd.f32 %v2666, %v2823
      %v2844 = vld [vmem:[%s218 + $0xa4] sm:$0xff]
      %v2845 = vld [vmem:[%s218 + $0xac] sm:$0xff]
      %v2846 = vld [vmem:[%s218 + $0xb4] sm:$0xff]
      %v2847 = vld [vmem:[%s218 + $0xbc] sm:$0xff]
      %v2848 = vld [vmem:[%s218 + $0xc4] sm:$0xff]
      %v2849 = vld [vmem:[%s218 + $0xcc] sm:$0xff]
      %v2850 = vld [vmem:[%s218 + $0xd4] sm:$0xff]
      %v2851 = vld [vmem:[%s218 + $0xdc] sm:$0xff]
      %v2852 = vld [vmem:[%s218 + $0xe4] sm:$0xff]
      %v2853 = vld [vmem:[%s218 + $0xec] sm:$0xff]
      %v2854 = vld [vmem:[%s218 + $0xf4] sm:$0xff]
      %v2855 = vld [vmem:[%s218 + $0xfc] sm:$0xff]
      %v2856 = vld [vmem:[%s218 + $0x104] sm:$0xff]
      %v2857 = vld [vmem:[%s218 + $0x10c] sm:$0xff]
      %v2858 = vld [vmem:[%s218 + $0x114] sm:$0xff]
      %v2859 = vld [vmem:[%s218 + $0x11c] sm:$0xff]
      %v2860 = vld [vmem:[%s218 + $0x124] sm:$0xff]
      %v2861 = vld [vmem:[%s218 + $0x12c] sm:$0xff]
      %v2862 = vpack.c.bf16 %v2845, %v2844
      %v2863 = vpack.c.bf16 %v2847, %v2846
      %v2864 = vpack.c.bf16 %v2849, %v2848
      %v2865 = vpack.c.bf16 %v2851, %v2850
      %v2866 = vpack.c.bf16 %v2853, %v2852
      %v2867 = vpack.c.bf16 %v2855, %v2854
      %v2868 = vpack.c.bf16 %v2857, %v2856
      %v2869 = vpack.c.bf16 %v2859, %v2858
      %v2870 = vpack.c.bf16 %v2861, %v2860
      %v2872 = vsel %vm299, %v2862, 0
      %v2875 = vsel %vm299, %v2863, 0
      %v2878 = vsel %vm299, %v2864, 0
      %v2881 = vsel %vm299, %v2865, 0
      %v2884 = vsel %vm299, %v2866, 0
      %v2887 = vsel %vm299, %v2867, 0
      %v2890 = vsel %vm299, %v2868, 0
      %v2893 = vsel %vm299, %v2869, 0
      %v2896 = vsel %vm299, %v2870, 0
      %2898 = vmatprep.subr.bf16.mxu0 0
      %2899 = vmatpush1.bf16.msra.mxu0 %v1174
      %2900 = vmatprep.subr.bf16.mxu0 0
      %2901 = vmatpush1.bf16.msra.mxu0 0
      %2902 = vmatprep.subr.bf16.mxu0 0
      %2903 = vmatpush1.bf16.msra.mxu0 0
      %2904 = vmatprep.subr.bf16.mxu0 0
      %2905 = vmatpush1.bf16.msra.mxu0 0
      %2906 = vmatprep.subr.bf16.mxu0 0
      %2907 = vmatpush1.bf16.msra.mxu0 0
      %2908 = vmatprep.subr.bf16.mxu0 0
      %2909 = vmatpush1.bf16.msra.mxu0 0
      %2910 = vmatprep.subr.bf16.mxu0 0
      %2911 = vmatpush1.bf16.msra.mxu0 0
      %2912 = vmatprep.subr.bf16.mxu0 0
      %2913 = vmatpush1.bf16.msra.mxu0 0
      %2914 = vmatprep.subr.bf16.mxu0 0
      %2915 = vmatpush1.bf16.msra.mxu0 0
      %2916 = vmatprep.subr.bf16.mxu0 0
      %2917 = vmatpush1.bf16.msra.mxu0 0
      %2918 = vmatprep.subr.bf16.mxu0 0
      %2919 = vmatpush1.bf16.msra.mxu0 0
      %2920 = vmatprep.subr.bf16.mxu0 0
      %2921 = vmatpush1.bf16.msra.mxu0 0
      %2922 = vmatprep.subr.bf16.mxu0 0
      %2923 = vmatpush1.bf16.msra.mxu0 0
      %2924 = vmatprep.subr.bf16.mxu0 0
      %2925 = vmatpush1.bf16.msra.mxu0 0
      %2926 = vmatprep.subr.bf16.mxu0 0
      %2927 = vmatpush1.bf16.msra.mxu0 0
      %2928 = vmatprep.subr.bf16.mxu0 0
      %2929 = vmatpush1.bf16.msra.mxu0 0
      %2930 = vmatprep.mubr.bf16.mxu0 0
      %2931 = vmatmul.mubr.bf16.gmra.mrb[0].mxu0 %v2872
      %v2932 = vpop.f32.mrb[0].mxu0
      %v2933 = vadd.f32 0.0, %v2932
      %v2934 = vpop.f32.mrb[0].mxu0
      %v2935 = vpop.f32.mrb[0].mxu0
      %v2936 = vadd.f32 0.0, %v2935
      %v2937 = vpop.f32.mrb[0].mxu0
      %2938 = vmatprep.mubr.bf16.mxu0 0
      %2939 = vmatmul.mubr.bf16.gmra.mrb[0].mxu0 %v2875
      %v2940 = vpop.f32.mrb[0].mxu0
      %v2941 = vadd.f32 0.0, %v2940
      %v2942 = vpop.f32.mrb[0].mxu0
      %v2943 = vpop.f32.mrb[0].mxu0
      %v2944 = vadd.f32 0.0, %v2943
      %v2945 = vpop.f32.mrb[0].mxu0
      %2946 = vmatprep.mubr.bf16.mxu0 0
      %2947 = vmatmul.mubr.bf16.gmra.mrb[0].mxu0 %v2878
      %v2948 = vpop.f32.mrb[0].mxu0
      %v2949 = vadd.f32 0.0, %v2948
      %v2950 = vpop.f32.mrb[0].mxu0
      %v2951 = vpop.f32.mrb[0].mxu0
      %v2952 = vadd.f32 0.0, %v2951
      %v2953 = vpop.f32.mrb[0].mxu0
      %2954 = vmatprep.mubr.bf16.mxu0 0
      %2955 = vmatmul.mubr.bf16.gmra.mrb[0].mxu0 %v2881
      %v2956 = vpop.f32.mrb[0].mxu0
      %v2957 = vadd.f32 0.0, %v2956
      %v2958 = vpop.f32.mrb[0].mxu0
      %v2959 = vpop.f32.mrb[0].mxu0
      %v2960 = vadd.f32 0.0, %v2959
      %v2961 = vpop.f32.mrb[0].mxu0
      %2962 = vmatprep.mubr.bf16.mxu0 0
      %2963 = vmatmul.mubr.bf16.gmra.mrb[0].mxu0 %v2884
      %v2964 = vpop.f32.mrb[0].mxu0
      %v2965 = vadd.f32 0.0, %v2964
      %v2966 = vpop.f32.mrb[0].mxu0
      %v2967 = vpop.f32.mrb[0].mxu0
      %v2968 = vadd.f32 0.0, %v2967
      %v2969 = vpop.f32.mrb[0].mxu0
      %2970 = vmatprep.mubr.bf16.mxu0 0
      %2971 = vmatmul.mubr.bf16.gmra.mrb[0].mxu0 %v2887
      %v2972 = vpop.f32.mrb[0].mxu0
      %v2973 = vadd.f32 0.0, %v2972
      %v2974 = vpop.f32.mrb[0].mxu0
      %v2975 = vpop.f32.mrb[0].mxu0
      %v2976 = vadd.f32 0.0, %v2975
      %v2977 = vpop.f32.mrb[0].mxu0
      %2978 = vmatprep.mubr.bf16.mxu0 0
      %2979 = vmatmul.mubr.bf16.gmra.mrb[0].mxu0 %v2890
      %v2980 = vpop.f32.mrb[0].mxu0
      %v2981 = vadd.f32 0.0, %v2980
      %v2982 = vpop.f32.mrb[0].mxu0
      %v2983 = vpop.f32.mrb[0].mxu0
      %v2984 = vadd.f32 0.0, %v2983
      %v2985 = vpop.f32.mrb[0].mxu0
      %2986 = vmatprep.mubr.bf16.mxu0 0
      %2987 = vmatmul.mubr.bf16.gmra.mrb[0].mxu0 %v2893
      %v2988 = vpop.f32.mrb[0].mxu0
      %v2989 = vadd.f32 0.0, %v2988
      %v2990 = vpop.f32.mrb[0].mxu0
      %v2991 = vpop.f32.mrb[0].mxu0
      %v2992 = vadd.f32 0.0, %v2991
      %v2993 = vpop.f32.mrb[0].mxu0
      %2994 = vmatprep.mubr.bf16.mxu0 0
      %2995 = vmatmul.mubr.bf16.gmra.mrb[0].mxu0 %v2896
      %v2996 = vpop.f32.mrb[0].mxu0
      %v2997 = vadd.f32 0.0, %v2996
      %v2998 = vpop.f32.mrb[0].mxu0
      %v2999 = vpop.f32.mrb[0].mxu0
      %v3000 = vadd.f32 0.0, %v2999
      %v3001 = vpop.f32.mrb[0].mxu0
      %3002 = vdwg.mxu0
      %v3003 = vadd.f32 %v2826, %v2933
      %v3004 = vadd.f32 %v2827, %v2936
      %v3005 = vadd.f32 %v2828, %v2941
      %v3006 = vadd.f32 %v2829, %v2944
      %v3007 = vadd.f32 %v2830, %v2949
      %v3008 = vadd.f32 %v2831, %v2952
      %v3009 = vadd.f32 %v2832, %v2957
      %v3010 = vadd.f32 %v2833, %v2960
      %v3011 = vadd.f32 %v2834, %v2965
      %v3012 = vadd.f32 %v2835, %v2968
      %v3013 = vadd.f32 %v2836, %v2973
      %v3014 = vadd.f32 %v2837, %v2976
      %v3015 = vadd.f32 %v2838, %v2981
      %v3016 = vadd.f32 %v2839, %v2984
      %v3017 = vadd.f32 %v2840, %v2989
      %v3018 = vadd.f32 %v2841, %v2992
      %v3019 = vadd.f32 %v2842, %v2997
      %v3020 = vadd.f32 %v2843, %v3000
      %v3021 = vld [vmem:[%s218 + $0xb4] sm:$0xff]
      %v3022 = vld [vmem:[%s218 + $0xbc] sm:$0xff]
      %v3023 = vld [vmem:[%s218 + $0xc4] sm:$0xff]
      %v3024 = vld [vmem:[%s218 + $0xcc] sm:$0xff]
      %v3025 = vld [vmem:[%s218 + $0xd4] sm:$0xff]
      %v3026 = vld [vmem:[%s218 + $0xdc] sm:$0xff]
      %v3027 = vld [vmem:[%s218 + $0xe4] sm:$0xff]
      %v3028 = vld [vmem:[%s218 + $0xec] sm:$0xff]
      %v3029 = vld [vmem:[%s218 + $0xf4] sm:$0xff]
      %v3030 = vld [vmem:[%s218 + $0xfc] sm:$0xff]
      %v3031 = vld [vmem:[%s218 + $0x104] sm:$0xff]
      %v3032 = vld [vmem:[%s218 + $0x10c] sm:$0xff]
      %v3033 = vld [vmem:[%s218 + $0x114] sm:$0xff]
      %v3034 = vld [vmem:[%s218 + $0x11c] sm:$0xff]
      %v3035 = vld [vmem:[%s218 + $0x124] sm:$0xff]
      %v3036 = vld [vmem:[%s218 + $0x12c] sm:$0xff]
      %v3037 = vld [vmem:[%s218 + $0x134] sm:$0xff]
      %v3038 = vld [vmem:[%s218 + $0x13c] sm:$0xff]
      %v3039 = vpack.c.bf16 %v3022, %v3021
      %v3040 = vpack.c.bf16 %v3024, %v3023
      %v3041 = vpack.c.bf16 %v3026, %v3025
      %v3042 = vpack.c.bf16 %v3028, %v3027
      %v3043 = vpack.c.bf16 %v3030, %v3029
      %v3044 = vpack.c.bf16 %v3032, %v3031
      %v3045 = vpack.c.bf16 %v3034, %v3033
      %v3046 = vpack.c.bf16 %v3036, %v3035
      %v3047 = vpack.c.bf16 %v3038, %v3037
      %v3049 = vsel %vm299, %v3039, 0
      %v3052 = vsel %vm299, %v3040, 0
      %v3055 = vsel %vm299, %v3041, 0
      %v3058 = vsel %vm299, %v3042, 0
      %v3061 = vsel %vm299, %v3043, 0
      %v3064 = vsel %vm299, %v3044, 0
      %v3067 = vsel %vm299, %v3045, 0
      %v3070 = vsel %vm299, %v3046, 0
      %v3073 = vsel %vm299, %v3047, 0
      %3075 = vmatprep.subr.bf16.mxu0 0
      %3076 = vmatpush1.bf16.msra.mxu0 %v1356
      %3077 = vmatprep.subr.bf16.mxu0 0
      %3078 = vmatpush1.bf16.msra.mxu0 0
      %3079 = vmatprep.subr.bf16.mxu0 0
      %3080 = vmatpush1.bf16.msra.mxu0 0
      %3081 = vmatprep.subr.bf16.mxu0 0
      %3082 = vmatpush1.bf16.msra.mxu0 0
      %3083 = vmatprep.subr.bf16.mxu0 0
      %3084 = vmatpush1.bf16.msra.mxu0 0
      %3085 = vmatprep.subr.bf16.mxu0 0
      %3086 = vmatpush1.bf16.msra.mxu0 0
      %3087 = vmatprep.subr.bf16.mxu0 0
      %3088 = vmatpush1.bf16.msra.mxu0 0
      %3089 = vmatprep.subr.bf16.mxu0 0
      %3090 = vmatpush1.bf16.msra.mxu0 0
      %3091 = vmatprep.subr.bf16.mxu0 0
      %3092 = vmatpush1.bf16.msra.mxu0 0
      %3093 = vmatprep.subr.bf16.mxu0 0
      %3094 = vmatpush1.bf16.msra.mxu0 0
      %3095 = vmatprep.subr.bf16.mxu0 0
      %3096 = vmatpush1.bf16.msra.mxu0 0
      %3097 = vmatprep.subr.bf16.mxu0 0
      %3098 = vmatpush1.bf16.msra.mxu0 0
      %3099 = vmatprep.subr.bf16.mxu0 0
      %3100 = vmatpush1.bf16.msra.mxu0 0
      %3101 = vmatprep.subr.bf16.mxu0 0
      %3102 = vmatpush1.bf16.msra.mxu0 0
      %3103 = vmatprep.subr.bf16.mxu0 0
      %3104 = vmatpush1.bf16.msra.mxu0 0
      %3105 = vmatprep.subr.bf16.mxu0 0
      %3106 = vmatpush1.bf16.msra.mxu0 0
      %3107 = vmatprep.mubr.bf16.mxu0 0
      %3108 = vmatmul.mubr.bf16.gmra.mrb[0].mxu0 %v3049
      %v3109 = vpop.f32.mrb[0].mxu0
      %v3110 = vadd.f32 0.0, %v3109
      %v3111 = vpop.f32.mrb[0].mxu0
      %v3112 = vpop.f32.mrb[0].mxu0
      %v3113 = vadd.f32 0.0, %v3112
      %v3114 = vpop.f32.mrb[0].mxu0
      %3115 = vmatprep.mubr.bf16.mxu0 0
      %3116 = vmatmul.mubr.bf16.gmra.mrb[0].mxu0 %v3052
      %v3117 = vpop.f32.mrb[0].mxu0
      %v3118 = vadd.f32 0.0, %v3117
      %v3119 = vpop.f32.mrb[0].mxu0
      %v3120 = vpop.f32.mrb[0].mxu0
      %v3121 = vadd.f32 0.0, %v3120
      %v3122 = vpop.f32.mrb[0].mxu0
      %3123 = vmatprep.mubr.bf16.mxu0 0
      %3124 = vmatmul.mubr.bf16.gmra.mrb[0].mxu0 %v3055
      %v3125 = vpop.f32.mrb[0].mxu0
      %v3126 = vadd.f32 0.0, %v3125
      %v3127 = vpop.f32.mrb[0].mxu0
      %v3128 = vpop.f32.mrb[0].mxu0
      %v3129 = vadd.f32 0.0, %v3128
      %v3130 = vpop.f32.mrb[0].mxu0
      %3131 = vmatprep.mubr.bf16.mxu0 0
      %3132 = vmatmul.mubr.bf16.gmra.mrb[0].mxu0 %v3058
      %v3133 = vpop.f32.mrb[0].mxu0
      %v3134 = vadd.f32 0.0, %v3133
      %v3135 = vpop.f32.mrb[0].mxu0
      %v3136 = vpop.f32.mrb[0].mxu0
      %v3137 = vadd.f32 0.0, %v3136
      %v3138 = vpop.f32.mrb[0].mxu0
      %3139 = vmatprep.mubr.bf16.mxu0 0
      %3140 = vmatmul.mubr.bf16.gmra.mrb[0].mxu0 %v3061
      %v3141 = vpop.f32.mrb[0].mxu0
      %v3142 = vadd.f32 0.0, %v3141
      %v3143 = vpop.f32.mrb[0].mxu0
      %v3144 = vpop.f32.mrb[0].mxu0
      %v3145 = vadd.f32 0.0, %v3144
      %v3146 = vpop.f32.mrb[0].mxu0
      %3147 = vmatprep.mubr.bf16.mxu0 0
      %3148 = vmatmul.mubr.bf16.gmra.mrb[0].mxu0 %v3064
      %v3149 = vpop.f32.mrb[0].mxu0
      %v3150 = vadd.f32 0.0, %v3149
      %v3151 = vpop.f32.mrb[0].mxu0
      %v3152 = vpop.f32.mrb[0].mxu0
      %v3153 = vadd.f32 0.0, %v3152
      %v3154 = vpop.f32.mrb[0].mxu0
      %3155 = vmatprep.mubr.bf16.mxu0 0
      %3156 = vmatmul.mubr.bf16.gmra.mrb[0].mxu0 %v3067
      %v3157 = vpop.f32.mrb[0].mxu0
      %v3158 = vadd.f32 0.0, %v3157
      %v3159 = vpop.f32.mrb[0].mxu0
      %v3160 = vpop.f32.mrb[0].mxu0
      %v3161 = vadd.f32 0.0, %v3160
      %v3162 = vpop.f32.mrb[0].mxu0
      %3163 = vmatprep.mubr.bf16.mxu0 0
      %3164 = vmatmul.mubr.bf16.gmra.mrb[0].mxu0 %v3070
      %v3165 = vpop.f32.mrb[0].mxu0
      %v3166 = vadd.f32 0.0, %v3165
      %v3167 = vpop.f32.mrb[0].mxu0
      %v3168 = vpop.f32.mrb[0].mxu0
      %v3169 = vadd.f32 0.0, %v3168
      %v3170 = vpop.f32.mrb[0].mxu0
      %3171 = vmatprep.mubr.bf16.mxu0 0
      %3172 = vmatmul.mubr.bf16.gmra.mrb[0].mxu0 %v3073
      %v3173 = vpop.f32.mrb[0].mxu0
      %v3174 = vadd.f32 0.0, %v3173
      %v3175 = vpop.f32.mrb[0].mxu0
      %v3176 = vpop.f32.mrb[0].mxu0
      %v3177 = vadd.f32 0.0, %v3176
      %v3178 = vpop.f32.mrb[0].mxu0
      %3179 = vdwg.mxu0
      %v3180 = vadd.f32 %v3003, %v3110
      %v3181 = vadd.f32 %v3004, %v3113
      %v3182 = vadd.f32 %v3005, %v3118
      %v3183 = vadd.f32 %v3006, %v3121
      %v3184 = vadd.f32 %v3007, %v3126
      %v3185 = vadd.f32 %v3008, %v3129
      %v3186 = vadd.f32 %v3009, %v3134
      %v3187 = vadd.f32 %v3010, %v3137
      %v3188 = vadd.f32 %v3011, %v3142
      %v3189 = vadd.f32 %v3012, %v3145
      %v3190 = vadd.f32 %v3013, %v3150
      %v3191 = vadd.f32 %v3014, %v3153
      %v3192 = vadd.f32 %v3015, %v3158
      %v3193 = vadd.f32 %v3016, %v3161
      %v3194 = vadd.f32 %v3017, %v3166
      %v3195 = vadd.f32 %v3018, %v3169
      %v3196 = vadd.f32 %v3019, %v3174
      %v3197 = vadd.f32 %v3020, %v3177
      %v3198 = vld [vmem:[%s218 + $0xb5] sm:$0xff]
      %v3199 = vld [vmem:[%s218 + $0xbd] sm:$0xff]
      %v3200 = vld [vmem:[%s218 + $0xc5] sm:$0xff]
      %v3201 = vld [vmem:[%s218 + $0xcd] sm:$0xff]
      %v3202 = vld [vmem:[%s218 + $0xd5] sm:$0xff]
      %v3203 = vld [vmem:[%s218 + $0xdd] sm:$0xff]
      %v3204 = vld [vmem:[%s218 + $0xe5] sm:$0xff]
      %v3205 = vld [vmem:[%s218 + $0xed] sm:$0xff]
      %v3206 = vld [vmem:[%s218 + $0xf5] sm:$0xff]
      %v3207 = vld [vmem:[%s218 + $0xfd] sm:$0xff]
      %v3208 = vld [vmem:[%s218 + $0x105] sm:$0xff]
      %v3209 = vld [vmem:[%s218 + $0x10d] sm:$0xff]
      %v3210 = vld [vmem:[%s218 + $0x115] sm:$0xff]
      %v3211 = vld [vmem:[%s218 + $0x11d] sm:$0xff]
      %v3212 = vld [vmem:[%s218 + $0x125] sm:$0xff]
      %v3213 = vld [vmem:[%s218 + $0x12d] sm:$0xff]
      %v3214 = vld [vmem:[%s218 + $0x135] sm:$0xff]
      %v3215 = vld [vmem:[%s218 + $0x13d] sm:$0xff]
      %v3216 = vpack.c.bf16 %v3199, %v3198
      %v3217 = vpack.c.bf16 %v3201, %v3200
      %v3218 = vpack.c.bf16 %v3203, %v3202
      %v3219 = vpack.c.bf16 %v3205, %v3204
      %v3220 = vpack.c.bf16 %v3207, %v3206
      %v3221 = vpack.c.bf16 %v3209, %v3208
      %v3222 = vpack.c.bf16 %v3211, %v3210
      %v3223 = vpack.c.bf16 %v3213, %v3212
      %v3224 = vpack.c.bf16 %v3215, %v3214
      %v3226 = vsel %vm299, %v3216, 0
      %v3229 = vsel %vm299, %v3217, 0
      %v3232 = vsel %vm299, %v3218, 0
      %v3235 = vsel %vm299, %v3219, 0
      %v3238 = vsel %vm299, %v3220, 0
      %v3241 = vsel %vm299, %v3221, 0
      %v3244 = vsel %vm299, %v3222, 0
      %v3247 = vsel %vm299, %v3223, 0
      %v3250 = vsel %vm299, %v3224, 0
      %3252 = vmatprep.subr.bf16.mxu0 0
      %3253 = vmatpush1.bf16.msra.mxu0 %v1538
      %3254 = vmatprep.subr.bf16.mxu0 0
      %3255 = vmatpush1.bf16.msra.mxu0 0
      %3256 = vmatprep.subr.bf16.mxu0 0
      %3257 = vmatpush1.bf16.msra.mxu0 0
      %3258 = vmatprep.subr.bf16.mxu0 0
      %3259 = vmatpush1.bf16.msra.mxu0 0
      %3260 = vmatprep.subr.bf16.mxu0 0
      %3261 = vmatpush1.bf16.msra.mxu0 0
      %3262 = vmatprep.subr.bf16.mxu0 0
      %3263 = vmatpush1.bf16.msra.mxu0 0
      %3264 = vmatprep.subr.bf16.mxu0 0
      %3265 = vmatpush1.bf16.msra.mxu0 0
      %3266 = vmatprep.subr.bf16.mxu0 0
      %3267 = vmatpush1.bf16.msra.mxu0 0
      %3268 = vmatprep.subr.bf16.mxu0 0
      %3269 = vmatpush1.bf16.msra.mxu0 0
      %3270 = vmatprep.subr.bf16.mxu0 0
      %3271 = vmatpush1.bf16.msra.mxu0 0
      %3272 = vmatprep.subr.bf16.mxu0 0
      %3273 = vmatpush1.bf16.msra.mxu0 0
      %3274 = vmatprep.subr.bf16.mxu0 0
      %3275 = vmatpush1.bf16.msra.mxu0 0
      %3276 = vmatprep.subr.bf16.mxu0 0
      %3277 = vmatpush1.bf16.msra.mxu0 0
      %3278 = vmatprep.subr.bf16.mxu0 0
      %3279 = vmatpush1.bf16.msra.mxu0 0
      %3280 = vmatprep.subr.bf16.mxu0 0
      %3281 = vmatpush1.bf16.msra.mxu0 0
      %3282 = vmatprep.subr.bf16.mxu0 0
      %3283 = vmatpush1.bf16.msra.mxu0 0
      %3284 = vmatprep.mubr.bf16.mxu0 0
      %3285 = vmatmul.mubr.bf16.gmra.mrb[0].mxu0 %v3226
      %v3286 = vpop.f32.mrb[0].mxu0
      %v3287 = vadd.f32 0.0, %v3286
      %v3288 = vpop.f32.mrb[0].mxu0
      %v3289 = vpop.f32.mrb[0].mxu0
      %v3290 = vadd.f32 0.0, %v3289
      %v3291 = vpop.f32.mrb[0].mxu0
      %3292 = vmatprep.mubr.bf16.mxu0 0
      %3293 = vmatmul.mubr.bf16.gmra.mrb[0].mxu0 %v3229
      %v3294 = vpop.f32.mrb[0].mxu0
      %v3295 = vadd.f32 0.0, %v3294
      %v3296 = vpop.f32.mrb[0].mxu0
      %v3297 = vpop.f32.mrb[0].mxu0
      %v3298 = vadd.f32 0.0, %v3297
      %v3299 = vpop.f32.mrb[0].mxu0
      %3300 = vmatprep.mubr.bf16.mxu0 0
      %3301 = vmatmul.mubr.bf16.gmra.mrb[0].mxu0 %v3232
      %v3302 = vpop.f32.mrb[0].mxu0
      %v3303 = vadd.f32 0.0, %v3302
      %v3304 = vpop.f32.mrb[0].mxu0
      %v3305 = vpop.f32.mrb[0].mxu0
      %v3306 = vadd.f32 0.0, %v3305
      %v3307 = vpop.f32.mrb[0].mxu0
      %3308 = vmatprep.mubr.bf16.mxu0 0
      %3309 = vmatmul.mubr.bf16.gmra.mrb[0].mxu0 %v3235
      %v3310 = vpop.f32.mrb[0].mxu0
      %v3311 = vadd.f32 0.0, %v3310
      %v3312 = vpop.f32.mrb[0].mxu0
      %v3313 = vpop.f32.mrb[0].mxu0
      %v3314 = vadd.f32 0.0, %v3313
      %v3315 = vpop.f32.mrb[0].mxu0
      %3316 = vmatprep.mubr.bf16.mxu0 0
      %3317 = vmatmul.mubr.bf16.gmra.mrb[0].mxu0 %v3238
      %v3318 = vpop.f32.mrb[0].mxu0
      %v3319 = vadd.f32 0.0, %v3318
      %v3320 = vpop.f32.mrb[0].mxu0
      %v3321 = vpop.f32.mrb[0].mxu0
      %v3322 = vadd.f32 0.0, %v3321
      %v3323 = vpop.f32.mrb[0].mxu0
      %3324 = vmatprep.mubr.bf16.mxu0 0
      %3325 = vmatmul.mubr.bf16.gmra.mrb[0].mxu0 %v3241
      %v3326 = vpop.f32.mrb[0].mxu0
      %v3327 = vadd.f32 0.0, %v3326
      %v3328 = vpop.f32.mrb[0].mxu0
      %v3329 = vpop.f32.mrb[0].mxu0
      %v3330 = vadd.f32 0.0, %v3329
      %v3331 = vpop.f32.mrb[0].mxu0
      %3332 = vmatprep.mubr.bf16.mxu0 0
      %3333 = vmatmul.mubr.bf16.gmra.mrb[0].mxu0 %v3244
      %v3334 = vpop.f32.mrb[0].mxu0
      %v3335 = vadd.f32 0.0, %v3334
      %v3336 = vpop.f32.mrb[0].mxu0
      %v3337 = vpop.f32.mrb[0].mxu0
      %v3338 = vadd.f32 0.0, %v3337
      %v3339 = vpop.f32.mrb[0].mxu0
      %3340 = vmatprep.mubr.bf16.mxu0 0
      %3341 = vmatmul.mubr.bf16.gmra.mrb[0].mxu0 %v3247
      %v3342 = vpop.f32.mrb[0].mxu0
      %v3343 = vadd.f32 0.0, %v3342
      %v3344 = vpop.f32.mrb[0].mxu0
      %v3345 = vpop.f32.mrb[0].mxu0
      %v3346 = vadd.f32 0.0, %v3345
      %v3347 = vpop.f32.mrb[0].mxu0
      %3348 = vmatprep.mubr.bf16.mxu0 0
      %3349 = vmatmul.mubr.bf16.gmra.mrb[0].mxu0 %v3250
      %v3350 = vpop.f32.mrb[0].mxu0
      %v3351 = vadd.f32 0.0, %v3350
      %v3352 = vpop.f32.mrb[0].mxu0
      %v3353 = vpop.f32.mrb[0].mxu0
      %v3354 = vadd.f32 0.0, %v3353
      %v3355 = vpop.f32.mrb[0].mxu0
      %3356 = vdwg.mxu0
      %v3357 = vadd.f32 %v3180, %v3287
      %v3358 = vadd.f32 %v3181, %v3290
      %v3359 = vadd.f32 %v3182, %v3295
      %v3360 = vadd.f32 %v3183, %v3298
      %v3361 = vadd.f32 %v3184, %v3303
      %v3362 = vadd.f32 %v3185, %v3306
      %v3363 = vadd.f32 %v3186, %v3311
      %v3364 = vadd.f32 %v3187, %v3314
      %v3365 = vadd.f32 %v3188, %v3319
      %v3366 = vadd.f32 %v3189, %v3322
      %v3367 = vadd.f32 %v3190, %v3327
      %v3368 = vadd.f32 %v3191, %v3330
      %v3369 = vadd.f32 %v3192, %v3335
      %v3370 = vadd.f32 %v3193, %v3338
      %v3371 = vadd.f32 %v3194, %v3343
      %v3372 = vadd.f32 %v3195, %v3346
      %v3373 = vadd.f32 %v3196, %v3351
      %v3374 = vadd.f32 %v3197, %v3354
      %v3375 = vld [vmem:[%s218 + $0xb6] sm:$0xff]
      %v3376 = vld [vmem:[%s218 + $0xbe] sm:$0xff]
      %v3377 = vld [vmem:[%s218 + $0xc6] sm:$0xff]
      %v3378 = vld [vmem:[%s218 + $0xce] sm:$0xff]
      %v3379 = vld [vmem:[%s218 + $0xd6] sm:$0xff]
      %v3380 = vld [vmem:[%s218 + $0xde] sm:$0xff]
      %v3381 = vld [vmem:[%s218 + $0xe6] sm:$0xff]
      %v3382 = vld [vmem:[%s218 + $0xee] sm:$0xff]
      %v3383 = vld [vmem:[%s218 + $0xf6] sm:$0xff]
      %v3384 = vld [vmem:[%s218 + $0xfe] sm:$0xff]
      %v3385 = vld [vmem:[%s218 + $0x106] sm:$0xff]
      %v3386 = vld [vmem:[%s218 + $0x10e] sm:$0xff]
      %v3387 = vld [vmem:[%s218 + $0x116] sm:$0xff]
      %v3388 = vld [vmem:[%s218 + $0x11e] sm:$0xff]
      %v3389 = vld [vmem:[%s218 + $0x126] sm:$0xff]
      %v3390 = vld [vmem:[%s218 + $0x12e] sm:$0xff]
      %v3391 = vld [vmem:[%s218 + $0x136] sm:$0xff]
      %v3392 = vld [vmem:[%s218 + $0x13e] sm:$0xff]
      %v3393 = vpack.c.bf16 %v3376, %v3375
      %v3394 = vpack.c.bf16 %v3378, %v3377
      %v3395 = vpack.c.bf16 %v3380, %v3379
      %v3396 = vpack.c.bf16 %v3382, %v3381
      %v3397 = vpack.c.bf16 %v3384, %v3383
      %v3398 = vpack.c.bf16 %v3386, %v3385
      %v3399 = vpack.c.bf16 %v3388, %v3387
      %v3400 = vpack.c.bf16 %v3390, %v3389
      %v3401 = vpack.c.bf16 %v3392, %v3391
      %v3403 = vsel %vm299, %v3393, 0
      %v3406 = vsel %vm299, %v3394, 0
      %v3409 = vsel %vm299, %v3395, 0
      %v3412 = vsel %vm299, %v3396, 0
      %v3415 = vsel %vm299, %v3397, 0
      %v3418 = vsel %vm299, %v3398, 0
      %v3421 = vsel %vm299, %v3399, 0
      %v3424 = vsel %vm299, %v3400, 0
      %v3427 = vsel %vm299, %v3401, 0
      %3429 = vmatprep.subr.bf16.mxu0 0
      %3430 = vmatpush1.bf16.msra.mxu0 %v1720
      %3431 = vmatprep.subr.bf16.mxu0 0
      %3432 = vmatpush1.bf16.msra.mxu0 0
      %3433 = vmatprep.subr.bf16.mxu0 0
      %3434 = vmatpush1.bf16.msra.mxu0 0
      %3435 = vmatprep.subr.bf16.mxu0 0
      %3436 = vmatpush1.bf16.msra.mxu0 0
      %3437 = vmatprep.subr.bf16.mxu0 0
      %3438 = vmatpush1.bf16.msra.mxu0 0
      %3439 = vmatprep.subr.bf16.mxu0 0
      %3440 = vmatpush1.bf16.msra.mxu0 0
      %3441 = vmatprep.subr.bf16.mxu0 0
      %3442 = vmatpush1.bf16.msra.mxu0 0
      %3443 = vmatprep.subr.bf16.mxu0 0
      %3444 = vmatpush1.bf16.msra.mxu0 0
      %3445 = vmatprep.subr.bf16.mxu0 0
      %3446 = vmatpush1.bf16.msra.mxu0 0
      %3447 = vmatprep.subr.bf16.mxu0 0
      %3448 = vmatpush1.bf16.msra.mxu0 0
      %3449 = vmatprep.subr.bf16.mxu0 0
      %3450 = vmatpush1.bf16.msra.mxu0 0
      %3451 = vmatprep.subr.bf16.mxu0 0
      %3452 = vmatpush1.bf16.msra.mxu0 0
      %3453 = vmatprep.subr.bf16.mxu0 0
      %3454 = vmatpush1.bf16.msra.mxu0 0
      %3455 = vmatprep.subr.bf16.mxu0 0
      %3456 = vmatpush1.bf16.msra.mxu0 0
      %3457 = vmatprep.subr.bf16.mxu0 0
      %3458 = vmatpush1.bf16.msra.mxu0 0
      %3459 = vmatprep.subr.bf16.mxu0 0
      %3460 = vmatpush1.bf16.msra.mxu0 0
      %3461 = vmatprep.mubr.bf16.mxu0 0
      %3462 = vmatmul.mubr.bf16.gmra.mrb[0].mxu0 %v3403
      %v3463 = vpop.f32.mrb[0].mxu0
      %v3464 = vadd.f32 0.0, %v3463
      %v3465 = vpop.f32.mrb[0].mxu0
      %v3466 = vpop.f32.mrb[0].mxu0
      %v3467 = vadd.f32 0.0, %v3466
      %v3468 = vpop.f32.mrb[0].mxu0
      %3469 = vmatprep.mubr.bf16.mxu0 0
      %3470 = vmatmul.mubr.bf16.gmra.mrb[0].mxu0 %v3406
      %v3471 = vpop.f32.mrb[0].mxu0
      %v3472 = vadd.f32 0.0, %v3471
      %v3473 = vpop.f32.mrb[0].mxu0
      %v3474 = vpop.f32.mrb[0].mxu0
      %v3475 = vadd.f32 0.0, %v3474
      %v3476 = vpop.f32.mrb[0].mxu0
      %3477 = vmatprep.mubr.bf16.mxu0 0
      %3478 = vmatmul.mubr.bf16.gmra.mrb[0].mxu0 %v3409
      %v3479 = vpop.f32.mrb[0].mxu0
      %v3480 = vadd.f32 0.0, %v3479
      %v3481 = vpop.f32.mrb[0].mxu0
      %v3482 = vpop.f32.mrb[0].mxu0
      %v3483 = vadd.f32 0.0, %v3482
      %v3484 = vpop.f32.mrb[0].mxu0
      %3485 = vmatprep.mubr.bf16.mxu0 0
      %3486 = vmatmul.mubr.bf16.gmra.mrb[0].mxu0 %v3412
      %v3487 = vpop.f32.mrb[0].mxu0
      %v3488 = vadd.f32 0.0, %v3487
      %v3489 = vpop.f32.mrb[0].mxu0
      %v3490 = vpop.f32.mrb[0].mxu0
      %v3491 = vadd.f32 0.0, %v3490
      %v3492 = vpop.f32.mrb[0].mxu0
      %3493 = vmatprep.mubr.bf16.mxu0 0
      %3494 = vmatmul.mubr.bf16.gmra.mrb[0].mxu0 %v3415
      %v3495 = vpop.f32.mrb[0].mxu0
      %v3496 = vadd.f32 0.0, %v3495
      %v3497 = vpop.f32.mrb[0].mxu0
      %v3498 = vpop.f32.mrb[0].mxu0
      %v3499 = vadd.f32 0.0, %v3498
      %v3500 = vpop.f32.mrb[0].mxu0
      %3501 = vmatprep.mubr.bf16.mxu0 0
      %3502 = vmatmul.mubr.bf16.gmra.mrb[0].mxu0 %v3418
      %v3503 = vpop.f32.mrb[0].mxu0
      %v3504 = vadd.f32 0.0, %v3503
      %v3505 = vpop.f32.mrb[0].mxu0
      %v3506 = vpop.f32.mrb[0].mxu0
      %v3507 = vadd.f32 0.0, %v3506
      %v3508 = vpop.f32.mrb[0].mxu0
      %3509 = vmatprep.mubr.bf16.mxu0 0
      %3510 = vmatmul.mubr.bf16.gmra.mrb[0].mxu0 %v3421
      %v3511 = vpop.f32.mrb[0].mxu0
      %v3512 = vadd.f32 0.0, %v3511
      %v3513 = vpop.f32.mrb[0].mxu0
      %v3514 = vpop.f32.mrb[0].mxu0
      %v3515 = vadd.f32 0.0, %v3514
      %v3516 = vpop.f32.mrb[0].mxu0
      %3517 = vmatprep.mubr.bf16.mxu0 0
      %3518 = vmatmul.mubr.bf16.gmra.mrb[0].mxu0 %v3424
      %v3519 = vpop.f32.mrb[0].mxu0
      %v3520 = vadd.f32 0.0, %v3519
      %v3521 = vpop.f32.mrb[0].mxu0
      %v3522 = vpop.f32.mrb[0].mxu0
      %v3523 = vadd.f32 0.0, %v3522
      %v3524 = vpop.f32.mrb[0].mxu0
      %3525 = vmatprep.mubr.bf16.mxu0 0
      %3526 = vmatmul.mubr.bf16.gmra.mrb[0].mxu0 %v3427
      %v3527 = vpop.f32.mrb[0].mxu0
      %v3528 = vadd.f32 0.0, %v3527
      %v3529 = vpop.f32.mrb[0].mxu0
      %v3530 = vpop.f32.mrb[0].mxu0
      %v3531 = vadd.f32 0.0, %v3530
      %v3532 = vpop.f32.mrb[0].mxu0
      %3533 = vdwg.mxu0
      %v3534 = vadd.f32 %v3357, %v3464
      %v3535 = vadd.f32 %v3358, %v3467
      %v3536 = vadd.f32 %v3359, %v3472
      %v3537 = vadd.f32 %v3360, %v3475
      %v3538 = vadd.f32 %v3361, %v3480
      %v3539 = vadd.f32 %v3362, %v3483
      %v3540 = vadd.f32 %v3363, %v3488
      %v3541 = vadd.f32 %v3364, %v3491
      %v3542 = vadd.f32 %v3365, %v3496
      %v3543 = vadd.f32 %v3366, %v3499
      %v3544 = vadd.f32 %v3367, %v3504
      %v3545 = vadd.f32 %v3368, %v3507
      %v3546 = vadd.f32 %v3369, %v3512
      %v3547 = vadd.f32 %v3370, %v3515
      %v3548 = vadd.f32 %v3371, %v3520
      %v3549 = vadd.f32 %v3372, %v3523
      %v3550 = vadd.f32 %v3373, %v3528
      %v3551 = vadd.f32 %v3374, %v3531
      %v3552 = vmax.f32 %v3534, 0.0
      %v3553 = vmax.f32 %v3535, 0.0
      %v3554 = vmax.f32 %v3536, 0.0
      %v3555 = vmax.f32 %v3537, 0.0
      %v3556 = vmax.f32 %v3538, 0.0
      %v3557 = vmax.f32 %v3539, 0.0
      %v3558 = vmax.f32 %v3540, 0.0
      %v3559 = vmax.f32 %v3541, 0.0
      %v3560 = vmax.f32 %v3542, 0.0
      %v3561 = vmax.f32 %v3543, 0.0
      %v3562 = vmax.f32 %v3544, 0.0
      %v3563 = vmax.f32 %v3545, 0.0
      %v3564 = vmax.f32 %v3546, 0.0
      %v3565 = vmax.f32 %v3547, 0.0
      %v3566 = vmax.f32 %v3548, 0.0
      %v3567 = vmax.f32 %v3549, 0.0
      %v3568 = vmax.f32 %v3550, 0.0
      %v3569 = vmax.f32 %v3551, 0.0
      %v3570 = vmul.f32 %v3552, %v1866
      %v3571 = vmul.f32 %v3553, %v1871
      %v3572 = vmul.f32 %v3554, %v1876
      %v3573 = vmul.f32 %v3555, %v1881
      %v3574 = vmul.f32 %v3556, %v1886
      %v3575 = vmul.f32 %v3557, %v1891
      %v3576 = vmul.f32 %v3558, %v1896
      %v3577 = vmul.f32 %v3559, %v1901
      %v3578 = vmul.f32 %v3560, %v1906
      %v3579 = vmul.f32 %v3561, %v1911
      %v3580 = vmul.f32 %v3562, %v1916
      %v3581 = vmul.f32 %v3563, %v1921
      %v3582 = vmul.f32 %v3564, %v1926
      %v3583 = vmul.f32 %v3565, %v1931
      %v3584 = vmul.f32 %v3566, %v1936
      %v3585 = vmul.f32 %v3567, %v1941
      %v3586 = vmul.f32 %v3568, %v1946
      %v3587 = vmul.f32 %v3569, %v1951
      %v3588 = vadd.f32 %v3570, %v3571
      %v3589 = vadd.f32 %v3588, %v3572
      %v3590 = vadd.f32 %v3589, %v3573
      %v3591 = vadd.f32 %v3590, %v3574
      %v3592 = vadd.f32 %v3591, %v3575
      %v3593 = vadd.f32 %v3592, %v3576
      %v3594 = vadd.f32 %v3593, %v3577
      %v3595 = vadd.f32 %v3594, %v3578
      %v3596 = vadd.f32 %v3595, %v3579
      %v3597 = vadd.f32 %v3596, %v3580
      %v3598 = vadd.f32 %v3597, %v3581
      %v3599 = vadd.f32 %v3598, %v3582
      %v3600 = vadd.f32 %v3599, %v3583
      %v3601 = vadd.f32 %v3600, %v3584
      %v3602 = vadd.f32 %v3601, %v3585
      %v3603 = vadd.f32 %v3602, %v3586
      %v3604 = vadd.f32 %v3603, %v3587
      %v3605 = vrot.slane %v3604, 4
      %v3606 = vadd.f32 %v3604, %v3605
      %v3607 = vrot.slane %v3606, 2
      %v3608 = vadd.f32 %v3606, %v3607
      %v3609 = vrot.slane %v3608, 1
      %v3610 = vadd.f32 %v3608, %v3609
      %v3611 = vadd.f32 %v1994, %v3610
      %v3612 = vmul.f32 %v3611, 0.00390625
      %v3613 = vld [vmem:[%s3] sm:$0xff]
      %v3614 = vld [vmem:[%s3 + $0x8] sm:$0xff]
      %v3615 = vld [vmem:[%s3 + $0x10] sm:$0xff]
      %v3616 = vld [vmem:[%s3 + $0x18] sm:$0xff]
      %v3617 = vld [vmem:[%s3 + $0x20] sm:$0xff]
      %v3618 = vld [vmem:[%s3 + $0x28] sm:$0xff]
      %v3619 = vld [vmem:[%s3 + $0x30] sm:$0xff]
      %v3620 = vld [vmem:[%s3 + $0x38] sm:$0xff]
      %v3621 = vld [vmem:[%s3 + $0x40] sm:$0xff]
      %v3622 = vld [vmem:[%s3 + $0x48] sm:$0xff]
      %v3623 = vld [vmem:[%s3 + $0x50] sm:$0xff]
      %v3624 = vld [vmem:[%s3 + $0x58] sm:$0xff]
      %v3625 = vld [vmem:[%s3 + $0x60] sm:$0xff]
      %v3626 = vld [vmem:[%s3 + $0x68] sm:$0xff]
      %v3627 = vld [vmem:[%s3 + $0x70] sm:$0xff]
      %v3628 = vld [vmem:[%s3 + $0x78] sm:$0xff]
      %v3629 = vld [vmem:[%s4] sm:$0x1]
      %3630 = vmatprep.subr.mxu0 0.0
      %3631 = vmatpush1.msra.mxu0 %v3613
      %3632 = vmatprep.subr.mxu0 0.0
      %3633 = vmatpush1.msra.mxu0 %v3614
      %3634 = vmatprep.subr.mxu0 0.0
      %3635 = vmatpush1.msra.mxu0 %v3615
      %3636 = vmatprep.subr.mxu0 0.0
      %3637 = vmatpush1.msra.mxu0 %v3616
      %3638 = vmatprep.subr.mxu0 0.0
      %3639 = vmatpush1.msra.mxu0 %v3617
      %3640 = vmatprep.subr.mxu0 0.0
      %3641 = vmatpush1.msra.mxu0 %v3618
      %3642 = vmatprep.subr.mxu0 0.0
      %3643 = vmatpush1.msra.mxu0 %v3619
      %3644 = vmatprep.subr.mxu0 0.0
      %3645 = vmatpush1.msra.mxu0 %v3620
      %3646 = vmatprep.subr.mxu0 0.0
      %3647 = vmatpush1.msra.mxu0 %v3621
      %3648 = vmatprep.subr.mxu0 0.0
      %3649 = vmatpush1.msra.mxu0 %v3622
      %3650 = vmatprep.subr.mxu0 0.0
      %3651 = vmatpush1.msra.mxu0 %v3623
      %3652 = vmatprep.subr.mxu0 0.0
      %3653 = vmatpush1.msra.mxu0 %v3624
      %3654 = vmatprep.subr.mxu0 0.0
      %3655 = vmatpush1.msra.mxu0 %v3625
      %3656 = vmatprep.subr.mxu0 0.0
      %3657 = vmatpush1.msra.mxu0 %v3626
      %3658 = vmatprep.subr.mxu0 0.0
      %3659 = vmatpush1.msra.mxu0 %v3627
      %3660 = vmatprep.subr.mxu0 0.0
      %3661 = vmatpush1.msra.mxu0 %v3628
      %3662 = vmatprep.subr.mxu0 0.0
      %3663 = vmatpush1.msra.mxu0 0.0
      %3664 = vmatprep.subr.mxu0 0.0
      %3665 = vmatpush1.msra.mxu0 0.0
      %3666 = vmatprep.subr.mxu0 0.0
      %3667 = vmatpush1.msra.mxu0 0.0
      %3668 = vmatprep.subr.mxu0 0.0
      %3669 = vmatpush1.msra.mxu0 0.0
      %3670 = vmatprep.subr.mxu0 0.0
      %3671 = vmatpush1.msra.mxu0 0.0
      %3672 = vmatprep.subr.mxu0 0.0
      %3673 = vmatpush1.msra.mxu0 0.0
      %3674 = vmatprep.subr.mxu0 0.0
      %3675 = vmatpush1.msra.mxu0 0.0
      %3676 = vmatprep.subr.mxu0 0.0
      %3677 = vmatpush1.msra.mxu0 0.0
      %3678 = vmatprep.subr.mxu0 0.0
      %3679 = vmatpush1.msra.mxu0 0.0
      %3680 = vmatprep.subr.mxu0 0.0
      %3681 = vmatpush1.msra.mxu0 0.0
      %3682 = vmatprep.subr.mxu0 0.0
      %3683 = vmatpush1.msra.mxu0 0.0
      %3684 = vmatprep.subr.mxu0 0.0
      %3685 = vmatpush1.msra.mxu0 0.0
      %3686 = vmatprep.subr.mxu0 0.0
      %3687 = vmatpush1.msra.mxu0 0.0
      %3688 = vmatprep.subr.mxu0 0.0
      %3689 = vmatpush1.msra.mxu0 0.0
      %3690 = vmatprep.subr.mxu0 0.0
      %3691 = vmatpush1.msra.mxu0 0.0
      %3692 = vmatprep.subr.mxu0 0.0
      %3693 = vmatpush1.msra.mxu0 0.0
      %3694 = vmatprep.mubr.f32.mxu0 0.0
      %3695 = vmatmul.mubr.f32.gmra.mrb[0].mxu0 %v3612
      %v3696 = vpop.f32.mrb[0].mxu0
      %v3697 = vadd.f32 %v3629, %v3696
      %v3698 = vpop.f32.mrb[0].mxu0
      %3699 = vdwg.mxu0
      %v3700 = vlaneseq
      %v3701 = vshrl.u32 %v3700, 7
      %v3702 = vsub.s32 0, %v3701
      %v3703 = vrot.slane %v3697, %v3702
      %3704 = vst [vmem:[%s222] sm:$0xff] %v3703
      %p3705 = scmp.lt.s32.totalorder %s16, 1
      %s3706 = scalar_select %p3705, %s16, 1
      %s3707 = smul.addr %s3706, 8
      %s3708 = scalar_lea.vmem %s5, %s3707
      // Predicated region
      $region41: #{connection_classifier_forward.1} parent=39 // pred_check
        %p3709 = pneg %p144
      $region42: #{connection_classifier_forward.1} parent=39 // pred_check_branch
        %3711 = sbr.rel (%p3709) target = $region44
      $region43: #{connection_classifier_forward.1} parent=39 // pred_region
        _
      $region44: #{connection_classifier_forward.1} parent=39 // pred_fallthru
        _
    $region40: #{connection_classifier_forward.1} parent=5 // pred_fallthru
      _
    %p3712 = scmp.le.s32.totalorder 2, %s11
    // Predicated region
    $region45: #{connection_classifier_forward.1} parent=5 // pred_check
      %p3713 = pneg %p3712
    $region46: #{connection_classifier_forward.1} parent=5 // pred_check_branch
      %3715 = sbr.rel (%p3713) target = $region48
    $region47: #{connection_classifier_forward.1} parent=5 // pred_region
      %s3716 = ssub.s32 %s11, 2
      // Predicated region
      $region49: #{connection_classifier_forward.1} parent=47 // pred_check
        %p3717 = pneg %p150
      $region50: #{connection_classifier_forward.1} parent=47 // pred_check_branch
        %3719 = sbr.rel (%p3717) target = $region52
      $region51: #{connection_classifier_forward.1} parent=47 // pred_region
        %p3720 = scmp.lt.s32.totalorder %s17, 1
        %s3721 = scalar_select %p3720, %s17, 1
        %s3722 = smul.addr %s3721, 8
        %s3723 = scalar_lea.vmem %s5, %s3722
      $region52: #{connection_classifier_forward.1} parent=47 // pred_fallthru
        _
    $region48: #{connection_classifier_forward.1} parent=5 // pred_fallthru
      _
  $region6: #{connection_classifier_forward.1} parent=0 // loop_footer
    %s15 = sadd.s32 1, %s11
  $region7: #{connection_classifier_forward.1} parent=0 // loop_footer_branch
    %10 = sbr.rel target = $region3
  $region8: #{connection_classifier_forward.1} parent=0 // loop_exit
    _

</llo_original>
